<compile_context>
chip_gen: v5e
topology: v5e:2x2
jax: 0.10.0
libtpu: 0.0.40
codegen_flags: <defaults>
</compile_context>

<pallas_src>
import functools

import jax
import jax.numpy as jnp
from jax.experimental import pallas as pl
from jax.experimental.pallas import tpu as pltpu

# ----------------------- scaled-down "ViT-base" config -----------------------
IMG = 16            # stands in for 224
PATCH = 8           # stands in for 16
CHANNELS = 3
HIDDEN = 128        # stands in for 768 (multiple of 128 -> lane-dense blocks)
HEADS = 4           # stands in for 12
LAYERS = 2          # stands in for 12
MLP = 4 * HIDDEN
SIGMA = 1.0
LN_EPS = 1e-12      # HF ViT layer_norm_eps
N_PATCHES = (IMG // PATCH) ** 2
TOKENS = N_PATCHES + 1

_VMEM = pl.BlockSpec(memory_space=pltpu.MemorySpace.VMEM)


# --------------------------------- kernels -----------------------------------
def _layernorm(x, g, b):
    mu = jnp.mean(x, axis=-1, keepdims=True)
    var = jnp.mean(jnp.square(x - mu), axis=-1, keepdims=True)
    return (x - mu) * jax.lax.rsqrt(var + LN_EPS) * g + b


def _vit_stack_kernel(patches_ref, row0_ref, pos_ref, pw_ref, pb_ref,
                      ln1_g_ref, ln1_b_ref, wqkv_ref, bqkv_ref, wo_ref, bo_ref,
                      ln2_g_ref, ln2_b_ref, w1_ref, b1_ref, w2_ref, b2_ref,
                      o_ref, attn_ref, *, batch, tokens, heads, scale):
    """Whole extractor for one batch half: grid=(half, layer).

    o_ref (block index constant over the layer axis) is the VMEM-resident activation
    (B*T, H); it is initialized from the fused patch-embed at layer 0 and holds the
    final layer's output (written to HBM once per half) at the end.
    """
    layer = pl.program_id(1)
    n = tokens - 1
    hdim = o_ref.shape[-1]
    dh = hdim // heads

    # ---- layer 0 only: fused patch embed + bias + pos, cls-token prepend (opt 10) ----
    @pl.when(layer == 0)
    def _():
        emb = (jnp.dot(patches_ref[...].astype(jnp.bfloat16), pw_ref[...],
                       preferred_element_type=jnp.float32)
               + pb_ref[...] + pos_ref[...])                      # (B*N, H) f32
        for b in range(batch):                                    # static unroll
            o_ref[pl.ds(b * tokens, 1), :] = row0_ref[...]        # cls + pos[0]
            o_ref[pl.ds(b * tokens + 1, n), :] = emb[b * n:(b + 1) * n, :]

    x = o_ref[...]                                                # (B*T, H) f32

    # ---- attention block: LN1 -> fused QKV (batch folded into M) -> per-(b,head)
    #      attention -> single fused out-projection matmul over concatenated heads ----
    y = _layernorm(x, ln1_g_ref[...], ln1_b_ref[...])
    qkv = (jnp.dot(y.astype(jnp.bfloat16), wqkv_ref[...],
                   preferred_element_type=jnp.float32) + bqkv_ref[...])   # (B*T, 3H)

    # TODO(synk): at real ViT-base scale replace this static (batch x head) unroll with a
    # head-batched 'bqd,bkd->bqk' einsum on a merged (B*heads, T, dh) layout.
    for b in range(batch):                                        # static, tiny
        r0 = b * tokens
        for hh in range(heads):                                   # static, tiny
            lo = hh * dh
            qh = (qkv[r0:r0 + tokens, lo:lo + dh] * scale).astype(jnp.bfloat16)
            kh = qkv[r0:r0 + tokens, hdim + lo:hdim + lo + dh].astype(jnp.bfloat16)
            vh = qkv[r0:r0 + tokens, 2 * hdim + lo:2 * hdim + lo + dh].astype(jnp.bfloat16)
            s = jnp.einsum("qd,kd->qk", qh, kh,
                           preferred_element_type=jnp.float32)    # (T, T) f32
            mx = jnp.max(s, axis=-1, keepdims=True)
            p = jnp.exp(s - mx)
            # approx reciprocal: ~1e-3 rel. error vs exact softmax; fine for a loss.
            p = p * pl.reciprocal(jnp.sum(p, axis=-1, keepdims=True), approx=True)
            attn_ref[pl.ds(r0, tokens), pl.ds(lo, dh)] = jnp.dot(
                p.astype(jnp.bfloat16), vh, preferred_element_type=jnp.float32)

    attn = jnp.dot(attn_ref[...].astype(jnp.bfloat16), wo_ref[...],
                   preferred_element_type=jnp.float32)            # one (M,H)@(H,H)
    x1 = x + attn + bo_ref[...]                                   # single fused residual add

    # ---- MLP block: LN2 -> w1 + gelu -> w2 (batch folded into M) ----
    y2 = _layernorm(x1, ln2_g_ref[...], ln2_b_ref[...])
    h1 = (jnp.dot(y2.astype(jnp.bfloat16), w1_ref[...],
                  preferred_element_type=jnp.float32) + b1_ref[...])
    # TODO(synk): HF/TIMM ViT uses exact (erf) GELU; tanh-approx used here (synthetic weights).
    h1 = jax.nn.gelu(h1, approximate=True)
    h2 = (jnp.dot(h1.astype(jnp.bfloat16), w2_ref[...],
                  preferred_element_type=jnp.float32) + b2_ref[...])
    o_ref[...] = x1 + h2                                          # residual 2


def _mse_mmd_loss_kernel(r_ref, g_ref, o_ref, *, batch, tokens, sigma,
                         inv_count, inv_batch):
    """Single grid step over the full (B*T, H) feature blocks (opt 9)."""
    diff = r_ref[...] - g_ref[...]                                # (B*T, H) f32
    sse = jnp.sum(diff * diff)
    dsum = diff[0:tokens, :]
    for b in range(1, batch):                                     # static, mean over batch
        dsum = dsum + diff[b * tokens:(b + 1) * tokens, :]
    dmean = dsum * inv_batch                                      # (T, H)
    sq = jnp.sum(dmean * dmean)
    safe = jnp.where(sq > 0.0, sq, 1.0)                           # NaN-safe Frobenius norm
    fro = jnp.where(sq > 0.0, jnp.sqrt(safe), 0.0)                # torch.norm
    o_ref[...] = jnp.reshape(sse * inv_count + sigma * fro, (1, 1))


# ----------------------------- kernel wrappers --------------------------------
def _const_spec(shape):
    return pl.BlockSpec(shape, lambda g, l: (0, 0))


def _half_spec(inner):   # leading axis indexed by the real/gen half, squeezed away
    return pl.BlockSpec((None,) + inner, lambda g, l: (g, 0, 0))


def _layer_spec(inner):  # leading axis indexed by the layer, squeezed away
    return pl.BlockSpec((None,) + inner, lambda g, l: (l, 0, 0))


def pallas_vit_forward(prep, patches2):
    """patches2: (2, B*N, C*P*P) f32 -> features (2, B*T, HIDDEN) f32 (last layer, pre final LN)."""
    _, bn, cpp = patches2.shape
    hdim = prep["patch_w"].shape[1]
    lnum = prep["wqkv"].shape[0]
    mlp = prep["w1"].shape[2]
    batch = bn // N_PATCHES
    m = batch * TOKENS
    dh = hdim // HEADS
    kern = functools.partial(_vit_stack_kernel, batch=batch, tokens=TOKENS,
                             heads=HEADS, scale=1.0 / (dh ** 0.5))

    return pl.pallas_call(
        kern,
        out_shape=jax.ShapeDtypeStruct((2, m, hdim), jnp.float32),
        grid_spec=pltpu.PrefetchScalarGridSpec(
            num_scalar_prefetch=0,
            grid=(2, lnum),                      # (real/gen half, layer)
            in_specs=[
                _half_spec((bn, cpp)),           # patches of this half (fetched once per half)
                _const_spec((1, hdim)),          # cls + pos[0]
                _const_spec((bn, hdim)),         # pos for patch tokens (pre-tiled over B)
                _const_spec((cpp, hdim)),        # patch-embed weight (bf16, pre-cast)
                _const_spec((1, hdim)),          # patch-embed bias
                _layer_spec((1, hdim)), _layer_spec((1, hdim)),            # ln1 g / b
                _layer_spec((hdim, 3 * hdim)), _layer_spec((1, 3 * hdim)), # fused QKV w / b
                _layer_spec((hdim, hdim)), _layer_spec((1, hdim)),         # out-proj w / b
                _layer_spec((1, hdim)), _layer_spec((1, hdim)),            # ln2 g / b
                _layer_spec((hdim, mlp)), _layer_spec((1, mlp)),           # MLP in
                _layer_spec((mlp, hdim)), _layer_spec((1, hdim)),          # MLP out
            ],
            out_specs=_half_spec((m, hdim)),     # constant over layers -> VMEM-resident
            scratch_shapes=[pltpu.VMEM((m, hdim), jnp.float32)],  # concat-heads buffer
        ),
        compiler_params=pltpu.CompilerParams(
            dimension_semantics=("parallel", "arbitrary"),   # halves across TCs on v7x
            vmem_limit_bytes=32 * 1024 * 1024,   # explicit budget (raise at ViT-base scale)
        ),
    )(patches2, prep["row0"], prep["pos_patch"], prep["patch_w"], prep["patch_b"],
      prep["ln1_g"], prep["ln1_b"], prep["wqkv"], prep["bqkv"],
      prep["wo"], prep["bo"], prep["ln2_g"], prep["ln2_b"],
      prep["w1"], prep["b1"], prep["w2"], prep["b2"])


def pallas_mse_mmd_loss(real_f, gen_f, batch, sigma=SIGMA):
    m, hdim = real_f.shape
    tokens = m // batch
    kern = functools.partial(_mse_mmd_loss_kernel, batch=batch, tokens=tokens,
                             sigma=sigma, inv_count=1.0 / (m * hdim),
                             inv_batch=1.0 / batch)
    out = pl.pallas_call(
        kern,
        out_shape=jax.ShapeDtypeStruct((1, 1), jnp.float32),
        in_specs=[_VMEM, _VMEM],
        out_specs=_VMEM,
    )(real_f, gen_f)
    return out[0, 0]


# ------------------------------ synthetic ViT ---------------------------------
def init_vit_params(key):
    t = TOKENS
    keys = jax.random.split(key, 3 + LAYERS)

    def nrm(k, shape):
        return 0.02 * jax.random.normal(k, shape, jnp.float32)

    params = {
        "patch_w": nrm(keys[0], (CHANNELS * PATCH * PATCH, HIDDEN)),  # conv weight flattened
        "patch_b": jnp.zeros((HIDDEN,), jnp.float32),
        "cls": nrm(keys[1], (1, 1, HIDDEN)),
        "pos": nrm(keys[2], (1, t, HIDDEN)),
        "layers": [],
    }
    for i in range(LAYERS):
        lk = jax.random.split(keys[3 + i], 6)
        params["layers"].append({
            "ln1_g": jnp.ones((HIDDEN,), jnp.float32),
            "ln1_b": jnp.zeros((HIDDEN,), jnp.float32),
            "wq": nrm(lk[0], (HIDDEN, HIDDEN)), "bq": jnp.zeros((HIDDEN,), jnp.float32),
            "wk": nrm(lk[1], (HIDDEN, HIDDEN)), "bk": jnp.zeros((HIDDEN,), jnp.float32),
            "wv": nrm(lk[2], (HIDDEN, HIDDEN)), "bv": jnp.zeros((HIDDEN,), jnp.float32),
            "wo": nrm(lk[3], (HIDDEN, HIDDEN)), "bo": jnp.zeros((HIDDEN,), jnp.float32),
            "ln2_g": jnp.ones((HIDDEN,), jnp.float32),
            "ln2_b": jnp.zeros((HIDDEN,), jnp.float32),
            "w1": nrm(lk[4], (HIDDEN, MLP)), "b1": jnp.zeros((MLP,), jnp.float32),
            "w2": nrm(lk[5], (MLP, HIDDEN)), "b2": jnp.zeros((HIDDEN,), jnp.float32),
        })
    return params


def prepare_vit_params(params, batch):
    """One-time weight fusion / stacking / bf16 pre-cast (done OUTSIDE the jitted loss)."""
    hdim = params["patch_w"].shape[1]
    layers = params["layers"]

    def stack(fn):
        return jnp.stack([fn(lp) for lp in layers])

    return {
        "patch_w": params["patch_w"].astype(jnp.bfloat16),
        "patch_b": params["patch_b"].reshape(1, hdim),
        "row0": params["cls"].reshape(1, hdim) + params["pos"][:, 0, :],   # cls + pos[0]
        "pos_patch": jnp.tile(params["pos"][0, 1:, :], (batch, 1)),        # (B*N, H)
        "ln1_g": stack(lambda lp: lp["ln1_g"].reshape(1, hdim)),
        "ln1_b": stack(lambda lp: lp["ln1_b"].reshape(1, hdim)),
        "wqkv": stack(lambda lp: jnp.concatenate([lp["wq"], lp["wk"], lp["wv"]],
                                                 axis=1)).astype(jnp.bfloat16),
        "bqkv": stack(lambda lp: jnp.concatenate([lp["bq"], lp["bk"], lp["bv"]]
                                                 ).reshape(1, 3 * hdim)),
        "wo": stack(lambda lp: lp["wo"]).astype(jnp.bfloat16),
        "bo": stack(lambda lp: lp["bo"].reshape(1, hdim)),
        "ln2_g": stack(lambda lp: lp["ln2_g"].reshape(1, hdim)),
        "ln2_b": stack(lambda lp: lp["ln2_b"].reshape(1, hdim)),
        "w1": stack(lambda lp: lp["w1"]).astype(jnp.bfloat16),
        "b1": stack(lambda lp: lp["b1"].reshape(1, MLP)),
        "w2": stack(lambda lp: lp["w2"]).astype(jnp.bfloat16),
        "b2": stack(lambda lp: lp["b2"].reshape(1, hdim)),
    }


def _patchify(images):
    """NCHW images -> (B*N, C*P*P) im2col patches (matches Conv2d weight flattening order)."""
    b2, c, hh, ww = images.shape
    if hh != IMG or ww != IMG:
        # mirrors torchvision.transforms.functional.resize (bilinear, no antialias)
        images = jax.image.resize(images, (b2, c, IMG, IMG), method="bilinear")
    gh = IMG // PATCH
    p = images.reshape(b2, c, gh, PATCH, gh, PATCH)
    p = p.transpose(0, 2, 4, 1, 3, 5).reshape(b2 * gh * gh, c * PATCH * PATCH)
    return p


@jax.jit
def vit_mmd_feature_loss(prep, real_images, generated_images):
    # torch reference runs the extractor + loss under no_grad; real features .detach()'d.
    # Real + generated share ONE pallas_call (halves split over the parallel grid axis).
    b = real_images.shape[0]
    images = jnp.concatenate([real_images, generated_images], axis=0)
    patches2 = _patchify(images).reshape(2, b * N_PATCHES, CHANNELS * PATCH * PATCH)
    feats = pallas_vit_forward(prep, patches2)          # (2, B*T, HIDDEN)
    real_f = jax.lax.stop_gradient(feats[0])
    gen_f = feats[1]
    return pallas_mse_mmd_loss(real_f, gen_f, batch=b, sigma=SIGMA)


# ----------------------------------- main --------------------------------------
if __name__ == "__main__":
    key = jax.random.PRNGKey(0)
    kp, kr, kg = jax.random.split(key, 3)
    params = init_vit_params(kp)
    prep = prepare_vit_params(params, batch=2)          # one-time fuse / stack / bf16 cast

    real_images = jax.random.normal(kr, (2, CHANNELS, IMG, IMG), jnp.float32)
    generated_images = jax.random.normal(kg, (2, CHANNELS, IMG, IMG), jnp.float32)

    loss = vit_mmd_feature_loss(prep, real_images, generated_images)
    jax.block_until_ready(loss)
    assert loss.shape == () and jnp.isfinite(loss)
    print("KERNEL_OK")
</pallas_src>

<mosaic_0001>
module attributes {stable_mosaic.version = 11 : i64} {
  func.func @_vit_stack_kernel(%arg0: i32, %arg1: i32, %arg2: memref<1x8x192xf32, #tpu.memory_space<vmem>>, %arg3: memref<1x128xf32, #tpu.memory_space<vmem>>, %arg4: memref<8x128xf32, #tpu.memory_space<vmem>>, %arg5: memref<192x128xbf16, #tpu.memory_space<vmem>>, %arg6: memref<1x128xf32, #tpu.memory_space<vmem>>, %arg7: memref<1x1x128xf32, #tpu.memory_space<vmem>>, %arg8: memref<1x1x128xf32, #tpu.memory_space<vmem>>, %arg9: memref<1x128x384xbf16, #tpu.memory_space<vmem>>, %arg10: memref<1x1x384xf32, #tpu.memory_space<vmem>>, %arg11: memref<1x128x128xbf16, #tpu.memory_space<vmem>>, %arg12: memref<1x1x128xf32, #tpu.memory_space<vmem>>, %arg13: memref<1x1x128xf32, #tpu.memory_space<vmem>>, %arg14: memref<1x1x128xf32, #tpu.memory_space<vmem>>, %arg15: memref<1x128x512xbf16, #tpu.memory_space<vmem>>, %arg16: memref<1x1x512xf32, #tpu.memory_space<vmem>>, %arg17: memref<1x512x128xbf16, #tpu.memory_space<vmem>>, %arg18: memref<1x1x128xf32, #tpu.memory_space<vmem>>, %arg19: memref<1x10x128xf32, #tpu.memory_space<vmem>>, %arg20: memref<10x128xf32, #tpu.memory_space<vmem>>) attributes {dimension_semantics = [#tpu.dimension_semantics<parallel>, #tpu.dimension_semantics<arbitrary>], iteration_bounds = array<i64: 2, 2>, scalar_prefetch = 0 : i64, scratch_operands = 1 : i64, tpu.core_type = #tpu.core_type<tc>, window_params = [{transform_indices = @transform_0, window_bounds = array<i64: 1, 8, 192>}, {pipeline_mode = #tpu.pipeline_mode<synchronous>, transform_indices = @transform_1, window_bounds = array<i64: 1, 128>}, {pipeline_mode = #tpu.pipeline_mode<synchronous>, transform_indices = @transform_2, window_bounds = array<i64: 8, 128>}, {pipeline_mode = #tpu.pipeline_mode<synchronous>, transform_indices = @transform_3, window_bounds = array<i64: 192, 128>}, {pipeline_mode = #tpu.pipeline_mode<synchronous>, transform_indices = @transform_4, window_bounds = array<i64: 1, 128>}, {transform_indices = @transform_5, window_bounds = array<i64: 1, 1, 128>}, {transform_indices = @transform_6, window_bounds = array<i64: 1, 1, 128>}, {transform_indices = @transform_7, window_bounds = array<i64: 1, 128, 384>}, {transform_indices = @transform_8, window_bounds = array<i64: 1, 1, 384>}, {transform_indices = @transform_9, window_bounds = array<i64: 1, 128, 128>}, {transform_indices = @transform_10, window_bounds = array<i64: 1, 1, 128>}, {transform_indices = @transform_11, window_bounds = array<i64: 1, 1, 128>}, {transform_indices = @transform_12, window_bounds = array<i64: 1, 1, 128>}, {transform_indices = @transform_13, window_bounds = array<i64: 1, 128, 512>}, {transform_indices = @transform_14, window_bounds = array<i64: 1, 1, 512>}, {transform_indices = @transform_15, window_bounds = array<i64: 1, 512, 128>}, {transform_indices = @transform_16, window_bounds = array<i64: 1, 1, 128>}, {transform_indices = @transform_17, window_bounds = array<i64: 1, 10, 128>}]} {
    %c0_i32 = arith.constant 0 : i32
    %0 = arith.cmpi eq, %arg1, %c0_i32 : i32
    %1 = arith.extui %0 : i1 to i32
    %c0_i32_0 = arith.constant 0 : i32
    %2 = arith.cmpi ne, %1, %c0_i32_0 : i32
    scf.if %2 {
      %c0_113 = arith.constant 0 : index
      %c0_114 = arith.constant 0 : index
      %c0_115 = arith.constant 0 : index
      %284 = vector.load %arg2[%c0_113, %c0_114, %c0_115] : memref<1x8x192xf32, #tpu.memory_space<vmem>>, vector<1x8x192xf32>
      %285 = vector.shape_cast %284 : vector<1x8x192xf32> to vector<8x192xf32>
      %286 = arith.truncf %285 : vector<8x192xf32> to vector<8x192xbf16>
      %c0_116 = arith.constant 0 : index
      %c0_117 = arith.constant 0 : index
      %287 = vector.load %arg5[%c0_116, %c0_117] : memref<192x128xbf16, #tpu.memory_space<vmem>>, vector<192x128xbf16>
      %cst_118 = arith.constant dense<0.000000e+00> : vector<8x128xf32>
      %288 = tpu.matmul %286, %287, %cst_118 {dimension_numbers = #tpu.dot_dimension_numbers<[1], [0], [0], [1], [0, 0, 1, 1], [], []>} : vector<8x192xbf16>, vector<192x128xbf16>, vector<8x128xf32> -> vector<8x128xf32>
      %c0_119 = arith.constant 0 : index
      %c0_120 = arith.constant 0 : index
      %289 = vector.load %arg6[%c0_119, %c0_120] : memref<1x128xf32, #tpu.memory_space<vmem>>, vector<1x128xf32>
      %290 = vector.broadcast %289 : vector<1x128xf32> to vector<8x128xf32>
      %291 = arith.addf %288, %290 : vector<8x128xf32>
      %c0_121 = arith.constant 0 : index
      %c0_122 = arith.constant 0 : index
      %292 = vector.load %arg4[%c0_121, %c0_122] : memref<8x128xf32, #tpu.memory_space<vmem>>, vector<8x128xf32>
      %293 = arith.addf %291, %292 : vector<8x128xf32>
      %c0_123 = arith.constant 0 : index
      %c0_124 = arith.constant 0 : index
      %294 = vector.load %arg3[%c0_123, %c0_124] : memref<1x128xf32, #tpu.memory_space<vmem>>, vector<1x128xf32>
      %c0_125 = arith.constant 0 : index
      %c0_126 = arith.constant 0 : index
      %c0_127 = arith.constant 0 : index
      %295 = vector.load %arg19[%c0_125, %c0_126, %c0_127] : memref<1x10x128xf32, #tpu.memory_space<vmem>>, vector<1x1x128xf32>
      %296 = vector.shape_cast %295 : vector<1x1x128xf32> to vector<1x128xf32>
      %297 = vector.shape_cast %294 : vector<1x128xf32> to vector<1x1x128xf32>
      tpu.vector_store %arg19[%c0_125, %c0_126, %c0_127], %297 {strides = array<i32>} : memref<1x10x128xf32, #tpu.memory_space<vmem>>, vector<1x1x128xf32>,
      %298 = vector.extract_strided_slice %293 {offsets = [0, 0], sizes = [4, 128], strides = [1, 1]} : vector<8x128xf32> to vector<4x128xf32>
      %c0_128 = arith.constant 0 : index
      %c1 = arith.constant 1 : index
      %c0_129 = arith.constant 0 : index
      %299 = vector.load %arg19[%c0_128, %c1, %c0_129] : memref<1x10x128xf32, #tpu.memory_space<vmem>>, vector<1x4x128xf32>
      %300 = vector.shape_cast %299 : vector<1x4x128xf32> to vector<4x128xf32>
      %301 = vector.shape_cast %298 : vector<4x128xf32> to vector<1x4x128xf32>
      tpu.vector_store %arg19[%c0_128, %c1, %c0_129], %301 {strides = array<i32>} : memref<1x10x128xf32, #tpu.memory_space<vmem>>, vector<1x4x128xf32>,
      %c0_130 = arith.constant 0 : index
      %c0_131 = arith.constant 0 : index
      %302 = vector.load %arg3[%c0_130, %c0_131] : memref<1x128xf32, #tpu.memory_space<vmem>>, vector<1x128xf32>
      %c0_132 = arith.constant 0 : index
      %c5_133 = arith.constant 5 : index
      %c0_134 = arith.constant 0 : index
      %303 = vector.load %arg19[%c0_132, %c5_133, %c0_134] : memref<1x10x128xf32, #tpu.memory_space<vmem>>, vector<1x1x128xf32>
      %304 = vector.shape_cast %303 : vector<1x1x128xf32> to vector<1x128xf32>
      %305 = vector.shape_cast %302 : vector<1x128xf32> to vector<1x1x128xf32>
      tpu.vector_store %arg19[%c0_132, %c5_133, %c0_134], %305 {strides = array<i32>} : memref<1x10x128xf32, #tpu.memory_space<vmem>>, vector<1x1x128xf32>,
      %306 = vector.extract_strided_slice %293 {offsets = [4, 0], sizes = [4, 128], strides = [1, 1]} : vector<8x128xf32> to vector<4x128xf32>
      %c0_135 = arith.constant 0 : index
      %c6 = arith.constant 6 : index
      %c0_136 = arith.constant 0 : index
      %307 = vector.load %arg19[%c0_135, %c6, %c0_136] : memref<1x10x128xf32, #tpu.memory_space<vmem>>, vector<1x4x128xf32>
      %308 = vector.shape_cast %307 : vector<1x4x128xf32> to vector<4x128xf32>
      %309 = vector.shape_cast %306 : vector<4x128xf32> to vector<1x4x128xf32>
      tpu.vector_store %arg19[%c0_135, %c6, %c0_136], %309 {strides = array<i32>} : memref<1x10x128xf32, #tpu.memory_space<vmem>>, vector<1x4x128xf32>,
    } else {
    }
    %c0 = arith.constant 0 : index
    %c0_1 = arith.constant 0 : index
    %c0_2 = arith.constant 0 : index
    %3 = vector.load %arg19[%c0, %c0_1, %c0_2] : memref<1x10x128xf32, #tpu.memory_space<vmem>>, vector<1x10x128xf32>
    %4 = vector.shape_cast %3 : vector<1x10x128xf32> to vector<10x128xf32>
    %c0_3 = arith.constant 0 : index
    %c0_4 = arith.constant 0 : index
    %c0_5 = arith.constant 0 : index
    %5 = vector.load %arg7[%c0_3, %c0_4, %c0_5] : memref<1x1x128xf32, #tpu.memory_space<vmem>>, vector<1x1x128xf32>
    %6 = vector.shape_cast %5 : vector<1x1x128xf32> to vector<1x128xf32>
    %c0_6 = arith.constant 0 : index
    %c0_7 = arith.constant 0 : index
    %c0_8 = arith.constant 0 : index
    %7 = vector.load %arg8[%c0_6, %c0_7, %c0_8] : memref<1x1x128xf32, #tpu.memory_space<vmem>>, vector<1x1x128xf32>
    %8 = vector.shape_cast %7 : vector<1x1x128xf32> to vector<1x128xf32>
    %cst = arith.constant dense<0.000000e+00> : vector<10xf32>
    %9 = vector.multi_reduction <add>, %4, %cst [1] : vector<10x128xf32> to vector<10xf32>
    %10 = vector.shape_cast %9 : vector<10xf32> to vector<10x1xf32>
    %cst_9 = arith.constant 1.280000e+02 : f32
    %11 = vector.broadcast %cst_9 : f32 to vector<10x1xf32>
    %12 = arith.divf %10, %11 : vector<10x1xf32>
    %13 = vector.broadcast %12 : vector<10x1xf32> to vector<10x128xf32>
    %14 = arith.subf %4, %13 : vector<10x128xf32>
    %15 = arith.mulf %14, %14 : vector<10x128xf32>
    %cst_10 = arith.constant dense<0.000000e+00> : vector<10xf32>
    %16 = vector.multi_reduction <add>, %15, %cst_10 [1] : vector<10x128xf32> to vector<10xf32>
    %17 = vector.shape_cast %16 : vector<10xf32> to vector<10x1xf32>
    %cst_11 = arith.constant 1.280000e+02 : f32
    %18 = vector.broadcast %cst_11 : f32 to vector<10x1xf32>
    %19 = arith.divf %17, %18 : vector<10x1xf32>
    %20 = vector.broadcast %12 : vector<10x1xf32> to vector<10x128xf32>
    %21 = arith.subf %4, %20 : vector<10x128xf32>
    %cst_12 = arith.constant 9.99999996E-13 : f32
    %22 = vector.broadcast %cst_12 : f32 to vector<10x1xf32>
    %23 = arith.addf %19, %22 : vector<10x1xf32>
    %24 = math.rsqrt %23 : vector<10x1xf32>
    %25 = vector.broadcast %24 : vector<10x1xf32> to vector<10x128xf32>
    %26 = arith.mulf %21, %25 : vector<10x128xf32>
    %27 = vector.broadcast %6 : vector<1x128xf32> to vector<10x128xf32>
    %28 = arith.mulf %26, %27 : vector<10x128xf32>
    %29 = vector.broadcast %8 : vector<1x128xf32> to vector<10x128xf32>
    %30 = arith.addf %28, %29 : vector<10x128xf32>
    %31 = arith.truncf %30 : vector<10x128xf32> to vector<10x128xbf16>
    %c0_13 = arith.constant 0 : index
    %c0_14 = arith.constant 0 : index
    %c0_15 = arith.constant 0 : index
    %32 = vector.load %arg9[%c0_13, %c0_14, %c0_15] : memref<1x128x384xbf16, #tpu.memory_space<vmem>>, vector<1x128x384xbf16>
    %33 = vector.shape_cast %32 : vector<1x128x384xbf16> to vector<128x384xbf16>
    %cst_16 = arith.constant dense<0.000000e+00> : vector<10x384xf32>
    %34 = tpu.matmul %31, %33, %cst_16 {dimension_numbers = #tpu.dot_dimension_numbers<[1], [0], [0], [1], [0, 0, 1, 1], [], []>} : vector<10x128xbf16>, vector<128x384xbf16>, vector<10x384xf32> -> vector<10x384xf32>
    %c0_17 = arith.constant 0 : index
    %c0_18 = arith.constant 0 : index
    %c0_19 = arith.constant 0 : index
    %35 = vector.load %arg10[%c0_17, %c0_18, %c0_19] : memref<1x1x384xf32, #tpu.memory_space<vmem>>, vector<1x1x384xf32>
    %36 = vector.shape_cast %35 : vector<1x1x384xf32> to vector<1x384xf32>
    %37 = vector.broadcast %36 : vector<1x384xf32> to vector<10x384xf32>
    %38 = arith.addf %34, %37 : vector<10x384xf32>
    %39 = vector.extract_strided_slice %38 {offsets = [0, 0], sizes = [5, 32], strides = [1, 1]} : vector<10x384xf32> to vector<5x32xf32>
    %cst_20 = arith.constant 0.176776692 : f32
    %40 = vector.broadcast %cst_20 : f32 to vector<5x32xf32>
    %41 = arith.mulf %39, %40 : vector<5x32xf32>
    %42 = arith.truncf %41 : vector<5x32xf32> to vector<5x32xbf16>
    %43 = vector.extract_strided_slice %38 {offsets = [0, 128], sizes = [5, 32], strides = [1, 1]} : vector<10x384xf32> to vector<5x32xf32>
    %44 = arith.truncf %43 : vector<5x32xf32> to vector<5x32xbf16>
    %45 = vector.extract_strided_slice %38 {offsets = [0, 256], sizes = [5, 32], strides = [1, 1]} : vector<10x384xf32> to vector<5x32xf32>
    %46 = arith.truncf %45 : vector<5x32xf32> to vector<5x32xbf16>
    "tpu.trace_start"() <{level = 10 : i32, message = "qd,kd->qk"}> : () -> ()
    %cst_21 = arith.constant dense<0.000000e+00> : vector<5x5xf32>
    %47 = tpu.matmul %42, %44, %cst_21 {dimension_numbers = #tpu.dot_dimension_numbers<[1], [1], [0], [0], [0, 0, 1, 0], [], []>} : vector<5x32xbf16>, vector<5x32xbf16>, vector<5x5xf32> -> vector<5x5xf32>
    "tpu.trace_stop"() : () -> ()
    %cst_22 = arith.constant dense<0xFF800000> : vector<5xf32>
    %48 = vector.multi_reduction <maximumf>, %47, %cst_22 [1] : vector<5x5xf32> to vector<5xf32>
    %49 = vector.shape_cast %48 : vector<5xf32> to vector<5x1xf32>
    %50 = vector.broadcast %49 : vector<5x1xf32> to vector<5x5xf32>
    %51 = arith.subf %47, %50 : vector<5x5xf32>
    %52 = math.exp %51 : vector<5x5xf32>
    %cst_23 = arith.constant dense<0.000000e+00> : vector<5xf32>
    %53 = vector.multi_reduction <add>, %52, %cst_23 [1] : vector<5x5xf32> to vector<5xf32>
    %54 = vector.shape_cast %53 : vector<5xf32> to vector<5x1xf32>
    %55 = tpu.reciprocal %54 {approx = true} : vector<5x1xf32> -> vector<5x1xf32>
    %56 = vector.broadcast %55 : vector<5x1xf32> to vector<5x5xf32>
    %57 = arith.mulf %52, %56 : vector<5x5xf32>
    %58 = arith.truncf %57 : vector<5x5xf32> to vector<5x5xbf16>
    %cst_24 = arith.constant dense<0.000000e+00> : vector<5x32xf32>
    %59 = tpu.matmul %58, %46, %cst_24 {dimension_numbers = #tpu.dot_dimension_numbers<[1], [0], [0], [1], [0, 0, 1, 1], [], []>} : vector<5x5xbf16>, vector<5x32xbf16>, vector<5x32xf32> -> vector<5x32xf32>
    %c0_25 = arith.constant 0 : index
    %c0_26 = arith.constant 0 : index
    %60 = vector.load %arg20[%c0_25, %c0_26] : memref<10x128xf32, #tpu.memory_space<vmem>>, vector<5x32xf32>
    tpu.vector_store %arg20[%c0_25, %c0_26], %59 {strides = array<i32>} : memref<10x128xf32, #tpu.memory_space<vmem>>, vector<5x32xf32>,
    %61 = vector.extract_strided_slice %38 {offsets = [0, 32], sizes = [5, 32], strides = [1, 1]} : vector<10x384xf32> to vector<5x32xf32>
    %cst_27 = arith.constant 0.176776692 : f32
    %62 = vector.broadcast %cst_27 : f32 to vector<5x32xf32>
    %63 = arith.mulf %61, %62 : vector<5x32xf32>
    %64 = arith.truncf %63 : vector<5x32xf32> to vector<5x32xbf16>
    %65 = vector.extract_strided_slice %38 {offsets = [0, 160], sizes = [5, 32], strides = [1, 1]} : vector<10x384xf32> to vector<5x32xf32>
    %66 = arith.truncf %65 : vector<5x32xf32> to vector<5x32xbf16>
    %67 = vector.extract_strided_slice %38 {offsets = [0, 288], sizes = [5, 32], strides = [1, 1]} : vector<10x384xf32> to vector<5x32xf32>
    %68 = arith.truncf %67 : vector<5x32xf32> to vector<5x32xbf16>
    "tpu.trace_start"() <{level = 10 : i32, message = "qd,kd->qk"}> : () -> ()
    %cst_28 = arith.constant dense<0.000000e+00> : vector<5x5xf32>
    %69 = tpu.matmul %64, %66, %cst_28 {dimension_numbers = #tpu.dot_dimension_numbers<[1], [1], [0], [0], [0, 0, 1, 0], [], []>} : vector<5x32xbf16>, vector<5x32xbf16>, vector<5x5xf32> -> vector<5x5xf32>
    "tpu.trace_stop"() : () -> ()
    %cst_29 = arith.constant dense<0xFF800000> : vector<5xf32>
    %70 = vector.multi_reduction <maximumf>, %69, %cst_29 [1] : vector<5x5xf32> to vector<5xf32>
    %71 = vector.shape_cast %70 : vector<5xf32> to vector<5x1xf32>
    %72 = vector.broadcast %71 : vector<5x1xf32> to vector<5x5xf32>
    %73 = arith.subf %69, %72 : vector<5x5xf32>
    %74 = math.exp %73 : vector<5x5xf32>
    %cst_30 = arith.constant dense<0.000000e+00> : vector<5xf32>
    %75 = vector.multi_reduction <add>, %74, %cst_30 [1] : vector<5x5xf32> to vector<5xf32>
    %76 = vector.shape_cast %75 : vector<5xf32> to vector<5x1xf32>
    %77 = tpu.reciprocal %76 {approx = true} : vector<5x1xf32> -> vector<5x1xf32>
    %78 = vector.broadcast %77 : vector<5x1xf32> to vector<5x5xf32>
    %79 = arith.mulf %74, %78 : vector<5x5xf32>
    %80 = arith.truncf %79 : vector<5x5xf32> to vector<5x5xbf16>
    %cst_31 = arith.constant dense<0.000000e+00> : vector<5x32xf32>
    %81 = tpu.matmul %80, %68, %cst_31 {dimension_numbers = #tpu.dot_dimension_numbers<[1], [0], [0], [1], [0, 0, 1, 1], [], []>} : vector<5x5xbf16>, vector<5x32xbf16>, vector<5x32xf32> -> vector<5x32xf32>
    %c0_32 = arith.constant 0 : index
    %c32 = arith.constant 32 : index
    %82 = vector.load %arg20[%c0_32, %c32] : memref<10x128xf32, #tpu.memory_space<vmem>>, vector<5x32xf32>
    tpu.vector_store %arg20[%c0_32, %c32], %81 {strides = array<i32>} : memref<10x128xf32, #tpu.memory_space<vmem>>, vector<5x32xf32>,
    %83 = vector.extract_strided_slice %38 {offsets = [0, 64], sizes = [5, 32], strides = [1, 1]} : vector<10x384xf32> to vector<5x32xf32>
    %cst_33 = arith.constant 0.176776692 : f32
    %84 = vector.broadcast %cst_33 : f32 to vector<5x32xf32>
    %85 = arith.mulf %83, %84 : vector<5x32xf32>
    %86 = arith.truncf %85 : vector<5x32xf32> to vector<5x32xbf16>
    %87 = vector.extract_strided_slice %38 {offsets = [0, 192], sizes = [5, 32], strides = [1, 1]} : vector<10x384xf32> to vector<5x32xf32>
    %88 = arith.truncf %87 : vector<5x32xf32> to vector<5x32xbf16>
    %89 = vector.extract_strided_slice %38 {offsets = [0, 320], sizes = [5, 32], strides = [1, 1]} : vector<10x384xf32> to vector<5x32xf32>
    %90 = arith.truncf %89 : vector<5x32xf32> to vector<5x32xbf16>
    "tpu.trace_start"() <{level = 10 : i32, message = "qd,kd->qk"}> : () -> ()
    %cst_34 = arith.constant dense<0.000000e+00> : vector<5x5xf32>
    %91 = tpu.matmul %86, %88, %cst_34 {dimension_numbers = #tpu.dot_dimension_numbers<[1], [1], [0], [0], [0, 0, 1, 0], [], []>} : vector<5x32xbf16>, vector<5x32xbf16>, vector<5x5xf32> -> vector<5x5xf32>
    "tpu.trace_stop"() : () -> ()
    %cst_35 = arith.constant dense<0xFF800000> : vector<5xf32>
    %92 = vector.multi_reduction <maximumf>, %91, %cst_35 [1] : vector<5x5xf32> to vector<5xf32>
    %93 = vector.shape_cast %92 : vector<5xf32> to vector<5x1xf32>
    %94 = vector.broadcast %93 : vector<5x1xf32> to vector<5x5xf32>
    %95 = arith.subf %91, %94 : vector<5x5xf32>
    %96 = math.exp %95 : vector<5x5xf32>
    %cst_36 = arith.constant dense<0.000000e+00> : vector<5xf32>
    %97 = vector.multi_reduction <add>, %96, %cst_36 [1] : vector<5x5xf32> to vector<5xf32>
    %98 = vector.shape_cast %97 : vector<5xf32> to vector<5x1xf32>
    %99 = tpu.reciprocal %98 {approx = true} : vector<5x1xf32> -> vector<5x1xf32>
    %100 = vector.broadcast %99 : vector<5x1xf32> to vector<5x5xf32>
    %101 = arith.mulf %96, %100 : vector<5x5xf32>
    %102 = arith.truncf %101 : vector<5x5xf32> to vector<5x5xbf16>
    %cst_37 = arith.constant dense<0.000000e+00> : vector<5x32xf32>
    %103 = tpu.matmul %102, %90, %cst_37 {dimension_numbers = #tpu.dot_dimension_numbers<[1], [0], [0], [1], [0, 0, 1, 1], [], []>} : vector<5x5xbf16>, vector<5x32xbf16>, vector<5x32xf32> -> vector<5x32xf32>
    %c0_38 = arith.constant 0 : index
    %c64 = arith.constant 64 : index
    %104 = vector.load %arg20[%c0_38, %c64] : memref<10x128xf32, #tpu.memory_space<vmem>>, vector<5x32xf32>
    tpu.vector_store %arg20[%c0_38, %c64], %103 {strides = array<i32>} : memref<10x128xf32, #tpu.memory_space<vmem>>, vector<5x32xf32>,
    %105 = vector.extract_strided_slice %38 {offsets = [0, 96], sizes = [5, 32], strides = [1, 1]} : vector<10x384xf32> to vector<5x32xf32>
    %cst_39 = arith.constant 0.176776692 : f32
    %106 = vector.broadcast %cst_39 : f32 to vector<5x32xf32>
    %107 = arith.mulf %105, %106 : vector<5x32xf32>
    %108 = arith.truncf %107 : vector<5x32xf32> to vector<5x32xbf16>
    %109 = vector.extract_strided_slice %38 {offsets = [0, 224], sizes = [5, 32], strides = [1, 1]} : vector<10x384xf32> to vector<5x32xf32>
    %110 = arith.truncf %109 : vector<5x32xf32> to vector<5x32xbf16>
    %111 = vector.extract_strided_slice %38 {offsets = [0, 352], sizes = [5, 32], strides = [1, 1]} : vector<10x384xf32> to vector<5x32xf32>
    %112 = arith.truncf %111 : vector<5x32xf32> to vector<5x32xbf16>
    "tpu.trace_start"() <{level = 10 : i32, message = "qd,kd->qk"}> : () -> ()
    %cst_40 = arith.constant dense<0.000000e+00> : vector<5x5xf32>
    %113 = tpu.matmul %108, %110, %cst_40 {dimension_numbers = #tpu.dot_dimension_numbers<[1], [1], [0], [0], [0, 0, 1, 0], [], []>} : vector<5x32xbf16>, vector<5x32xbf16>, vector<5x5xf32> -> vector<5x5xf32>
    "tpu.trace_stop"() : () -> ()
    %cst_41 = arith.constant dense<0xFF800000> : vector<5xf32>
    %114 = vector.multi_reduction <maximumf>, %113, %cst_41 [1] : vector<5x5xf32> to vector<5xf32>
    %115 = vector.shape_cast %114 : vector<5xf32> to vector<5x1xf32>
    %116 = vector.broadcast %115 : vector<5x1xf32> to vector<5x5xf32>
    %117 = arith.subf %113, %116 : vector<5x5xf32>
    %118 = math.exp %117 : vector<5x5xf32>
    %cst_42 = arith.constant dense<0.000000e+00> : vector<5xf32>
    %119 = vector.multi_reduction <add>, %118, %cst_42 [1] : vector<5x5xf32> to vector<5xf32>
    %120 = vector.shape_cast %119 : vector<5xf32> to vector<5x1xf32>
    %121 = tpu.reciprocal %120 {approx = true} : vector<5x1xf32> -> vector<5x1xf32>
    %122 = vector.broadcast %121 : vector<5x1xf32> to vector<5x5xf32>
    %123 = arith.mulf %118, %122 : vector<5x5xf32>
    %124 = arith.truncf %123 : vector<5x5xf32> to vector<5x5xbf16>
    %cst_43 = arith.constant dense<0.000000e+00> : vector<5x32xf32>
    %125 = tpu.matmul %124, %112, %cst_43 {dimension_numbers = #tpu.dot_dimension_numbers<[1], [0], [0], [1], [0, 0, 1, 1], [], []>} : vector<5x5xbf16>, vector<5x32xbf16>, vector<5x32xf32> -> vector<5x32xf32>
    %c0_44 = arith.constant 0 : index
    %c96 = arith.constant 96 : index
    %126 = vector.load %arg20[%c0_44, %c96] : memref<10x128xf32, #tpu.memory_space<vmem>>, vector<5x32xf32>
    tpu.vector_store %arg20[%c0_44, %c96], %125 {strides = array<i32>} : memref<10x128xf32, #tpu.memory_space<vmem>>, vector<5x32xf32>,
    %127 = vector.extract_strided_slice %38 {offsets = [5, 0], sizes = [5, 32], strides = [1, 1]} : vector<10x384xf32> to vector<5x32xf32>
    %cst_45 = arith.constant 0.176776692 : f32
    %128 = vector.broadcast %cst_45 : f32 to vector<5x32xf32>
    %129 = arith.mulf %127, %128 : vector<5x32xf32>
    %130 = arith.truncf %129 : vector<5x32xf32> to vector<5x32xbf16>
    %131 = vector.extract_strided_slice %38 {offsets = [5, 128], sizes = [5, 32], strides = [1, 1]} : vector<10x384xf32> to vector<5x32xf32>
    %132 = arith.truncf %131 : vector<5x32xf32> to vector<5x32xbf16>
    %133 = vector.extract_strided_slice %38 {offsets = [5, 256], sizes = [5, 32], strides = [1, 1]} : vector<10x384xf32> to vector<5x32xf32>
    %134 = arith.truncf %133 : vector<5x32xf32> to vector<5x32xbf16>
    "tpu.trace_start"() <{level = 10 : i32, message = "qd,kd->qk"}> : () -> ()
    %cst_46 = arith.constant dense<0.000000e+00> : vector<5x5xf32>
    %135 = tpu.matmul %130, %132, %cst_46 {dimension_numbers = #tpu.dot_dimension_numbers<[1], [1], [0], [0], [0, 0, 1, 0], [], []>} : vector<5x32xbf16>, vector<5x32xbf16>, vector<5x5xf32> -> vector<5x5xf32>
    "tpu.trace_stop"() : () -> ()
    %cst_47 = arith.constant dense<0xFF800000> : vector<5xf32>
    %136 = vector.multi_reduction <maximumf>, %135, %cst_47 [1] : vector<5x5xf32> to vector<5xf32>
    %137 = vector.shape_cast %136 : vector<5xf32> to vector<5x1xf32>
    %138 = vector.broadcast %137 : vector<5x1xf32> to vector<5x5xf32>
    %139 = arith.subf %135, %138 : vector<5x5xf32>
    %140 = math.exp %139 : vector<5x5xf32>
    %cst_48 = arith.constant dense<0.000000e+00> : vector<5xf32>
    %141 = vector.multi_reduction <add>, %140, %cst_48 [1] : vector<5x5xf32> to vector<5xf32>
    %142 = vector.shape_cast %141 : vector<5xf32> to vector<5x1xf32>
    %143 = tpu.reciprocal %142 {approx = true} : vector<5x1xf32> -> vector<5x1xf32>
    %144 = vector.broadcast %143 : vector<5x1xf32> to vector<5x5xf32>
    %145 = arith.mulf %140, %144 : vector<5x5xf32>
    %146 = arith.truncf %145 : vector<5x5xf32> to vector<5x5xbf16>
    %cst_49 = arith.constant dense<0.000000e+00> : vector<5x32xf32>
    %147 = tpu.matmul %146, %134, %cst_49 {dimension_numbers = #tpu.dot_dimension_numbers<[1], [0], [0], [1], [0, 0, 1, 1], [], []>} : vector<5x5xbf16>, vector<5x32xbf16>, vector<5x32xf32> -> vector<5x32xf32>
    %c5 = arith.constant 5 : index
    %c0_50 = arith.constant 0 : index
    %148 = vector.load %arg20[%c5, %c0_50] : memref<10x128xf32, #tpu.memory_space<vmem>>, vector<5x32xf32>
    tpu.vector_store %arg20[%c5, %c0_50], %147 {strides = array<i32>} : memref<10x128xf32, #tpu.memory_space<vmem>>, vector<5x32xf32>,
    %149 = vector.extract_strided_slice %38 {offsets = [5, 32], sizes = [5, 32], strides = [1, 1]} : vector<10x384xf32> to vector<5x32xf32>
    %cst_51 = arith.constant 0.176776692 : f32
    %150 = vector.broadcast %cst_51 : f32 to vector<5x32xf32>
    %151 = arith.mulf %149, %150 : vector<5x32xf32>
    %152 = arith.truncf %151 : vector<5x32xf32> to vector<5x32xbf16>
    %153 = vector.extract_strided_slice %38 {offsets = [5, 160], sizes = [5, 32], strides = [1, 1]} : vector<10x384xf32> to vector<5x32xf32>
    %154 = arith.truncf %153 : vector<5x32xf32> to vector<5x32xbf16>
    %155 = vector.extract_strided_slice %38 {offsets = [5, 288], sizes = [5, 32], strides = [1, 1]} : vector<10x384xf32> to vector<5x32xf32>
    %156 = arith.truncf %155 : vector<5x32xf32> to vector<5x32xbf16>
    "tpu.trace_start"() <{level = 10 : i32, message = "qd,kd->qk"}> : () -> ()
    %cst_52 = arith.constant dense<0.000000e+00> : vector<5x5xf32>
    %157 = tpu.matmul %152, %154, %cst_52 {dimension_numbers = #tpu.dot_dimension_numbers<[1], [1], [0], [0], [0, 0, 1, 0], [], []>} : vector<5x32xbf16>, vector<5x32xbf16>, vector<5x5xf32> -> vector<5x5xf32>
    "tpu.trace_stop"() : () -> ()
    %cst_53 = arith.constant dense<0xFF800000> : vector<5xf32>
    %158 = vector.multi_reduction <maximumf>, %157, %cst_53 [1] : vector<5x5xf32> to vector<5xf32>
    %159 = vector.shape_cast %158 : vector<5xf32> to vector<5x1xf32>
    %160 = vector.broadcast %159 : vector<5x1xf32> to vector<5x5xf32>
    %161 = arith.subf %157, %160 : vector<5x5xf32>
    %162 = math.exp %161 : vector<5x5xf32>
    %cst_54 = arith.constant dense<0.000000e+00> : vector<5xf32>
    %163 = vector.multi_reduction <add>, %162, %cst_54 [1] : vector<5x5xf32> to vector<5xf32>
    %164 = vector.shape_cast %163 : vector<5xf32> to vector<5x1xf32>
    %165 = tpu.reciprocal %164 {approx = true} : vector<5x1xf32> -> vector<5x1xf32>
    %166 = vector.broadcast %165 : vector<5x1xf32> to vector<5x5xf32>
    %167 = arith.mulf %162, %166 : vector<5x5xf32>
    %168 = arith.truncf %167 : vector<5x5xf32> to vector<5x5xbf16>
    %cst_55 = arith.constant dense<0.000000e+00> : vector<5x32xf32>
    %169 = tpu.matmul %168, %156, %cst_55 {dimension_numbers = #tpu.dot_dimension_numbers<[1], [0], [0], [1], [0, 0, 1, 1], [], []>} : vector<5x5xbf16>, vector<5x32xbf16>, vector<5x32xf32> -> vector<5x32xf32>
    %c5_56 = arith.constant 5 : index
    %c32_57 = arith.constant 32 : index
    %170 = vector.load %arg20[%c5_56, %c32_57] : memref<10x128xf32, #tpu.memory_space<vmem>>, vector<5x32xf32>
    tpu.vector_store %arg20[%c5_56, %c32_57], %169 {strides = array<i32>} : memref<10x128xf32, #tpu.memory_space<vmem>>, vector<5x32xf32>,
    %171 = vector.extract_strided_slice %38 {offsets = [5, 64], sizes = [5, 32], strides = [1, 1]} : vector<10x384xf32> to vector<5x32xf32>
    %cst_58 = arith.constant 0.176776692 : f32
    %172 = vector.broadcast %cst_58 : f32 to vector<5x32xf32>
    %173 = arith.mulf %171, %172 : vector<5x32xf32>
    %174 = arith.truncf %173 : vector<5x32xf32> to vector<5x32xbf16>
    %175 = vector.extract_strided_slice %38 {offsets = [5, 192], sizes = [5, 32], strides = [1, 1]} : vector<10x384xf32> to vector<5x32xf32>
    %176 = arith.truncf %175 : vector<5x32xf32> to vector<5x32xbf16>
    %177 = vector.extract_strided_slice %38 {offsets = [5, 320], sizes = [5, 32], strides = [1, 1]} : vector<10x384xf32> to vector<5x32xf32>
    %178 = arith.truncf %177 : vector<5x32xf32> to vector<5x32xbf16>
    "tpu.trace_start"() <{level = 10 : i32, message = "qd,kd->qk"}> : () -> ()
    %cst_59 = arith.constant dense<0.000000e+00> : vector<5x5xf32>
    %179 = tpu.matmul %174, %176, %cst_59 {dimension_numbers = #tpu.dot_dimension_numbers<[1], [1], [0], [0], [0, 0, 1, 0], [], []>} : vector<5x32xbf16>, vector<5x32xbf16>, vector<5x5xf32> -> vector<5x5xf32>
    "tpu.trace_stop"() : () -> ()
    %cst_60 = arith.constant dense<0xFF800000> : vector<5xf32>
    %180 = vector.multi_reduction <maximumf>, %179, %cst_60 [1] : vector<5x5xf32> to vector<5xf32>
    %181 = vector.shape_cast %180 : vector<5xf32> to vector<5x1xf32>
    %182 = vector.broadcast %181 : vector<5x1xf32> to vector<5x5xf32>
    %183 = arith.subf %179, %182 : vector<5x5xf32>
    %184 = math.exp %183 : vector<5x5xf32>
    %cst_61 = arith.constant dense<0.000000e+00> : vector<5xf32>
    %185 = vector.multi_reduction <add>, %184, %cst_61 [1] : vector<5x5xf32> to vector<5xf32>
    %186 = vector.shape_cast %185 : vector<5xf32> to vector<5x1xf32>
    %187 = tpu.reciprocal %186 {approx = true} : vector<5x1xf32> -> vector<5x1xf32>
    %188 = vector.broadcast %187 : vector<5x1xf32> to vector<5x5xf32>
    %189 = arith.mulf %184, %188 : vector<5x5xf32>
    %190 = arith.truncf %189 : vector<5x5xf32> to vector<5x5xbf16>
    %cst_62 = arith.constant dense<0.000000e+00> : vector<5x32xf32>
    %191 = tpu.matmul %190, %178, %cst_62 {dimension_numbers = #tpu.dot_dimension_numbers<[1], [0], [0], [1], [0, 0, 1, 1], [], []>} : vector<5x5xbf16>, vector<5x32xbf16>, vector<5x32xf32> -> vector<5x32xf32>
    %c5_63 = arith.constant 5 : index
    %c64_64 = arith.constant 64 : index
    %192 = vector.load %arg20[%c5_63, %c64_64] : memref<10x128xf32, #tpu.memory_space<vmem>>, vector<5x32xf32>
    tpu.vector_store %arg20[%c5_63, %c64_64], %191 {strides = array<i32>} : memref<10x128xf32, #tpu.memory_space<vmem>>, vector<5x32xf32>,
    %193 = vector.extract_strided_slice %38 {offsets = [5, 96], sizes = [5, 32], strides = [1, 1]} : vector<10x384xf32> to vector<5x32xf32>
    %cst_65 = arith.constant 0.176776692 : f32
    %194 = vector.broadcast %cst_65 : f32 to vector<5x32xf32>
    %195 = arith.mulf %193, %194 : vector<5x32xf32>
    %196 = arith.truncf %195 : vector<5x32xf32> to vector<5x32xbf16>
    %197 = vector.extract_strided_slice %38 {offsets = [5, 224], sizes = [5, 32], strides = [1, 1]} : vector<10x384xf32> to vector<5x32xf32>
    %198 = arith.truncf %197 : vector<5x32xf32> to vector<5x32xbf16>
    %199 = vector.extract_strided_slice %38 {offsets = [5, 352], sizes = [5, 32], strides = [1, 1]} : vector<10x384xf32> to vector<5x32xf32>
    %200 = arith.truncf %199 : vector<5x32xf32> to vector<5x32xbf16>
    "tpu.trace_start"() <{level = 10 : i32, message = "qd,kd->qk"}> : () -> ()
    %cst_66 = arith.constant dense<0.000000e+00> : vector<5x5xf32>
    %201 = tpu.matmul %196, %198, %cst_66 {dimension_numbers = #tpu.dot_dimension_numbers<[1], [1], [0], [0], [0, 0, 1, 0], [], []>} : vector<5x32xbf16>, vector<5x32xbf16>, vector<5x5xf32> -> vector<5x5xf32>
    "tpu.trace_stop"() : () -> ()
    %cst_67 = arith.constant dense<0xFF800000> : vector<5xf32>
    %202 = vector.multi_reduction <maximumf>, %201, %cst_67 [1] : vector<5x5xf32> to vector<5xf32>
    %203 = vector.shape_cast %202 : vector<5xf32> to vector<5x1xf32>
    %204 = vector.broadcast %203 : vector<5x1xf32> to vector<5x5xf32>
    %205 = arith.subf %201, %204 : vector<5x5xf32>
    %206 = math.exp %205 : vector<5x5xf32>
    %cst_68 = arith.constant dense<0.000000e+00> : vector<5xf32>
    %207 = vector.multi_reduction <add>, %206, %cst_68 [1] : vector<5x5xf32> to vector<5xf32>
    %208 = vector.shape_cast %207 : vector<5xf32> to vector<5x1xf32>
    %209 = tpu.reciprocal %208 {approx = true} : vector<5x1xf32> -> vector<5x1xf32>
    %210 = vector.broadcast %209 : vector<5x1xf32> to vector<5x5xf32>
    %211 = arith.mulf %206, %210 : vector<5x5xf32>
    %212 = arith.truncf %211 : vector<5x5xf32> to vector<5x5xbf16>
    %cst_69 = arith.constant dense<0.000000e+00> : vector<5x32xf32>
    %213 = tpu.matmul %212, %200, %cst_69 {dimension_numbers = #tpu.dot_dimension_numbers<[1], [0], [0], [1], [0, 0, 1, 1], [], []>} : vector<5x5xbf16>, vector<5x32xbf16>, vector<5x32xf32> -> vector<5x32xf32>
    %c5_70 = arith.constant 5 : index
    %c96_71 = arith.constant 96 : index
    %214 = vector.load %arg20[%c5_70, %c96_71] : memref<10x128xf32, #tpu.memory_space<vmem>>, vector<5x32xf32>
    tpu.vector_store %arg20[%c5_70, %c96_71], %213 {strides = array<i32>} : memref<10x128xf32, #tpu.memory_space<vmem>>, vector<5x32xf32>,
    %c0_72 = arith.constant 0 : index
    %c0_73 = arith.constant 0 : index
    %215 = vector.load %arg20[%c0_72, %c0_73] : memref<10x128xf32, #tpu.memory_space<vmem>>, vector<10x128xf32>
    %216 = arith.truncf %215 : vector<10x128xf32> to vector<10x128xbf16>
    %c0_74 = arith.constant 0 : index
    %c0_75 = arith.constant 0 : index
    %c0_76 = arith.constant 0 : index
    %217 = vector.load %arg11[%c0_74, %c0_75, %c0_76] : memref<1x128x128xbf16, #tpu.memory_space<vmem>>, vector<1x128x128xbf16>
    %218 = vector.shape_cast %217 : vector<1x128x128xbf16> to vector<128x128xbf16>
    %cst_77 = arith.constant dense<0.000000e+00> : vector<10x128xf32>
    %219 = tpu.matmul %216, %218, %cst_77 {dimension_numbers = #tpu.dot_dimension_numbers<[1], [0], [0], [1], [0, 0, 1, 1], [], []>} : vector<10x128xbf16>, vector<128x128xbf16>, vector<10x128xf32> -> vector<10x128xf32>
    %220 = arith.addf %4, %219 : vector<10x128xf32>
    %c0_78 = arith.constant 0 : index
    %c0_79 = arith.constant 0 : index
    %c0_80 = arith.constant 0 : index
    %221 = vector.load %arg12[%c0_78, %c0_79, %c0_80] : memref<1x1x128xf32, #tpu.memory_space<vmem>>, vector<1x1x128xf32>
    %222 = vector.shape_cast %221 : vector<1x1x128xf32> to vector<1x128xf32>
    %223 = vector.broadcast %222 : vector<1x128xf32> to vector<10x128xf32>
    %224 = arith.addf %220, %223 : vector<10x128xf32>
    %c0_81 = arith.constant 0 : index
    %c0_82 = arith.constant 0 : index
    %c0_83 = arith.constant 0 : index
    %225 = vector.load %arg13[%c0_81, %c0_82, %c0_83] : memref<1x1x128xf32, #tpu.memory_space<vmem>>, vector<1x1x128xf32>
    %226 = vector.shape_cast %225 : vector<1x1x128xf32> to vector<1x128xf32>
    %c0_84 = arith.constant 0 : index
    %c0_85 = arith.constant 0 : index
    %c0_86 = arith.constant 0 : index
    %227 = vector.load %arg14[%c0_84, %c0_85, %c0_86] : memref<1x1x128xf32, #tpu.memory_space<vmem>>, vector<1x1x128xf32>
    %228 = vector.shape_cast %227 : vector<1x1x128xf32> to vector<1x128xf32>
    %cst_87 = arith.constant dense<0.000000e+00> : vector<10xf32>
    %229 = vector.multi_reduction <add>, %224, %cst_87 [1] : vector<10x128xf32> to vector<10xf32>
    %230 = vector.shape_cast %229 : vector<10xf32> to vector<10x1xf32>
    %cst_88 = arith.constant 1.280000e+02 : f32
    %231 = vector.broadcast %cst_88 : f32 to vector<10x1xf32>
    %232 = arith.divf %230, %231 : vector<10x1xf32>
    %233 = vector.broadcast %232 : vector<10x1xf32> to vector<10x128xf32>
    %234 = arith.subf %224, %233 : vector<10x128xf32>
    %235 = arith.mulf %234, %234 : vector<10x128xf32>
    %cst_89 = arith.constant dense<0.000000e+00> : vector<10xf32>
    %236 = vector.multi_reduction <add>, %235, %cst_89 [1] : vector<10x128xf32> to vector<10xf32>
    %237 = vector.shape_cast %236 : vector<10xf32> to vector<10x1xf32>
    %cst_90 = arith.constant 1.280000e+02 : f32
    %238 = vector.broadcast %cst_90 : f32 to vector<10x1xf32>
    %239 = arith.divf %237, %238 : vector<10x1xf32>
    %240 = vector.broadcast %232 : vector<10x1xf32> to vector<10x128xf32>
    %241 = arith.subf %224, %240 : vector<10x128xf32>
    %cst_91 = arith.constant 9.99999996E-13 : f32
    %242 = vector.broadcast %cst_91 : f32 to vector<10x1xf32>
    %243 = arith.addf %239, %242 : vector<10x1xf32>
    %244 = math.rsqrt %243 : vector<10x1xf32>
    %245 = vector.broadcast %244 : vector<10x1xf32> to vector<10x128xf32>
    %246 = arith.mulf %241, %245 : vector<10x128xf32>
    %247 = vector.broadcast %226 : vector<1x128xf32> to vector<10x128xf32>
    %248 = arith.mulf %246, %247 : vector<10x128xf32>
    %249 = vector.broadcast %228 : vector<1x128xf32> to vector<10x128xf32>
    %250 = arith.addf %248, %249 : vector<10x128xf32>
    %251 = arith.truncf %250 : vector<10x128xf32> to vector<10x128xbf16>
    %c0_92 = arith.constant 0 : index
    %c0_93 = arith.constant 0 : index
    %c0_94 = arith.constant 0 : index
    %252 = vector.load %arg15[%c0_92, %c0_93, %c0_94] : memref<1x128x512xbf16, #tpu.memory_space<vmem>>, vector<1x128x512xbf16>
    %253 = vector.shape_cast %252 : vector<1x128x512xbf16> to vector<128x512xbf16>
    %cst_95 = arith.constant dense<0.000000e+00> : vector<10x512xf32>
    %254 = tpu.matmul %251, %253, %cst_95 {dimension_numbers = #tpu.dot_dimension_numbers<[1], [0], [0], [1], [0, 0, 1, 1], [], []>} : vector<10x128xbf16>, vector<128x512xbf16>, vector<10x512xf32> -> vector<10x512xf32>
    %c0_96 = arith.constant 0 : index
    %c0_97 = arith.constant 0 : index
    %c0_98 = arith.constant 0 : index
    %255 = vector.load %arg16[%c0_96, %c0_97, %c0_98] : memref<1x1x512xf32, #tpu.memory_space<vmem>>, vector<1x1x512xf32>
    %256 = vector.shape_cast %255 : vector<1x1x512xf32> to vector<1x512xf32>
    %257 = vector.broadcast %256 : vector<1x512xf32> to vector<10x512xf32>
    %258 = arith.addf %254, %257 : vector<10x512xf32>
    %259 = arith.mulf %258, %258 : vector<10x512xf32>
    %260 = arith.mulf %258, %259 : vector<10x512xf32>
    %cst_99 = arith.constant 4.471500e-02 : f32
    %261 = vector.broadcast %cst_99 : f32 to vector<10x512xf32>
    %262 = arith.mulf %261, %260 : vector<10x512xf32>
    %263 = arith.addf %258, %262 : vector<10x512xf32>
    %cst_100 = arith.constant 0.797884583 : f32
    %264 = vector.broadcast %cst_100 : f32 to vector<10x512xf32>
    %265 = arith.mulf %264, %263 : vector<10x512xf32>
    %266 = math.tanh %265 : vector<10x512xf32>
    %cst_101 = arith.constant 1.000000e+00 : f32
    %267 = vector.broadcast %cst_101 : f32 to vector<10x512xf32>
    %268 = arith.addf %267, %266 : vector<10x512xf32>
    %cst_102 = arith.constant 5.000000e-01 : f32
    %269 = vector.broadcast %cst_102 : f32 to vector<10x512xf32>
    %270 = arith.mulf %269, %268 : vector<10x512xf32>
    %271 = arith.mulf %258, %270 : vector<10x512xf32>
    %272 = arith.truncf %271 : vector<10x512xf32> to vector<10x512xbf16>
    %c0_103 = arith.constant 0 : index
    %c0_104 = arith.constant 0 : index
    %c0_105 = arith.constant 0 : index
    %273 = vector.load %arg17[%c0_103, %c0_104, %c0_105] : memref<1x512x128xbf16, #tpu.memory_space<vmem>>, vector<1x512x128xbf16>
    %274 = vector.shape_cast %273 : vector<1x512x128xbf16> to vector<512x128xbf16>
    %cst_106 = arith.constant dense<0.000000e+00> : vector<10x128xf32>
    %275 = tpu.matmul %272, %274, %cst_106 {dimension_numbers = #tpu.dot_dimension_numbers<[1], [0], [0], [1], [0, 0, 1, 1], [], []>} : vector<10x512xbf16>, vector<512x128xbf16>, vector<10x128xf32> -> vector<10x128xf32>
    %c0_107 = arith.constant 0 : index
    %c0_108 = arith.constant 0 : index
    %c0_109 = arith.constant 0 : index
    %276 = vector.load %arg18[%c0_107, %c0_108, %c0_109] : memref<1x1x128xf32, #tpu.memory_space<vmem>>, vector<1x1x128xf32>
    %277 = vector.shape_cast %276 : vector<1x1x128xf32> to vector<1x128xf32>
    %278 = vector.broadcast %277 : vector<1x128xf32> to vector<10x128xf32>
    %279 = arith.addf %275, %278 : vector<10x128xf32>
    %280 = arith.addf %224, %279 : vector<10x128xf32>
    %c0_110 = arith.constant 0 : index
    %c0_111 = arith.constant 0 : index
    %c0_112 = arith.constant 0 : index
    %281 = vector.load %arg19[%c0_110, %c0_111, %c0_112] : memref<1x10x128xf32, #tpu.memory_space<vmem>>, vector<1x10x128xf32>
    %282 = vector.shape_cast %281 : vector<1x10x128xf32> to vector<10x128xf32>
    %283 = vector.shape_cast %280 : vector<10x128xf32> to vector<1x10x128xf32>
    tpu.vector_store %arg19[%c0_110, %c0_111, %c0_112], %283 {strides = array<i32>} : memref<1x10x128xf32, #tpu.memory_space<vmem>>, vector<1x10x128xf32>,
    return
  }
  func.func @transform_0(%arg0: i32, %arg1: i32) -> (i32, i32, i32) {
    %c0_i32 = arith.constant 0 : i32
    %c0_i32_0 = arith.constant 0 : i32
    %c0_i32_1 = arith.constant 0 : i32
    return %arg0, %c0_i32, %c0_i32_0 : i32, i32, i32
  }
  func.func @transform_1(%arg0: i32, %arg1: i32) -> (i32, i32) {
    %c0_i32 = arith.constant 0 : i32
    %c0_i32_0 = arith.constant 0 : i32
    %c0_i32_1 = arith.constant 0 : i32
    return %c0_i32, %c0_i32_0 : i32, i32
  }
  func.func @transform_2(%arg0: i32, %arg1: i32) -> (i32, i32) {
    %c0_i32 = arith.constant 0 : i32
    %c0_i32_0 = arith.constant 0 : i32
    %c0_i32_1 = arith.constant 0 : i32
    return %c0_i32, %c0_i32_0 : i32, i32
  }
  func.func @transform_3(%arg0: i32, %arg1: i32) -> (i32, i32) {
    %c0_i32 = arith.constant 0 : i32
    %c0_i32_0 = arith.constant 0 : i32
    %c0_i32_1 = arith.constant 0 : i32
    return %c0_i32, %c0_i32_0 : i32, i32
  }
  func.func @transform_4(%arg0: i32, %arg1: i32) -> (i32, i32) {
    %c0_i32 = arith.constant 0 : i32
    %c0_i32_0 = arith.constant 0 : i32
    %c0_i32_1 = arith.constant 0 : i32
    return %c0_i32, %c0_i32_0 : i32, i32
  }
  func.func @transform_5(%arg0: i32, %arg1: i32) -> (i32, i32, i32) {
    %c0_i32 = arith.constant 0 : i32
    %c0_i32_0 = arith.constant 0 : i32
    %c0_i32_1 = arith.constant 0 : i32
    return %arg1, %c0_i32, %c0_i32_0 : i32, i32, i32
  }
  func.func @transform_6(%arg0: i32, %arg1: i32) -> (i32, i32, i32) {
    %c0_i32 = arith.constant 0 : i32
    %c0_i32_0 = arith.constant 0 : i32
    %c0_i32_1 = arith.constant 0 : i32
    return %arg1, %c0_i32, %c0_i32_0 : i32, i32, i32
  }
  func.func @transform_7(%arg0: i32, %arg1: i32) -> (i32, i32, i32) {
    %c0_i32 = arith.constant 0 : i32
    %c0_i32_0 = arith.constant 0 : i32
    %c0_i32_1 = arith.constant 0 : i32
    return %arg1, %c0_i32, %c0_i32_0 : i32, i32, i32
  }
  func.func @transform_8(%arg0: i32, %arg1: i32) -> (i32, i32, i32) {
    %c0_i32 = arith.constant 0 : i32
    %c0_i32_0 = arith.constant 0 : i32
    %c0_i32_1 = arith.constant 0 : i32
    return %arg1, %c0_i32, %c0_i32_0 : i32, i32, i32
  }
  func.func @transform_9(%arg0: i32, %arg1: i32) -> (i32, i32, i32) {
    %c0_i32 = arith.constant 0 : i32
    %c0_i32_0 = arith.constant 0 : i32
    %c0_i32_1 = arith.constant 0 : i32
    return %arg1, %c0_i32, %c0_i32_0 : i32, i32, i32
  }
  func.func @transform_10(%arg0: i32, %arg1: i32) -> (i32, i32, i32) {
    %c0_i32 = arith.constant 0 : i32
    %c0_i32_0 = arith.constant 0 : i32
    %c0_i32_1 = arith.constant 0 : i32
    return %arg1, %c0_i32, %c0_i32_0 : i32, i32, i32
  }
  func.func @transform_11(%arg0: i32, %arg1: i32) -> (i32, i32, i32) {
    %c0_i32 = arith.constant 0 : i32
    %c0_i32_0 = arith.constant 0 : i32
    %c0_i32_1 = arith.constant 0 : i32
    return %arg1, %c0_i32, %c0_i32_0 : i32, i32, i32
  }
  func.func @transform_12(%arg0: i32, %arg1: i32) -> (i32, i32, i32) {
    %c0_i32 = arith.constant 0 : i32
    %c0_i32_0 = arith.constant 0 : i32
    %c0_i32_1 = arith.constant 0 : i32
    return %arg1, %c0_i32, %c0_i32_0 : i32, i32, i32
  }
  func.func @transform_13(%arg0: i32, %arg1: i32) -> (i32, i32, i32) {
    %c0_i32 = arith.constant 0 : i32
    %c0_i32_0 = arith.constant 0 : i32
    %c0_i32_1 = arith.constant 0 : i32
    return %arg1, %c0_i32, %c0_i32_0 : i32, i32, i32
  }
  func.func @transform_14(%arg0: i32, %arg1: i32) -> (i32, i32, i32) {
    %c0_i32 = arith.constant 0 : i32
    %c0_i32_0 = arith.constant 0 : i32
    %c0_i32_1 = arith.constant 0 : i32
    return %arg1, %c0_i32, %c0_i32_0 : i32, i32, i32
  }
  func.func @transform_15(%arg0: i32, %arg1: i32) -> (i32, i32, i32) {
    %c0_i32 = arith.constant 0 : i32
    %c0_i32_0 = arith.constant 0 : i32
    %c0_i32_1 = arith.constant 0 : i32
    return %arg1, %c0_i32, %c0_i32_0 : i32, i32, i32
  }
  func.func @transform_16(%arg0: i32, %arg1: i32) -> (i32, i32, i32) {
    %c0_i32 = arith.constant 0 : i32
    %c0_i32_0 = arith.constant 0 : i32
    %c0_i32_1 = arith.constant 0 : i32
    return %arg1, %c0_i32, %c0_i32_0 : i32, i32, i32
  }
  func.func @transform_17(%arg0: i32, %arg1: i32) -> (i32, i32, i32) {
    %c0_i32 = arith.constant 0 : i32
    %c0_i32_0 = arith.constant 0 : i32
    %c0_i32_1 = arith.constant 0 : i32
    return %arg0, %c0_i32, %c0_i32_0 : i32, i32, i32
  }
}

module attributes {stable_mosaic.version = 11 : i64} {
  func.func @_mse_mmd_loss_kernel(%arg0: memref<10x128xf32, #tpu.memory_space<vmem>>, %arg1: memref<10x128xf32, #tpu.memory_space<vmem>>, %arg2: memref<1x1xf32, #tpu.memory_space<vmem>>) attributes {dimension_semantics = [], scalar_prefetch = 0 : i64, scratch_operands = 0 : i64, tpu.core_type = #tpu.core_type<tc>} {
    %c0 = arith.constant 0 : index
    %c0_0 = arith.constant 0 : index
    %0 = vector.load %arg0[%c0, %c0_0] : memref<10x128xf32, #tpu.memory_space<vmem>>, vector<10x128xf32>
    %c0_1 = arith.constant 0 : index
    %c0_2 = arith.constant 0 : index
    %1 = vector.load %arg1[%c0_1, %c0_2] : memref<10x128xf32, #tpu.memory_space<vmem>>, vector<10x128xf32>
    %2 = arith.subf %0, %1 : vector<10x128xf32>
    %3 = arith.mulf %2, %2 : vector<10x128xf32>
    %4 = vector.shape_cast %3 : vector<10x128xf32> to vector<1x10x128xf32>
    %cst = arith.constant dense<0.000000e+00> : vector<1xf32>
    %5 = vector.multi_reduction <add>, %4, %cst [1, 2] : vector<1x10x128xf32> to vector<1xf32>
    %6 = vector.shape_cast %5 : vector<1xf32> to vector<1x1x1xf32>
    %7 = vector.extract %6[0, 0, 0] : f32 from vector<1x1x1xf32>
    %8 = vector.extract_strided_slice %2 {offsets = [0, 0], sizes = [5, 128], strides = [1, 1]} : vector<10x128xf32> to vector<5x128xf32>
    %9 = vector.extract_strided_slice %2 {offsets = [5, 0], sizes = [5, 128], strides = [1, 1]} : vector<10x128xf32> to vector<5x128xf32>
    %10 = arith.addf %8, %9 : vector<5x128xf32>
    %cst_3 = arith.constant 5.000000e-01 : f32
    %11 = vector.broadcast %cst_3 : f32 to vector<5x128xf32>
    %12 = arith.mulf %10, %11 : vector<5x128xf32>
    %13 = arith.mulf %12, %12 : vector<5x128xf32>
    %14 = vector.shape_cast %13 : vector<5x128xf32> to vector<1x5x128xf32>
    %cst_4 = arith.constant dense<0.000000e+00> : vector<1xf32>
    %15 = vector.multi_reduction <add>, %14, %cst_4 [1, 2] : vector<1x5x128xf32> to vector<1xf32>
    %16 = vector.shape_cast %15 : vector<1xf32> to vector<1x1x1xf32>
    %17 = vector.extract %16[0, 0, 0] : f32 from vector<1x1x1xf32>
    %cst_5 = arith.constant 0.000000e+00 : f32
    %18 = arith.cmpf ogt, %17, %cst_5 : f32
    %cst_6 = arith.constant 1.000000e+00 : f32
    %19 = arith.select %18, %17, %cst_6 : f32
    %cst_7 = arith.constant 0.000000e+00 : f32
    %20 = arith.cmpf ogt, %17, %cst_7 : f32
    %21 = math.sqrt %19 : f32
    %cst_8 = arith.constant 0.000000e+00 : f32
    %22 = arith.select %20, %21, %cst_8 : f32
    %cst_9 = arith.constant 7.812500e-04 : f32
    %23 = arith.mulf %7, %cst_9 : f32
    %cst_10 = arith.constant 1.000000e+00 : f32
    %24 = arith.mulf %cst_10, %22 : f32
    %25 = arith.addf %23, %24 : f32
    %26 = vector.broadcast %25 : f32 to vector<1x1xf32>
    %c0_11 = arith.constant 0 : index
    %c0_12 = arith.constant 0 : index
    %27 = vector.load %arg2[%c0_11, %c0_12] : memref<1x1xf32, #tpu.memory_space<vmem>>, vector<1x1xf32>
    tpu.vector_store %arg2[%c0_11, %c0_12], %26 {strides = array<i32>} : memref<1x1xf32, #tpu.memory_space<vmem>>, vector<1x1xf32>,
    return
  }
}

</mosaic_0001>

<llo_original>
// kernel: vit_mmd_feature_loss.3
$region0: #{vit_mmd_feature_loss.3}
  #allocation0 [shape = 'u32[]', space=smem, size = 0x4, offset = 0x4, fixed_abs, tag = 'smem constant byte address 0x4 - core index']
  #allocation1 [shape = 'u32[72,128]{1,0:T(1,128)}', space=vmem, size = 0x9000, scoped, tag = 'internal scratch']
  %s0 = inlined_call_operand.vmem [shape: f32[10,128], index: 0, kind: input, shape index: {}]
  %s1 = inlined_call_operand.vmem [shape: f32[10,128], index: 1, kind: input, shape index: {}]
  %s2 = inlined_call_operand.hbm [shape: f32[1,1], index: 2, kind: output, shape index: {}]
  %s3 = sld [smem:[#allocation0]]
  $region18: #{vit_mmd_feature_loss.3} parent=0
    _
  %s5 = ssub.s32 1, %s3
  %s6 = scalar_select 0, %s5, %s3
  $region1: #{vit_mmd_feature_loss.3} parent=0
    #allocation2 [shape = 'u8[512]{0}', space=vmem, size = 0x400, scoped, tag = 'output window, operand 0, single buffered']
    #allocation3 [shape = 's32[1]{0}', space=sflag, size = 0x4, scoped, tag = 'scoped memory for vit_mmd_feature_loss.3']
    %7 = vsyncpa [#allocation3], 0
    // Predicated region
    $region2: #{vit_mmd_feature_loss.3} parent=1 // pred_check
      _
    $region3: #{vit_mmd_feature_loss.3} parent=1 // pred_check_branch
      %9 = sbr.rel (0) target = $region5
    $region4: #{vit_mmd_feature_loss.3} parent=1 // pred_region
      _
    $region5: #{vit_mmd_feature_loss.3} parent=1 // pred_fallthru
      _
    // Predicated region
    $region6: #{vit_mmd_feature_loss.3} parent=1 // pred_check
      _
    $region7: #{vit_mmd_feature_loss.3} parent=1 // pred_check_branch
      %11 = sbr.rel (0) target = $region9
    $region8: #{vit_mmd_feature_loss.3} parent=1 // pred_region
      _
    $region9: #{vit_mmd_feature_loss.3} parent=1 // pred_fallthru
      _
    %v12 = vld [vmem:[%s0] sm:$0xff]
    %v13 = vld [vmem:[%s0 + $0x8] sm:$0x3]
    %v14 = vld [vmem:[%s1] sm:$0xff]
    %v15 = vld [vmem:[%s1 + $0x8] sm:$0x3]
    %v16 = vsub.f32 %v12, %v14
    %v17 = vsub.f32 %v13, %v15
    %v18 = vmul.f32 %v16, %v16
    %v19 = vmul.f32 %v17, %v17
    %vm20 = vcmask 1041408
    %v21 = vsel %vm20, %v19, 0.0
    %v22 = vadd.f32 %v18, %v21
    %23 = vadd.xlane.f32.xlu0 %v22
    %v24 = vpop.xlane.xlu0 %23
    %v25 = vrot.slane %v24, 4
    %v26 = vadd.f32 %v24, %v25
    %v27 = vrot.slane %v26, 2
    %v28 = vadd.f32 %v26, %v27
    %v29 = vrot.slane %v28, 1
    %v30 = vadd.f32 %v28, %v29
    %s31 = vtos %v30
    %vm34 = vcmask 1042432
    %v35 = vrot.slane %v16, 5
    %v36 = vrot.slane %v17, 5
    %v37 = vsel %vm34, %v35, %v36
    %v39 = vadd.f32 %v16, %v37
    %v40 = vmul.f32 %v39, 0.5
    %v41 = vmul.f32 %v40, %v40
    %vm42 = vcmask 1044480
    %v43 = vsel %vm42, %v41, 0.0
    %44 = vadd.xlane.f32.xlu0 %v43
    %v45 = vpop.xlane.xlu0 %44
    %v46 = vrot.slane %v45, 4
    %v47 = vadd.f32 %v45, %v46
    %v48 = vrot.slane %v47, 2
    %v49 = vadd.f32 %v47, %v48
    %v50 = vrot.slane %v49, 1
    %v51 = vadd.f32 %v49, %v50
    %s52 = vtos %v51
    %p53 = scmp.gt.f32.partialorder %s52, 0.0
    %s54 = scalar_select %p53, %s52, 1.0
    %v55 = vstv %s54
    %v56 = vrsqrt.pop %v55
    %v57 = vmul.f32 %v56, %v55
    %v58 = vmul.f32 %v57, %v56
    %v59 = vmul.f32 0.5, %v58
    %v60 = vsub.f32 1.5, %v59
    %v61 = vmul.f32 %v56, %v60
    %v62 = vmul.f32 %v55, %v61
    %vm63 = vcmp.eq.f32.partialorder %v55, inf
    %v64 = vsel %vm63, %v55, %v62
    %vm65 = vcmp.eq.f32.partialorder %v55, 0.0
    %v66 = vand.u32 %v55, 2147483648
    %v67 = vsel %vm65, %v66, %v64
    %s68 = vtos %v67
    %s69 = scalar_select %p53, %s68, 0.0
    %s70 = smul.f32 %s31, 0.00078125
    %s71 = sadd.f32 %s70, %s69
    %v72 = vstv %s71
    %vm73 = vcmask 0
    %74 = vst.msk [vmem:[#allocation2] sm:$0x1] %vm73, %v72
    // Predicated region
    $region10: #{vit_mmd_feature_loss.3} parent=1 // pred_check
      _
    $region11: #{vit_mmd_feature_loss.3} parent=1 // pred_check_branch
      %76 = sbr.rel (0) target = $region13
    $region12: #{vit_mmd_feature_loss.3} parent=1 // pred_region
      %78 = vsyncadd [#allocation3], 0
      %s80 = sshll.u32 [#allocation2], 4
      %s81 = int_to_ptr.vmem [resolvable:$true] %s80
      %s82 = sshll.u32 %s2, 4
      %s83 = int_to_ptr.hbm [resolvable:$true] %s82
      %85 = dma.vmem_to_hbm [thread:$0]  %s81, 16, %s83, [#allocation3]
    $region13: #{vit_mmd_feature_loss.3} parent=1 // pred_fallthru
      _
    // Predicated region
    $region14: #{vit_mmd_feature_loss.3} parent=1 // pred_check
      _
    $region15: #{vit_mmd_feature_loss.3} parent=1 // pred_check_branch
      %87 = sbr.rel (0) target = $region17
    $region16: #{vit_mmd_feature_loss.3} parent=1 // pred_region
      %89 = dma.done [#allocation3], 16
    $region17: #{vit_mmd_feature_loss.3} parent=1 // pred_fallthru
      _
    %90 = vsyncpa [#allocation3], 1

// kernel: vit_mmd_feature_loss.2
$region0: #{vit_mmd_feature_loss.2}
  #allocation0 [shape = 'u32[]', space=smem, size = 0x4, offset = 0x4, fixed_abs, tag = 'smem constant byte address 0x4 - core index']
  #allocation1 [shape = 'u32[72,128]{1,0:T(1,128)}', space=vmem, size = 0x9000, scoped, tag = 'internal scratch']
  #allocation2 [shape = 'f32[10,128]{1,0:T(8,128)}', space=vmem, size = 0x2000, scoped, tag = 'scratch operand']
  %s0 = inlined_call_operand.vmem [shape: f32[2,8,192], index: 0, kind: input, shape index: {}]
  %s1 = inlined_call_operand.vmem [shape: f32[1,128], index: 1, kind: input, shape index: {}]
  %s2 = inlined_call_operand.vmem [shape: f32[8,128], index: 2, kind: input, shape index: {}]
  %s3 = inlined_call_operand.vmem [shape: bf16[192,128], index: 3, kind: input, shape index: {}]
  %s4 = inlined_call_operand.vmem [shape: f32[1,128], index: 4, kind: input, shape index: {}]
  %s5 = inlined_call_operand.vmem [shape: f32[2,1,128], index: 5, kind: input, shape index: {}]
  %s6 = inlined_call_operand.vmem [shape: f32[2,1,128], index: 6, kind: input, shape index: {}]
  %s7 = inlined_call_operand.vmem [shape: bf16[2,128,384], index: 7, kind: input, shape index: {}]
  %s8 = inlined_call_operand.vmem [shape: f32[2,1,384], index: 8, kind: input, shape index: {}]
  %s9 = inlined_call_operand.vmem [shape: bf16[2,128,128], index: 9, kind: input, shape index: {}]
  %s10 = inlined_call_operand.vmem [shape: f32[2,1,128], index: 10, kind: input, shape index: {}]
  %s11 = inlined_call_operand.vmem [shape: f32[2,1,128], index: 11, kind: input, shape index: {}]
  %s12 = inlined_call_operand.vmem [shape: f32[2,1,128], index: 12, kind: input, shape index: {}]
  %s13 = inlined_call_operand.vmem [shape: bf16[2,128,512], index: 13, kind: input, shape index: {}]
  %s14 = inlined_call_operand.vmem [shape: f32[2,1,512], index: 14, kind: input, shape index: {}]
  %s15 = inlined_call_operand.vmem [shape: bf16[2,512,128], index: 15, kind: input, shape index: {}]
  %s16 = inlined_call_operand.vmem [shape: f32[2,1,128], index: 16, kind: input, shape index: {}]
  %s17 = inlined_call_operand.vmem [shape: f32[2,10,128], index: 17, kind: output, shape index: {}]
  %s18 = sld [smem:[#allocation0]]
  $region105: #{vit_mmd_feature_loss.2} parent=0
    _
  %s20 = ssub.s32 1, %s18
  %s21 = scalar_select 0, %s20, %s18
  loop: start=0, step=1, limit=6
  $region2: #{vit_mmd_feature_loss.2} parent=0 // loop_pre_header
    _
  $region3: #{vit_mmd_feature_loss.2} parent=0 // loop_header
    %s23 = sphi 0, %s27
    %p24 = scmp.ge.s32.totalorder %s23, 6
    %s30 = sphi 0, %s42
    %s31 = sphi 0, %s38
    %s32 = sphi 0, %s30
    %s33 = sphi 0, %s31
    %s34 = sphi 0, %s32
    %s35 = sphi 0, %s33
    %s45 = sphi 0, %s47
    %s48 = sphi 0, %s45
    %s49 = sphi 0, %s48
    %s65 = sphi 0, %s49
    %s69 = sphi 0, %s69
    %s71 = sphi 0, %s69
    %s72 = sphi 0, %s71
    %s86 = sphi 0, %s72
    %s90 = sphi 0, %s90
    %s92 = sphi 0, %s90
    %s93 = sphi 0, %s92
    %s107 = sphi 0, %s93
    %s111 = sphi 0, %s111
    %s113 = sphi 0, %s111
    %s114 = sphi 0, %s113
    %s128 = sphi 0, %s114
    %s132 = sphi 0, %s132
    %s134 = sphi 0, %s132
    %s135 = sphi 0, %s134
    %s149 = sphi 0, %s135
    %s155 = sphi 0, %s157
    %s158 = sphi 0, %s155
    %s159 = sphi 0, %s158
    %s175 = sphi 0, %s159
    %s181 = sphi 0, %s183
    %s184 = sphi 0, %s181
    %s185 = sphi 0, %s184
    %s201 = sphi 0, %s185
    %s207 = sphi 0, %s209
    %s210 = sphi 0, %s207
    %s211 = sphi 0, %s210
    %s227 = sphi 0, %s211
    %s233 = sphi 0, %s235
    %s236 = sphi 0, %s233
    %s237 = sphi 0, %s236
    %s253 = sphi 0, %s237
    %s259 = sphi 0, %s261
    %s262 = sphi 0, %s259
    %s263 = sphi 0, %s262
    %s279 = sphi 0, %s263
    %s285 = sphi 0, %s287
    %s288 = sphi 0, %s285
    %s289 = sphi 0, %s288
    %s305 = sphi 0, %s289
    %s311 = sphi 0, %s313
    %s314 = sphi 0, %s311
    %s315 = sphi 0, %s314
    %s331 = sphi 0, %s315
    %s337 = sphi 0, %s339
    %s340 = sphi 0, %s337
    %s341 = sphi 0, %s340
    %s357 = sphi 0, %s341
    %s363 = sphi 0, %s365
    %s366 = sphi 0, %s363
    %s367 = sphi 0, %s366
    %s383 = sphi 0, %s367
    %s389 = sphi 0, %s391
    %s392 = sphi 0, %s389
    %s393 = sphi 0, %s392
    %s409 = sphi 0, %s393
    %s415 = sphi 0, %s417
    %s418 = sphi 0, %s415
    %s419 = sphi 0, %s418
    %s435 = sphi 0, %s419
    %s441 = sphi 0, %s443
    %s444 = sphi 0, %s441
    %s445 = sphi 0, %s444
    %s461 = sphi 0, %s445
    %s467 = sphi 0, %s469
    %s470 = sphi 0, %s467
    %s471 = sphi 0, %s470
    %s487 = sphi 0, %s471
  $region4: #{vit_mmd_feature_loss.2} parent=0 // loop_header_branch
    %26 = sbr.rel (%p24) target = $region8
  $region5: #{vit_mmd_feature_loss.2} parent=0 // loop_body
    %s28 = ssub.s32 %s23, 1
    %s29 = ssub.s32 %s23, 2
    %s36 = sadd.s32 1, %s31
    %p37 = scmp.ge.s32.totalorder %s36, 2
    %s38 = scalar_select %p37, 0, %s36
    %s39 = sadd.s32 1, %s30
    %s40 = scalar_select %p37, %s39, %s30
    %p41 = scmp.ge.s32.totalorder %s40, 2
    %s42 = scalar_select %p41, 0, %s40
    %s43 = ssub.s32 %s30, %s42
    %p44 = scmp.eq.s32.totalorder %s43, 0
    %s46 = sadd.s32 %s45, 1
    %s47 = scalar_select %p44, %s45, %s46
    %p50 = pneg %p44
    %p51 = scmp.eq.s32.totalorder %s23, 3
    %p52 = por %p50, %p51
    %p53 = scmp.ne.s32.totalorder %s45, %s48
    %p54 = scmp.eq.s32.totalorder %s23, 0
    %p55 = por %p53, %p54
    %p56 = scmp.ne.s32.totalorder %s45, %s48
    %p57 = scmp.eq.s32.totalorder %s28, 3
    %p58 = por %p56, %p57
    %p59 = scmp.ne.s32.totalorder %s48, %s49
    %p60 = scmp.eq.s32.totalorder %s28, 0
    %p61 = por %p59, %p60
    %p62 = scmp.ne.s32.totalorder %s48, %s49
    %p63 = scmp.eq.s32.totalorder %s29, 3
    %p64 = por %p62, %p63
    %p66 = scmp.ne.s32.totalorder %s49, %s65
    %p67 = scmp.eq.s32.totalorder %s29, 0
    %p68 = por %p66, %p67
    %s70 = sadd.s32 %s69, 1
    %p73 = scmp.eq.s32.totalorder %s23, 3
    %p74 = scmp.ne.s32.totalorder %s69, %s71
    %p75 = scmp.eq.s32.totalorder %s23, 0
    %p76 = por %p74, %p75
    %p77 = scmp.ne.s32.totalorder %s69, %s71
    %p78 = scmp.eq.s32.totalorder %s28, 3
    %p79 = por %p77, %p78
    %p80 = scmp.ne.s32.totalorder %s71, %s72
    %p81 = scmp.eq.s32.totalorder %s28, 0
    %p82 = por %p80, %p81
    %p83 = scmp.ne.s32.totalorder %s71, %s72
    %p84 = scmp.eq.s32.totalorder %s29, 3
    %p85 = por %p83, %p84
    %p87 = scmp.ne.s32.totalorder %s72, %s86
    %p88 = scmp.eq.s32.totalorder %s29, 0
    %p89 = por %p87, %p88
    %s91 = sadd.s32 %s90, 1
    %p94 = scmp.eq.s32.totalorder %s23, 3
    %p95 = scmp.ne.s32.totalorder %s90, %s92
    %p96 = scmp.eq.s32.totalorder %s23, 0
    %p97 = por %p95, %p96
    %p98 = scmp.ne.s32.totalorder %s90, %s92
    %p99 = scmp.eq.s32.totalorder %s28, 3
    %p100 = por %p98, %p99
    %p101 = scmp.ne.s32.totalorder %s92, %s93
    %p102 = scmp.eq.s32.totalorder %s28, 0
    %p103 = por %p101, %p102
    %p104 = scmp.ne.s32.totalorder %s92, %s93
    %p105 = scmp.eq.s32.totalorder %s29, 3
    %p106 = por %p104, %p105
    %p108 = scmp.ne.s32.totalorder %s93, %s107
    %p109 = scmp.eq.s32.totalorder %s29, 0
    %p110 = por %p108, %p109
    %s112 = sadd.s32 %s111, 1
    %p115 = scmp.eq.s32.totalorder %s23, 3
    %p116 = scmp.ne.s32.totalorder %s111, %s113
    %p117 = scmp.eq.s32.totalorder %s23, 0
    %p118 = por %p116, %p117
    %p119 = scmp.ne.s32.totalorder %s111, %s113
    %p120 = scmp.eq.s32.totalorder %s28, 3
    %p121 = por %p119, %p120
    %p122 = scmp.ne.s32.totalorder %s113, %s114
    %p123 = scmp.eq.s32.totalorder %s28, 0
    %p124 = por %p122, %p123
    %p125 = scmp.ne.s32.totalorder %s113, %s114
    %p126 = scmp.eq.s32.totalorder %s29, 3
    %p127 = por %p125, %p126
    %p129 = scmp.ne.s32.totalorder %s114, %s128
    %p130 = scmp.eq.s32.totalorder %s29, 0
    %p131 = por %p129, %p130
    %s133 = sadd.s32 %s132, 1
    %p136 = scmp.eq.s32.totalorder %s23, 3
    %p137 = scmp.ne.s32.totalorder %s132, %s134
    %p138 = scmp.eq.s32.totalorder %s23, 0
    %p139 = por %p137, %p138
    %p140 = scmp.ne.s32.totalorder %s132, %s134
    %p141 = scmp.eq.s32.totalorder %s28, 3
    %p142 = por %p140, %p141
    %p143 = scmp.ne.s32.totalorder %s134, %s135
    %p144 = scmp.eq.s32.totalorder %s28, 0
    %p145 = por %p143, %p144
    %p146 = scmp.ne.s32.totalorder %s134, %s135
    %p147 = scmp.eq.s32.totalorder %s29, 3
    %p148 = por %p146, %p147
    %p150 = scmp.ne.s32.totalorder %s135, %s149
    %p151 = scmp.eq.s32.totalorder %s29, 0
    %p152 = por %p150, %p151
    %s153 = ssub.s32 %s31, %s38
    %p154 = scmp.eq.s32.totalorder %s153, 0
    %s156 = sadd.s32 %s155, 1
    %s157 = scalar_select %p154, %s155, %s156
    %p160 = pneg %p154
    %p161 = scmp.eq.s32.totalorder %s23, 3
    %p162 = por %p160, %p161
    %p163 = scmp.ne.s32.totalorder %s155, %s158
    %p164 = scmp.eq.s32.totalorder %s23, 0
    %p165 = por %p163, %p164
    %p166 = scmp.ne.s32.totalorder %s155, %s158
    %p167 = scmp.eq.s32.totalorder %s28, 3
    %p168 = por %p166, %p167
    %p169 = scmp.ne.s32.totalorder %s158, %s159
    %p170 = scmp.eq.s32.totalorder %s28, 0
    %p171 = por %p169, %p170
    %p172 = scmp.ne.s32.totalorder %s158, %s159
    %p173 = scmp.eq.s32.totalorder %s29, 3
    %p174 = por %p172, %p173
    %p176 = scmp.ne.s32.totalorder %s159, %s175
    %p177 = scmp.eq.s32.totalorder %s29, 0
    %p178 = por %p176, %p177
    %s179 = ssub.s32 %s31, %s38
    %p180 = scmp.eq.s32.totalorder %s179, 0
    %s182 = sadd.s32 %s181, 1
    %s183 = scalar_select %p180, %s181, %s182
    %p186 = pneg %p180
    %p187 = scmp.eq.s32.totalorder %s23, 3
    %p188 = por %p186, %p187
    %p189 = scmp.ne.s32.totalorder %s181, %s184
    %p190 = scmp.eq.s32.totalorder %s23, 0
    %p191 = por %p189, %p190
    %p192 = scmp.ne.s32.totalorder %s181, %s184
    %p193 = scmp.eq.s32.totalorder %s28, 3
    %p194 = por %p192, %p193
    %p195 = scmp.ne.s32.totalorder %s184, %s185
    %p196 = scmp.eq.s32.totalorder %s28, 0
    %p197 = por %p195, %p196
    %p198 = scmp.ne.s32.totalorder %s184, %s185
    %p199 = scmp.eq.s32.totalorder %s29, 3
    %p200 = por %p198, %p199
    %p202 = scmp.ne.s32.totalorder %s185, %s201
    %p203 = scmp.eq.s32.totalorder %s29, 0
    %p204 = por %p202, %p203
    %s205 = ssub.s32 %s31, %s38
    %p206 = scmp.eq.s32.totalorder %s205, 0
    %s208 = sadd.s32 %s207, 1
    %s209 = scalar_select %p206, %s207, %s208
    %p212 = pneg %p206
    %p213 = scmp.eq.s32.totalorder %s23, 3
    %p214 = por %p212, %p213
    %p215 = scmp.ne.s32.totalorder %s207, %s210
    %p216 = scmp.eq.s32.totalorder %s23, 0
    %p217 = por %p215, %p216
    %p218 = scmp.ne.s32.totalorder %s207, %s210
    %p219 = scmp.eq.s32.totalorder %s28, 3
    %p220 = por %p218, %p219
    %p221 = scmp.ne.s32.totalorder %s210, %s211
    %p222 = scmp.eq.s32.totalorder %s28, 0
    %p223 = por %p221, %p222
    %p224 = scmp.ne.s32.totalorder %s210, %s211
    %p225 = scmp.eq.s32.totalorder %s29, 3
    %p226 = por %p224, %p225
    %p228 = scmp.ne.s32.totalorder %s211, %s227
    %p229 = scmp.eq.s32.totalorder %s29, 0
    %p230 = por %p228, %p229
    %s231 = ssub.s32 %s31, %s38
    %p232 = scmp.eq.s32.totalorder %s231, 0
    %s234 = sadd.s32 %s233, 1
    %s235 = scalar_select %p232, %s233, %s234
    %p238 = pneg %p232
    %p239 = scmp.eq.s32.totalorder %s23, 3
    %p240 = por %p238, %p239
    %p241 = scmp.ne.s32.totalorder %s233, %s236
    %p242 = scmp.eq.s32.totalorder %s23, 0
    %p243 = por %p241, %p242
    %p244 = scmp.ne.s32.totalorder %s233, %s236
    %p245 = scmp.eq.s32.totalorder %s28, 3
    %p246 = por %p244, %p245
    %p247 = scmp.ne.s32.totalorder %s236, %s237
    %p248 = scmp.eq.s32.totalorder %s28, 0
    %p249 = por %p247, %p248
    %p250 = scmp.ne.s32.totalorder %s236, %s237
    %p251 = scmp.eq.s32.totalorder %s29, 3
    %p252 = por %p250, %p251
    %p254 = scmp.ne.s32.totalorder %s237, %s253
    %p255 = scmp.eq.s32.totalorder %s29, 0
    %p256 = por %p254, %p255
    %s257 = ssub.s32 %s31, %s38
    %p258 = scmp.eq.s32.totalorder %s257, 0
    %s260 = sadd.s32 %s259, 1
    %s261 = scalar_select %p258, %s259, %s260
    %p264 = pneg %p258
    %p265 = scmp.eq.s32.totalorder %s23, 3
    %p266 = por %p264, %p265
    %p267 = scmp.ne.s32.totalorder %s259, %s262
    %p268 = scmp.eq.s32.totalorder %s23, 0
    %p269 = por %p267, %p268
    %p270 = scmp.ne.s32.totalorder %s259, %s262
    %p271 = scmp.eq.s32.totalorder %s28, 3
    %p272 = por %p270, %p271
    %p273 = scmp.ne.s32.totalorder %s262, %s263
    %p274 = scmp.eq.s32.totalorder %s28, 0
    %p275 = por %p273, %p274
    %p276 = scmp.ne.s32.totalorder %s262, %s263
    %p277 = scmp.eq.s32.totalorder %s29, 3
    %p278 = por %p276, %p277
    %p280 = scmp.ne.s32.totalorder %s263, %s279
    %p281 = scmp.eq.s32.totalorder %s29, 0
    %p282 = por %p280, %p281
    %s283 = ssub.s32 %s31, %s38
    %p284 = scmp.eq.s32.totalorder %s283, 0
    %s286 = sadd.s32 %s285, 1
    %s287 = scalar_select %p284, %s285, %s286
    %p290 = pneg %p284
    %p291 = scmp.eq.s32.totalorder %s23, 3
    %p292 = por %p290, %p291
    %p293 = scmp.ne.s32.totalorder %s285, %s288
    %p294 = scmp.eq.s32.totalorder %s23, 0
    %p295 = por %p293, %p294
    %p296 = scmp.ne.s32.totalorder %s285, %s288
    %p297 = scmp.eq.s32.totalorder %s28, 3
    %p298 = por %p296, %p297
    %p299 = scmp.ne.s32.totalorder %s288, %s289
    %p300 = scmp.eq.s32.totalorder %s28, 0
    %p301 = por %p299, %p300
    %p302 = scmp.ne.s32.totalorder %s288, %s289
    %p303 = scmp.eq.s32.totalorder %s29, 3
    %p304 = por %p302, %p303
    %p306 = scmp.ne.s32.totalorder %s289, %s305
    %p307 = scmp.eq.s32.totalorder %s29, 0
    %p308 = por %p306, %p307
    %s309 = ssub.s32 %s31, %s38
    %p310 = scmp.eq.s32.totalorder %s309, 0
    %s312 = sadd.s32 %s311, 1
    %s313 = scalar_select %p310, %s311, %s312
    %p316 = pneg %p310
    %p317 = scmp.eq.s32.totalorder %s23, 3
    %p318 = por %p316, %p317
    %p319 = scmp.ne.s32.totalorder %s311, %s314
    %p320 = scmp.eq.s32.totalorder %s23, 0
    %p321 = por %p319, %p320
    %p322 = scmp.ne.s32.totalorder %s311, %s314
    %p323 = scmp.eq.s32.totalorder %s28, 3
    %p324 = por %p322, %p323
    %p325 = scmp.ne.s32.totalorder %s314, %s315
    %p326 = scmp.eq.s32.totalorder %s28, 0
    %p327 = por %p325, %p326
    %p328 = scmp.ne.s32.totalorder %s314, %s315
    %p329 = scmp.eq.s32.totalorder %s29, 3
    %p330 = por %p328, %p329
    %p332 = scmp.ne.s32.totalorder %s315, %s331
    %p333 = scmp.eq.s32.totalorder %s29, 0
    %p334 = por %p332, %p333
    %s335 = ssub.s32 %s31, %s38
    %p336 = scmp.eq.s32.totalorder %s335, 0
    %s338 = sadd.s32 %s337, 1
    %s339 = scalar_select %p336, %s337, %s338
    %p342 = pneg %p336
    %p343 = scmp.eq.s32.totalorder %s23, 3
    %p344 = por %p342, %p343
    %p345 = scmp.ne.s32.totalorder %s337, %s340
    %p346 = scmp.eq.s32.totalorder %s23, 0
    %p347 = por %p345, %p346
    %p348 = scmp.ne.s32.totalorder %s337, %s340
    %p349 = scmp.eq.s32.totalorder %s28, 3
    %p350 = por %p348, %p349
    %p351 = scmp.ne.s32.totalorder %s340, %s341
    %p352 = scmp.eq.s32.totalorder %s28, 0
    %p353 = por %p351, %p352
    %p354 = scmp.ne.s32.totalorder %s340, %s341
    %p355 = scmp.eq.s32.totalorder %s29, 3
    %p356 = por %p354, %p355
    %p358 = scmp.ne.s32.totalorder %s341, %s357
    %p359 = scmp.eq.s32.totalorder %s29, 0
    %p360 = por %p358, %p359
    %s361 = ssub.s32 %s31, %s38
    %p362 = scmp.eq.s32.totalorder %s361, 0
    %s364 = sadd.s32 %s363, 1
    %s365 = scalar_select %p362, %s363, %s364
    %p368 = pneg %p362
    %p369 = scmp.eq.s32.totalorder %s23, 3
    %p370 = por %p368, %p369
    %p371 = scmp.ne.s32.totalorder %s363, %s366
    %p372 = scmp.eq.s32.totalorder %s23, 0
    %p373 = por %p371, %p372
    %p374 = scmp.ne.s32.totalorder %s363, %s366
    %p375 = scmp.eq.s32.totalorder %s28, 3
    %p376 = por %p374, %p375
    %p377 = scmp.ne.s32.totalorder %s366, %s367
    %p378 = scmp.eq.s32.totalorder %s28, 0
    %p379 = por %p377, %p378
    %p380 = scmp.ne.s32.totalorder %s366, %s367
    %p381 = scmp.eq.s32.totalorder %s29, 3
    %p382 = por %p380, %p381
    %p384 = scmp.ne.s32.totalorder %s367, %s383
    %p385 = scmp.eq.s32.totalorder %s29, 0
    %p386 = por %p384, %p385
    %s387 = ssub.s32 %s31, %s38
    %p388 = scmp.eq.s32.totalorder %s387, 0
    %s390 = sadd.s32 %s389, 1
    %s391 = scalar_select %p388, %s389, %s390
    %p394 = pneg %p388
    %p395 = scmp.eq.s32.totalorder %s23, 3
    %p396 = por %p394, %p395
    %p397 = scmp.ne.s32.totalorder %s389, %s392
    %p398 = scmp.eq.s32.totalorder %s23, 0
    %p399 = por %p397, %p398
    %p400 = scmp.ne.s32.totalorder %s389, %s392
    %p401 = scmp.eq.s32.totalorder %s28, 3
    %p402 = por %p400, %p401
    %p403 = scmp.ne.s32.totalorder %s392, %s393
    %p404 = scmp.eq.s32.totalorder %s28, 0
    %p405 = por %p403, %p404
    %p406 = scmp.ne.s32.totalorder %s392, %s393
    %p407 = scmp.eq.s32.totalorder %s29, 3
    %p408 = por %p406, %p407
    %p410 = scmp.ne.s32.totalorder %s393, %s409
    %p411 = scmp.eq.s32.totalorder %s29, 0
    %p412 = por %p410, %p411
    %s413 = ssub.s32 %s31, %s38
    %p414 = scmp.eq.s32.totalorder %s413, 0
    %s416 = sadd.s32 %s415, 1
    %s417 = scalar_select %p414, %s415, %s416
    %p420 = pneg %p414
    %p421 = scmp.eq.s32.totalorder %s23, 3
    %p422 = por %p420, %p421
    %p423 = scmp.ne.s32.totalorder %s415, %s418
    %p424 = scmp.eq.s32.totalorder %s23, 0
    %p425 = por %p423, %p424
    %p426 = scmp.ne.s32.totalorder %s415, %s418
    %p427 = scmp.eq.s32.totalorder %s28, 3
    %p428 = por %p426, %p427
    %p429 = scmp.ne.s32.totalorder %s418, %s419
    %p430 = scmp.eq.s32.totalorder %s28, 0
    %p431 = por %p429, %p430
    %p432 = scmp.ne.s32.totalorder %s418, %s419
    %p433 = scmp.eq.s32.totalorder %s29, 3
    %p434 = por %p432, %p433
    %p436 = scmp.ne.s32.totalorder %s419, %s435
    %p437 = scmp.eq.s32.totalorder %s29, 0
    %p438 = por %p436, %p437
    %s439 = ssub.s32 %s31, %s38
    %p440 = scmp.eq.s32.totalorder %s439, 0
    %s442 = sadd.s32 %s441, 1
    %s443 = scalar_select %p440, %s441, %s442
    %p446 = pneg %p440
    %p447 = scmp.eq.s32.totalorder %s23, 3
    %p448 = por %p446, %p447
    %p449 = scmp.ne.s32.totalorder %s441, %s444
    %p450 = scmp.eq.s32.totalorder %s23, 0
    %p451 = por %p449, %p450
    %p452 = scmp.ne.s32.totalorder %s441, %s444
    %p453 = scmp.eq.s32.totalorder %s28, 3
    %p454 = por %p452, %p453
    %p455 = scmp.ne.s32.totalorder %s444, %s445
    %p456 = scmp.eq.s32.totalorder %s28, 0
    %p457 = por %p455, %p456
    %p458 = scmp.ne.s32.totalorder %s444, %s445
    %p459 = scmp.eq.s32.totalorder %s29, 3
    %p460 = por %p458, %p459
    %p462 = scmp.ne.s32.totalorder %s445, %s461
    %p463 = scmp.eq.s32.totalorder %s29, 0
    %p464 = por %p462, %p463
    %s465 = ssub.s32 %s30, %s42
    %p466 = scmp.eq.s32.totalorder %s465, 0
    %s468 = sadd.s32 %s467, 1
    %s469 = scalar_select %p466, %s467, %s468
    %p472 = pneg %p466
    %p473 = scmp.eq.s32.totalorder %s23, 3
    %p474 = por %p472, %p473
    %p475 = scmp.ne.s32.totalorder %s467, %s470
    %p476 = scmp.eq.s32.totalorder %s23, 0
    %p477 = por %p475, %p476
    %p478 = scmp.ne.s32.totalorder %s467, %s470
    %p479 = scmp.eq.s32.totalorder %s28, 3
    %p480 = por %p478, %p479
    %p481 = scmp.ne.s32.totalorder %s470, %s471
    %p482 = scmp.eq.s32.totalorder %s28, 0
    %p483 = por %p481, %p482
    %p484 = scmp.ne.s32.totalorder %s470, %s471
    %p485 = scmp.eq.s32.totalorder %s29, 3
    %p486 = por %p484, %p485
    %p488 = scmp.ne.s32.totalorder %s471, %s487
    %p489 = scmp.eq.s32.totalorder %s29, 0
    %p490 = por %p488, %p489
    %p491 = scmp.le.s32.totalorder 1, %s23
    %p492 = scmp.lt.s32.totalorder %s23, 5
    %p493 = pnand %p491, %p492
    %p494 = pneg %p493
    // Predicated region
    $region9: #{vit_mmd_feature_loss.2} parent=5 // pred_check
      _
    $region10: #{vit_mmd_feature_loss.2} parent=5 // pred_check_branch
      %496 = sbr.rel (%p493) target = $region12
    $region11: #{vit_mmd_feature_loss.2} parent=5 // pred_region
      %s497 = ssub.s32 %s23, 1
      // Predicated region
      $region13: #{vit_mmd_feature_loss.2} parent=11 // pred_check
        %p498 = pneg %p82
      $region14: #{vit_mmd_feature_loss.2} parent=11 // pred_check_branch
        %500 = sbr.rel (%p498) target = $region16
      $region15: #{vit_mmd_feature_loss.2} parent=11 // pred_region
        _
      $region16: #{vit_mmd_feature_loss.2} parent=11 // pred_fallthru
        _
      // Predicated region
      $region17: #{vit_mmd_feature_loss.2} parent=11 // pred_check
        %p501 = pneg %p103
      $region18: #{vit_mmd_feature_loss.2} parent=11 // pred_check_branch
        %503 = sbr.rel (%p501) target = $region20
      $region19: #{vit_mmd_feature_loss.2} parent=11 // pred_region
        _
      $region20: #{vit_mmd_feature_loss.2} parent=11 // pred_fallthru
        _
      // Predicated region
      $region21: #{vit_mmd_feature_loss.2} parent=11 // pred_check
        %p504 = pneg %p124
      $region22: #{vit_mmd_feature_loss.2} parent=11 // pred_check_branch
        %506 = sbr.rel (%p504) target = $region24
      $region23: #{vit_mmd_feature_loss.2} parent=11 // pred_region
        _
      $region24: #{vit_mmd_feature_loss.2} parent=11 // pred_fallthru
        _
      // Predicated region
      $region25: #{vit_mmd_feature_loss.2} parent=11 // pred_check
        %p507 = pneg %p145
      $region26: #{vit_mmd_feature_loss.2} parent=11 // pred_check_branch
        %509 = sbr.rel (%p507) target = $region28
      $region27: #{vit_mmd_feature_loss.2} parent=11 // pred_region
        _
      $region28: #{vit_mmd_feature_loss.2} parent=11 // pred_fallthru
        _
    $region12: #{vit_mmd_feature_loss.2} parent=5 // pred_fallthru
      _
    %p510 = scmp.lt.s32.totalorder %s23, 4
    // Predicated region
    $region29: #{vit_mmd_feature_loss.2} parent=5 // pred_check
      %p511 = pneg %p510
    $region30: #{vit_mmd_feature_loss.2} parent=5 // pred_check_branch
      %513 = sbr.rel (%p511) target = $region32
    $region31: #{vit_mmd_feature_loss.2} parent=5 // pred_region
      // Predicated region
      $region33: #{vit_mmd_feature_loss.2} parent=31 // pred_check
        %p514 = pneg %p55
      $region34: #{vit_mmd_feature_loss.2} parent=31 // pred_check_branch
        %516 = sbr.rel (%p514) target = $region36
      $region35: #{vit_mmd_feature_loss.2} parent=31 // pred_region
        %p517 = scmp.lt.s32.totalorder %s30, 1
        %s518 = scalar_select %p517, %s30, 1
        %s519 = smul.addr %s518, 2
        %s520 = smul.addr %s519, 8
        %s521 = scalar_lea.vmem %s0, %s520
      $region36: #{vit_mmd_feature_loss.2} parent=31 // pred_fallthru
        _
      // Predicated region
      $region37: #{vit_mmd_feature_loss.2} parent=31 // pred_check
        %p522 = pneg %p165
      $region38: #{vit_mmd_feature_loss.2} parent=31 // pred_check_branch
        %524 = sbr.rel (%p522) target = $region40
      $region39: #{vit_mmd_feature_loss.2} parent=31 // pred_region
        %p525 = scmp.lt.s32.totalorder %s31, 1
        %s526 = scalar_select %p525, %s31, 1
        %s527 = scalar_lea.vmem %s5, %s526
      $region40: #{vit_mmd_feature_loss.2} parent=31 // pred_fallthru
        _
      // Predicated region
      $region41: #{vit_mmd_feature_loss.2} parent=31 // pred_check
        %p528 = pneg %p191
      $region42: #{vit_mmd_feature_loss.2} parent=31 // pred_check_branch
        %530 = sbr.rel (%p528) target = $region44
      $region43: #{vit_mmd_feature_loss.2} parent=31 // pred_region
        %p531 = scmp.lt.s32.totalorder %s31, 1
        %s532 = scalar_select %p531, %s31, 1
        %s533 = scalar_lea.vmem %s6, %s532
      $region44: #{vit_mmd_feature_loss.2} parent=31 // pred_fallthru
        _
      // Predicated region
      $region45: #{vit_mmd_feature_loss.2} parent=31 // pred_check
        %p534 = pneg %p217
      $region46: #{vit_mmd_feature_loss.2} parent=31 // pred_check_branch
        %536 = sbr.rel (%p534) target = $region48
      $region47: #{vit_mmd_feature_loss.2} parent=31 // pred_region
        %p537 = scmp.lt.s32.totalorder %s31, 1
        %s538 = scalar_select %p537, %s31, 1
        %s539 = smul.addr %s538, 48
        %s540 = smul.addr %s539, 4
        %s541 = scalar_lea.vmem %s7, %s540
      $region48: #{vit_mmd_feature_loss.2} parent=31 // pred_fallthru
        _
      // Predicated region
      $region49: #{vit_mmd_feature_loss.2} parent=31 // pred_check
        %p542 = pneg %p243
      $region50: #{vit_mmd_feature_loss.2} parent=31 // pred_check_branch
        %544 = sbr.rel (%p542) target = $region52
      $region51: #{vit_mmd_feature_loss.2} parent=31 // pred_region
        %p545 = scmp.lt.s32.totalorder %s31, 1
        %s546 = scalar_select %p545, %s31, 1
        %s547 = smul.addr %s546, 3
        %s548 = scalar_lea.vmem %s8, %s547
      $region52: #{vit_mmd_feature_loss.2} parent=31 // pred_fallthru
        _
      // Predicated region
      $region53: #{vit_mmd_feature_loss.2} parent=31 // pred_check
        %p549 = pneg %p269
      $region54: #{vit_mmd_feature_loss.2} parent=31 // pred_check_branch
        %551 = sbr.rel (%p549) target = $region56
      $region55: #{vit_mmd_feature_loss.2} parent=31 // pred_region
        %p552 = scmp.lt.s32.totalorder %s31, 1
        %s553 = scalar_select %p552, %s31, 1
        %s554 = smul.addr %s553, 16
        %s555 = smul.addr %s554, 4
        %s556 = scalar_lea.vmem %s9, %s555
      $region56: #{vit_mmd_feature_loss.2} parent=31 // pred_fallthru
        _
      // Predicated region
      $region57: #{vit_mmd_feature_loss.2} parent=31 // pred_check
        %p557 = pneg %p295
      $region58: #{vit_mmd_feature_loss.2} parent=31 // pred_check_branch
        %559 = sbr.rel (%p557) target = $region60
      $region59: #{vit_mmd_feature_loss.2} parent=31 // pred_region
        %p560 = scmp.lt.s32.totalorder %s31, 1
        %s561 = scalar_select %p560, %s31, 1
        %s562 = scalar_lea.vmem %s10, %s561
      $region60: #{vit_mmd_feature_loss.2} parent=31 // pred_fallthru
        _
      // Predicated region
      $region61: #{vit_mmd_feature_loss.2} parent=31 // pred_check
        %p563 = pneg %p321
      $region62: #{vit_mmd_feature_loss.2} parent=31 // pred_check_branch
        %565 = sbr.rel (%p563) target = $region64
      $region63: #{vit_mmd_feature_loss.2} parent=31 // pred_region
        %p566 = scmp.lt.s32.totalorder %s31, 1
        %s567 = scalar_select %p566, %s31, 1
        %s568 = scalar_lea.vmem %s11, %s567
      $region64: #{vit_mmd_feature_loss.2} parent=31 // pred_fallthru
        _
      // Predicated region
      $region65: #{vit_mmd_feature_loss.2} parent=31 // pred_check
        %p569 = pneg %p347
      $region66: #{vit_mmd_feature_loss.2} parent=31 // pred_check_branch
        %571 = sbr.rel (%p569) target = $region68
      $region67: #{vit_mmd_feature_loss.2} parent=31 // pred_region
        %p572 = scmp.lt.s32.totalorder %s31, 1
        %s573 = scalar_select %p572, %s31, 1
        %s574 = scalar_lea.vmem %s12, %s573
      $region68: #{vit_mmd_feature_loss.2} parent=31 // pred_fallthru
        _
      // Predicated region
      $region69: #{vit_mmd_feature_loss.2} parent=31 // pred_check
        %p575 = pneg %p373
      $region70: #{vit_mmd_feature_loss.2} parent=31 // pred_check_branch
        %577 = sbr.rel (%p575) target = $region72
      $region71: #{vit_mmd_feature_loss.2} parent=31 // pred_region
        %p578 = scmp.lt.s32.totalorder %s31, 1
        %s579 = scalar_select %p578, %s31, 1
        %s580 = smul.addr %s579, 64
        %s581 = smul.addr %s580, 4
        %s582 = scalar_lea.vmem %s13, %s581
      $region72: #{vit_mmd_feature_loss.2} parent=31 // pred_fallthru
        _
      // Predicated region
      $region73: #{vit_mmd_feature_loss.2} parent=31 // pred_check
        %p583 = pneg %p399
      $region74: #{vit_mmd_feature_loss.2} parent=31 // pred_check_branch
        %585 = sbr.rel (%p583) target = $region76
      $region75: #{vit_mmd_feature_loss.2} parent=31 // pred_region
        %p586 = scmp.lt.s32.totalorder %s31, 1
        %s587 = scalar_select %p586, %s31, 1
        %s588 = smul.addr %s587, 4
        %s589 = scalar_lea.vmem %s14, %s588
      $region76: #{vit_mmd_feature_loss.2} parent=31 // pred_fallthru
        _
      // Predicated region
      $region77: #{vit_mmd_feature_loss.2} parent=31 // pred_check
        %p590 = pneg %p425
      $region78: #{vit_mmd_feature_loss.2} parent=31 // pred_check_branch
        %592 = sbr.rel (%p590) target = $region80
      $region79: #{vit_mmd_feature_loss.2} parent=31 // pred_region
        %p593 = scmp.lt.s32.totalorder %s31, 1
        %s594 = scalar_select %p593, %s31, 1
        %s595 = smul.addr %s594, 64
        %s596 = smul.addr %s595, 4
        %s597 = scalar_lea.vmem %s15, %s596
      $region80: #{vit_mmd_feature_loss.2} parent=31 // pred_fallthru
        _
      // Predicated region
      $region81: #{vit_mmd_feature_loss.2} parent=31 // pred_check
        %p598 = pneg %p451
      $region82: #{vit_mmd_feature_loss.2} parent=31 // pred_check_branch
        %600 = sbr.rel (%p598) target = $region84
      $region83: #{vit_mmd_feature_loss.2} parent=31 // pred_region
        %p601 = scmp.lt.s32.totalorder %s31, 1
        %s602 = scalar_select %p601, %s31, 1
        %s603 = scalar_lea.vmem %s16, %s602
      $region84: #{vit_mmd_feature_loss.2} parent=31 // pred_fallthru
        _
    $region32: #{vit_mmd_feature_loss.2} parent=5 // pred_fallthru
      _
    %p604 = scmp.le.s32.totalorder 1, %s23
    %p605 = scmp.lt.s32.totalorder %s23, 5
    %p606 = pnand %p604, %p605
    %p607 = pneg %p606
    // Predicated region
    $region85: #{vit_mmd_feature_loss.2} parent=5 // pred_check
      _
    $region86: #{vit_mmd_feature_loss.2} parent=5 // pred_check_branch
      %609 = sbr.rel (%p606) target = $region88
    $region87: #{vit_mmd_feature_loss.2} parent=5 // pred_region
      %s610 = ssub.s32 %s23, 1
      %p611 = scmp.lt.s32.totalorder %s32, 1
      %s612 = scalar_select %p611, %s32, 1
      %s613 = smul.addr %s612, 2
      %s614 = smul.addr %s613, 8
      %s615 = scalar_lea.vmem %s0, %s614
      %p616 = pneg %p61
      %p617 = pneg %p58
      %p618 = pneg %p82
      %p619 = pneg %p79
      %p620 = pneg %p103
      %p621 = pneg %p100
      %p622 = pneg %p124
      %p623 = pneg %p121
      %p624 = pneg %p145
      %p625 = pneg %p142
      %p626 = scmp.lt.s32.totalorder %s33, 1
      %s627 = scalar_select %p626, %s33, 1
      %s628 = scalar_lea.vmem %s5, %s627
      %p629 = pneg %p171
      %p630 = pneg %p168
      %p631 = scmp.lt.s32.totalorder %s33, 1
      %s632 = scalar_select %p631, %s33, 1
      %s633 = scalar_lea.vmem %s6, %s632
      %p634 = pneg %p197
      %p635 = pneg %p194
      %p636 = scmp.lt.s32.totalorder %s33, 1
      %s637 = scalar_select %p636, %s33, 1
      %s638 = smul.addr %s637, 48
      %s639 = smul.addr %s638, 4
      %s640 = scalar_lea.vmem %s7, %s639
      %p641 = pneg %p223
      %p642 = pneg %p220
      %p643 = scmp.lt.s32.totalorder %s33, 1
      %s644 = scalar_select %p643, %s33, 1
      %s645 = smul.addr %s644, 3
      %s646 = scalar_lea.vmem %s8, %s645
      %p647 = pneg %p249
      %p648 = pneg %p246
      %p649 = scmp.lt.s32.totalorder %s33, 1
      %s650 = scalar_select %p649, %s33, 1
      %s651 = smul.addr %s650, 16
      %s652 = smul.addr %s651, 4
      %s653 = scalar_lea.vmem %s9, %s652
      %p654 = pneg %p275
      %p655 = pneg %p272
      %p656 = scmp.lt.s32.totalorder %s33, 1
      %s657 = scalar_select %p656, %s33, 1
      %s658 = scalar_lea.vmem %s10, %s657
      %p659 = pneg %p301
      %p660 = pneg %p298
      %p661 = scmp.lt.s32.totalorder %s33, 1
      %s662 = scalar_select %p661, %s33, 1
      %s663 = scalar_lea.vmem %s11, %s662
      %p664 = pneg %p327
      %p665 = pneg %p324
      %p666 = scmp.lt.s32.totalorder %s33, 1
      %s667 = scalar_select %p666, %s33, 1
      %s668 = scalar_lea.vmem %s12, %s667
      %p669 = pneg %p353
      %p670 = pneg %p350
      %p671 = scmp.lt.s32.totalorder %s33, 1
      %s672 = scalar_select %p671, %s33, 1
      %s673 = smul.addr %s672, 64
      %s674 = smul.addr %s673, 4
      %s675 = scalar_lea.vmem %s13, %s674
      %p676 = pneg %p379
      %p677 = pneg %p376
      %p678 = scmp.lt.s32.totalorder %s33, 1
      %s679 = scalar_select %p678, %s33, 1
      %s680 = smul.addr %s679, 4
      %s681 = scalar_lea.vmem %s14, %s680
      %p682 = pneg %p405
      %p683 = pneg %p402
      %p684 = scmp.lt.s32.totalorder %s33, 1
      %s685 = scalar_select %p684, %s33, 1
      %s686 = smul.addr %s685, 64
      %s687 = smul.addr %s686, 4
      %s688 = scalar_lea.vmem %s15, %s687
      %p689 = pneg %p431
      %p690 = pneg %p428
      %p691 = scmp.lt.s32.totalorder %s33, 1
      %s692 = scalar_select %p691, %s33, 1
      %s693 = scalar_lea.vmem %s16, %s692
      %p694 = pneg %p457
      %p695 = pneg %p454
      %p696 = pneg %p483
      %p697 = pneg %p480
      %p698 = scmp.lt.s32.totalorder %s32, 1
      %s699 = scalar_select %p698, %s32, 1
      %s700 = smul.addr %s699, 2
      %s701 = smul.addr %s700, 8
      %s702 = scalar_lea.vmem %s17, %s701
      %p703 = scmp.lt.s32.totalorder %s32, 1
      %s704 = scalar_select %p703, %s32, 1
      %s705 = smul.addr %s704, 2
      %s706 = smul.addr %s705, 8
      %s707 = scalar_lea.vmem %s0, %s706
      %p708 = scmp.lt.s32.totalorder %s33, 1
      %s709 = scalar_select %p708, %s33, 1
      %s710 = scalar_lea.vmem %s5, %s709
      %p711 = scmp.lt.s32.totalorder %s33, 1
      %s712 = scalar_select %p711, %s33, 1
      %s713 = scalar_lea.vmem %s6, %s712
      %p714 = scmp.lt.s32.totalorder %s33, 1
      %s715 = scalar_select %p714, %s33, 1
      %s716 = smul.addr %s715, 48
      %s717 = smul.addr %s716, 4
      %s718 = scalar_lea.vmem %s7, %s717
      %p719 = scmp.lt.s32.totalorder %s33, 1
      %s720 = scalar_select %p719, %s33, 1
      %s721 = smul.addr %s720, 3
      %s722 = scalar_lea.vmem %s8, %s721
      %p723 = scmp.lt.s32.totalorder %s33, 1
      %s724 = scalar_select %p723, %s33, 1
      %s725 = smul.addr %s724, 16
      %s726 = smul.addr %s725, 4
      %s727 = scalar_lea.vmem %s9, %s726
      %p728 = scmp.lt.s32.totalorder %s33, 1
      %s729 = scalar_select %p728, %s33, 1
      %s730 = scalar_lea.vmem %s10, %s729
      %p731 = scmp.lt.s32.totalorder %s33, 1
      %s732 = scalar_select %p731, %s33, 1
      %s733 = scalar_lea.vmem %s11, %s732
      %p734 = scmp.lt.s32.totalorder %s33, 1
      %s735 = scalar_select %p734, %s33, 1
      %s736 = scalar_lea.vmem %s12, %s735
      %p737 = scmp.lt.s32.totalorder %s33, 1
      %s738 = scalar_select %p737, %s33, 1
      %s739 = smul.addr %s738, 64
      %s740 = smul.addr %s739, 4
      %s741 = scalar_lea.vmem %s13, %s740
      %p742 = scmp.lt.s32.totalorder %s33, 1
      %s743 = scalar_select %p742, %s33, 1
      %s744 = smul.addr %s743, 4
      %s745 = scalar_lea.vmem %s14, %s744
      %p746 = scmp.lt.s32.totalorder %s33, 1
      %s747 = scalar_select %p746, %s33, 1
      %s748 = smul.addr %s747, 64
      %s749 = smul.addr %s748, 4
      %s750 = scalar_lea.vmem %s15, %s749
      %p751 = scmp.lt.s32.totalorder %s33, 1
      %s752 = scalar_select %p751, %s33, 1
      %s753 = scalar_lea.vmem %s16, %s752
      %p754 = scmp.lt.s32.totalorder %s32, 1
      %s755 = scalar_select %p754, %s32, 1
      %s756 = smul.addr %s755, 2
      %s757 = smul.addr %s756, 8
      %s758 = scalar_lea.vmem %s17, %s757
      %p760 = scmp.eq.s32.totalorder %s33, 0
      // Predicated region
      $region89: #{vit_mmd_feature_loss.2} parent=87 // pred_check
        %p761 = pneg %p760
      $region90: #{vit_mmd_feature_loss.2} parent=87 // pred_check_branch
        %763 = sbr.rel (%p761) target = $region92
      $region91: #{vit_mmd_feature_loss.2} parent=87 // pred_region
        %v764 = vld [vmem:[%s707] sm:$0xff]
        %v765 = vld [vmem:[%s707 + $0x8] sm:$0xff]
        %v766 = vpack.c.bf16 %v764, %v764
        %v767 = vpack.c.bf16 %v765, %v765
        %v768 = vld [vmem:[%s3] sm:$0xf]
        %v769 = vld [vmem:[%s3 + $0x4] sm:$0xf]
        %v770 = vld [vmem:[%s3 + $0x8] sm:$0xf]
        %v771 = vld [vmem:[%s3 + $0xc] sm:$0xf]
        %v772 = vld [vmem:[%s3 + $0x10] sm:$0xf]
        %v773 = vld [vmem:[%s3 + $0x14] sm:$0xf]
        %v774 = vld [vmem:[%s3 + $0x18] sm:$0xf]
        %v775 = vld [vmem:[%s3 + $0x1c] sm:$0xf]
        %v776 = vld [vmem:[%s3 + $0x20] sm:$0xf]
        %v777 = vld [vmem:[%s3 + $0x24] sm:$0xf]
        %v778 = vld [vmem:[%s3 + $0x28] sm:$0xf]
        %v779 = vld [vmem:[%s3 + $0x2c] sm:$0xf]
        %v780 = vld [vmem:[%s3 + $0x30] sm:$0xf]
        %v781 = vld [vmem:[%s3 + $0x34] sm:$0xf]
        %v782 = vld [vmem:[%s3 + $0x38] sm:$0xf]
        %v783 = vld [vmem:[%s3 + $0x3c] sm:$0xf]
        %v784 = vld [vmem:[%s3 + $0x40] sm:$0xf]
        %v785 = vld [vmem:[%s3 + $0x44] sm:$0xf]
        %v786 = vld [vmem:[%s3 + $0x48] sm:$0xf]
        %v787 = vld [vmem:[%s3 + $0x4c] sm:$0xf]
        %v788 = vld [vmem:[%s3 + $0x50] sm:$0xf]
        %v789 = vld [vmem:[%s3 + $0x54] sm:$0xf]
        %v790 = vld [vmem:[%s3 + $0x58] sm:$0xf]
        %v791 = vld [vmem:[%s3 + $0x5c] sm:$0xf]
        %v792 = vld [vmem:[%s4] sm:$0x1]
        %v794 = vperm.slane %v792, 0
        %v820 = vunpack.c.l.b16 %v768
        %v821 = vunpack.c.l.b16 %v769
        %v822 = vunpack.c.l.b16 %v770
        %v823 = vunpack.c.l.b16 %v771
        %v824 = vunpack.c.l.b16 %v772
        %v825 = vunpack.c.l.b16 %v773
        %v826 = vunpack.c.l.b16 %v774
        %v827 = vunpack.c.l.b16 %v775
        %v828 = vunpack.c.l.b16 %v776
        %v829 = vunpack.c.l.b16 %v777
        %v830 = vunpack.c.l.b16 %v778
        %v831 = vunpack.c.l.b16 %v779
        %v832 = vunpack.c.l.b16 %v780
        %v833 = vunpack.c.l.b16 %v781
        %v834 = vunpack.c.l.b16 %v782
        %v835 = vunpack.c.l.b16 %v783
        %v836 = vunpack.c.l.b16 %v784
        %v837 = vunpack.c.l.b16 %v785
        %v838 = vunpack.c.l.b16 %v786
        %v839 = vunpack.c.l.b16 %v787
        %v840 = vunpack.c.l.b16 %v788
        %v841 = vunpack.c.l.b16 %v789
        %v842 = vunpack.c.l.b16 %v790
        %v843 = vunpack.c.l.b16 %v791
        %v844 = vpack.c.b16 %v821, %v820
        %v845 = vpack.c.b16 %v823, %v822
        %v846 = vpack.c.b16 %v825, %v824
        %v847 = vpack.c.b16 %v827, %v826
        %v848 = vpack.c.b16 %v829, %v828
        %v849 = vpack.c.b16 %v831, %v830
        %v850 = vpack.c.b16 %v833, %v832
        %v851 = vpack.c.b16 %v835, %v834
        %v852 = vpack.c.b16 %v837, %v836
        %v853 = vpack.c.b16 %v839, %v838
        %v854 = vpack.c.b16 %v841, %v840
        %v855 = vpack.c.b16 %v843, %v842
        %vm868 = vcmask 523264
        %v870 = vsel %vm868, %v767, 0
        %872 = vmatpush.bf16.msra.mxu0 %v851
        %873 = vmatpush.bf16.msra.mxu0 %v850
        %874 = vmatpush.bf16.msra.mxu0 %v849
        %875 = vmatpush.bf16.msra.mxu0 %v848
        %876 = vmatpush.bf16.msra.mxu0 %v847
        %877 = vmatpush.bf16.msra.mxu0 %v846
        %878 = vmatpush.bf16.msra.mxu0 %v845
        %879 = vmatpush.bf16.msra.mxu0 %v844
        %880 = vmatmul.bf16.gmra.mxu0 %v766
        %v881 = vpop.f32.mrf.mxu0
        %v882 = vadd.f32 %v794, %v881
        %v883 = vpop.f32.mrf.mxu0
        %884 = vdwg.mxu0
        %885 = vmatpush.bf16.msra.mxu0 0
        %886 = vmatpush.bf16.msra.mxu0 0
        %887 = vmatpush.bf16.msra.mxu0 0
        %888 = vmatpush.bf16.msra.mxu0 0
        %889 = vmatpush.bf16.msra.mxu0 %v855
        %890 = vmatpush.bf16.msra.mxu0 %v854
        %891 = vmatpush.bf16.msra.mxu0 %v853
        %892 = vmatpush.bf16.msra.mxu0 %v852
        %893 = vmatmul.bf16.gmra.mxu0 %v870
        %v894 = vpop.f32.mrf.mxu0
        %v895 = vadd.f32 %v882, %v894
        %v896 = vpop.f32.mrf.mxu0
        %897 = vdwg.mxu0
        %v898 = vld [vmem:[%s2] sm:$0xff]
        %v899 = vadd.f32 %v895, %v898
        %v900 = vld [vmem:[%s1] sm:$0x1]
        %901 = vst [vmem:[%s758] sm:$0x1] %v900
        %902 = vst [vmem:[%s758 + $0x1] sm:$0xf] %v899
        %v903 = vld [vmem:[%s1] sm:$0x1]
        %904 = vst [vmem:[%s758 + $0x5] sm:$0x1] %v903
        %905 = vst [vmem:[%s758 + $0x2] sm:$0xf0] %v899
      $region92: #{vit_mmd_feature_loss.2} parent=87 // pred_fallthru
        _
      %v906 = vld [vmem:[%s758] sm:$0xff]
      %v907 = vld [vmem:[%s758 + $0x8] sm:$0x3]
      %v908 = vld [vmem:[%s710] sm:$0x1]
      %v909 = vld [vmem:[%s713] sm:$0x1]
      %910 = vadd.xlane.f32.xlu0 %v906
      %v911 = vpop.xlane.xlu0 %910
      %vm912 = vcmask 1041408
      %v913 = vsel %vm912, %v907, 0.0
      %914 = vadd.xlane.f32.xlu0 %v913
      %v915 = vpop.xlane.xlu0 %914
      %v916 = vrcp.pop 128.0
      %v917 = vmul.f32 128.0, %v916
      %v918 = vsub.f32 1.0, %v917
      %v919 = vmul.f32 %v916, %v918
      %v920 = vadd.f32 %v916, %v919
      %vm921 = vweird.f32 %v916
      %v922 = vsel %vm921, %v916, %v920
      %v923 = vmul.f32 %v911, %v922
      %v924 = vmul.f32 %v915, %v922
      %v925 = vsub.f32 %v906, %v923
      %v926 = vsub.f32 %v907, %v924
      %v927 = vmul.f32 %v925, %v925
      %v928 = vmul.f32 %v926, %v926
      %929 = vadd.xlane.f32.xlu0 %v927
      %v930 = vpop.xlane.xlu0 %929
      %v931 = vsel %vm912, %v928, 0.0
      %932 = vadd.xlane.f32.xlu0 %v931
      %v933 = vpop.xlane.xlu0 %932
      %v934 = vmul.f32 %v930, %v922
      %v935 = vmul.f32 %v933, %v922
      %v936 = vadd.f32 %v934, 1e-12
      %v937 = vadd.f32 %v935, 1e-12
      %v938 = vrsqrt.pop %v936
      %v939 = vmul.f32 %v938, %v936
      %v940 = vmul.f32 %v939, %v938
      %v941 = vmul.f32 0.5, %v940
      %v942 = vsub.f32 1.5, %v941
      %v943 = vmul.f32 %v938, %v942
      %vm944 = vweird.f32 %v936
      %vm945 = vweird.f32 %v938
      %vm946 = vmor %vm944, %vm945
      %v947 = vsel %vm946, %v938, %v943
      %v948 = vrsqrt.pop %v937
      %v949 = vmul.f32 %v948, %v937
      %v950 = vmul.f32 %v949, %v948
      %v951 = vmul.f32 0.5, %v950
      %v952 = vsub.f32 1.5, %v951
      %v953 = vmul.f32 %v948, %v952
      %vm954 = vweird.f32 %v937
      %vm955 = vweird.f32 %v948
      %vm956 = vmor %vm954, %vm955
      %v957 = vsel %vm956, %v948, %v953
      %v958 = vmul.f32 %v925, %v947
      %v959 = vmul.f32 %v926, %v957
      %v961 = vperm.slane %v908, 0
      %v963 = vmul.f32 %v958, %v961
      %v964 = vmul.f32 %v959, %v961
      %v966 = vperm.slane %v909, 0
      %v968 = vadd.f32 %v963, %v966
      %v969 = vadd.f32 %v964, %v966
      %v970 = vpack.c.bf16 %v969, %v968
      %v971 = vld [vmem:[%s718] sm:$0xff]
      %v972 = vld [vmem:[%s718 + $0x8] sm:$0xf]
      %v973 = vld [vmem:[%s718 + $0xc] sm:$0xff]
      %v974 = vld [vmem:[%s718 + $0x14] sm:$0xf]
      %v975 = vld [vmem:[%s718 + $0x18] sm:$0xff]
      %v976 = vld [vmem:[%s718 + $0x20] sm:$0xf]
      %v977 = vld [vmem:[%s718 + $0x24] sm:$0xff]
      %v978 = vld [vmem:[%s718 + $0x2c] sm:$0xf]
      %v979 = vld [vmem:[%s718 + $0x30] sm:$0xff]
      %v980 = vld [vmem:[%s718 + $0x38] sm:$0xf]
      %v981 = vld [vmem:[%s718 + $0x3c] sm:$0xff]
      %v982 = vld [vmem:[%s718 + $0x44] sm:$0xf]
      %v983 = vld [vmem:[%s718 + $0x48] sm:$0xff]
      %v984 = vld [vmem:[%s718 + $0x50] sm:$0xf]
      %v985 = vld [vmem:[%s718 + $0x54] sm:$0xff]
      %v986 = vld [vmem:[%s718 + $0x5c] sm:$0xf]
      %v987 = vld [vmem:[%s718 + $0x60] sm:$0xff]
      %v988 = vld [vmem:[%s718 + $0x68] sm:$0xf]
      %v989 = vld [vmem:[%s718 + $0x6c] sm:$0xff]
      %v990 = vld [vmem:[%s718 + $0x74] sm:$0xf]
      %v991 = vld [vmem:[%s718 + $0x78] sm:$0xff]
      %v992 = vld [vmem:[%s718 + $0x80] sm:$0xf]
      %v993 = vld [vmem:[%s718 + $0x84] sm:$0xff]
      %v994 = vld [vmem:[%s718 + $0x8c] sm:$0xf]
      %v995 = vld [vmem:[%s718 + $0x90] sm:$0xff]
      %v996 = vld [vmem:[%s718 + $0x98] sm:$0xf]
      %v997 = vld [vmem:[%s718 + $0x9c] sm:$0xff]
      %v998 = vld [vmem:[%s718 + $0xa4] sm:$0xf]
      %v999 = vld [vmem:[%s718 + $0xa8] sm:$0xff]
      %v1000 = vld [vmem:[%s718 + $0xb0] sm:$0xf]
      %v1001 = vld [vmem:[%s718 + $0xb4] sm:$0xff]
      %v1002 = vld [vmem:[%s718 + $0xbc] sm:$0xf]
      %v1003 = vld [vmem:[%s722] sm:$0x7]
      %v1005 = vperm.slane %v1003, 0
      %v1006 = vperm.slane %v1003, 1
      %v1007 = vperm.slane %v1003, 2
      %v1043 = vunpack.c.l.b16 %v971
      %v1044 = vunpack.c.h.b16 %v971
      %v1045 = vunpack.c.l.b16 %v972
      %v1046 = vunpack.c.l.b16 %v973
      %v1047 = vunpack.c.h.b16 %v973
      %v1048 = vunpack.c.l.b16 %v974
      %v1049 = vunpack.c.l.b16 %v975
      %v1050 = vunpack.c.h.b16 %v975
      %v1051 = vunpack.c.l.b16 %v976
      %v1052 = vunpack.c.l.b16 %v977
      %v1053 = vunpack.c.h.b16 %v977
      %v1054 = vunpack.c.l.b16 %v978
      %v1055 = vunpack.c.l.b16 %v979
      %v1056 = vunpack.c.h.b16 %v979
      %v1057 = vunpack.c.l.b16 %v980
      %v1058 = vunpack.c.l.b16 %v981
      %v1059 = vunpack.c.h.b16 %v981
      %v1060 = vunpack.c.l.b16 %v982
      %v1061 = vunpack.c.l.b16 %v983
      %v1062 = vunpack.c.h.b16 %v983
      %v1063 = vunpack.c.l.b16 %v984
      %v1064 = vunpack.c.l.b16 %v985
      %v1065 = vunpack.c.h.b16 %v985
      %v1066 = vunpack.c.l.b16 %v986
      %v1067 = vunpack.c.l.b16 %v987
      %v1068 = vunpack.c.h.b16 %v987
      %v1069 = vunpack.c.l.b16 %v988
      %v1070 = vunpack.c.l.b16 %v989
      %v1071 = vunpack.c.h.b16 %v989
      %v1072 = vunpack.c.l.b16 %v990
      %v1073 = vunpack.c.l.b16 %v991
      %v1074 = vunpack.c.h.b16 %v991
      %v1075 = vunpack.c.l.b16 %v992
      %v1076 = vunpack.c.l.b16 %v993
      %v1077 = vunpack.c.h.b16 %v993
      %v1078 = vunpack.c.l.b16 %v994
      %v1079 = vunpack.c.l.b16 %v995
      %v1080 = vunpack.c.h.b16 %v995
      %v1081 = vunpack.c.l.b16 %v996
      %v1082 = vunpack.c.l.b16 %v997
      %v1083 = vunpack.c.h.b16 %v997
      %v1084 = vunpack.c.l.b16 %v998
      %v1085 = vunpack.c.l.b16 %v999
      %v1086 = vunpack.c.h.b16 %v999
      %v1087 = vunpack.c.l.b16 %v1000
      %v1088 = vunpack.c.l.b16 %v1001
      %v1089 = vunpack.c.h.b16 %v1001
      %v1090 = vunpack.c.l.b16 %v1002
      %v1091 = vpack.c.b16 %v1046, %v1043
      %v1092 = vpack.c.b16 %v1047, %v1044
      %v1093 = vpack.c.b16 %v1048, %v1045
      %v1094 = vpack.c.b16 %v1052, %v1049
      %v1095 = vpack.c.b16 %v1053, %v1050
      %v1096 = vpack.c.b16 %v1054, %v1051
      %v1097 = vpack.c.b16 %v1058, %v1055
      %v1098 = vpack.c.b16 %v1059, %v1056
      %v1099 = vpack.c.b16 %v1060, %v1057
      %v1100 = vpack.c.b16 %v1064, %v1061
      %v1101 = vpack.c.b16 %v1065, %v1062
      %v1102 = vpack.c.b16 %v1066, %v1063
      %v1103 = vpack.c.b16 %v1070, %v1067
      %v1104 = vpack.c.b16 %v1071, %v1068
      %v1105 = vpack.c.b16 %v1072, %v1069
      %v1106 = vpack.c.b16 %v1076, %v1073
      %v1107 = vpack.c.b16 %v1077, %v1074
      %v1108 = vpack.c.b16 %v1078, %v1075
      %v1109 = vpack.c.b16 %v1082, %v1079
      %v1110 = vpack.c.b16 %v1083, %v1080
      %v1111 = vpack.c.b16 %v1084, %v1081
      %v1112 = vpack.c.b16 %v1088, %v1085
      %v1113 = vpack.c.b16 %v1089, %v1086
      %v1114 = vpack.c.b16 %v1090, %v1087
      %1139 = vmatpush.bf16.msra.mxu0 %v1112
      %1140 = vmatpush.bf16.msra.mxu0 %v1109
      %1141 = vmatpush.bf16.msra.mxu0 %v1106
      %1142 = vmatpush.bf16.msra.mxu0 %v1103
      %1143 = vmatpush.bf16.msra.mxu0 %v1100
      %1144 = vmatpush.bf16.msra.mxu0 %v1097
      %1145 = vmatpush.bf16.msra.mxu0 %v1094
      %1146 = vmatpush.bf16.msra.mxu0 %v1091
      %1147 = vmatmul.bf16.gmra.mxu0 %v970
      %v1148 = vpop.f32.mrf.mxu0
      %v1149 = vadd.f32 %v1005, %v1148
      %v1150 = vpop.f32.mrf.mxu0
      %v1151 = vadd.f32 %v1005, %v1150
      %1152 = vdwg.mxu0
      %1153 = vmatpush.bf16.msra.mxu0 %v1113
      %1154 = vmatpush.bf16.msra.mxu0 %v1110
      %1155 = vmatpush.bf16.msra.mxu0 %v1107
      %1156 = vmatpush.bf16.msra.mxu0 %v1104
      %1157 = vmatpush.bf16.msra.mxu0 %v1101
      %1158 = vmatpush.bf16.msra.mxu0 %v1098
      %1159 = vmatpush.bf16.msra.mxu0 %v1095
      %1160 = vmatpush.bf16.msra.mxu0 %v1092
      %1161 = vmatmul.bf16.gmra.mxu0 %v970
      %v1162 = vpop.f32.mrf.mxu0
      %v1163 = vadd.f32 %v1006, %v1162
      %v1164 = vpop.f32.mrf.mxu0
      %v1165 = vadd.f32 %v1006, %v1164
      %1166 = vdwg.mxu0
      %1167 = vmatpush.bf16.msra.mxu0 %v1114
      %1168 = vmatpush.bf16.msra.mxu0 %v1111
      %1169 = vmatpush.bf16.msra.mxu0 %v1108
      %1170 = vmatpush.bf16.msra.mxu0 %v1105
      %1171 = vmatpush.bf16.msra.mxu0 %v1102
      %1172 = vmatpush.bf16.msra.mxu0 %v1099
      %1173 = vmatpush.bf16.msra.mxu0 %v1096
      %1174 = vmatpush.bf16.msra.mxu0 %v1093
      %1175 = vmatmul.bf16.gmra.mxu0 %v970
      %v1176 = vpop.f32.mrf.mxu0
      %v1177 = vadd.f32 %v1007, %v1176
      %v1178 = vpop.f32.mrf.mxu0
      %v1179 = vadd.f32 %v1007, %v1178
      %1180 = vdwg.mxu0
      %v1181 = vmul.f32 %v1149, 0.17677669
      %v1182 = vpack.c.bf16 %v1181, %v1181
      %v1183 = vpack.c.bf16 %v1163, %v1163
      %v1184 = vpack.c.bf16 %v1177, %v1177
      %vm1185 = vcmask 261120
      %v1187 = vsel %vm1185, %v1182, 0
      %v1190 = vsel %vm1185, %v1183, 0
      %1192 = vmatpush.bf16.xpose.msra.mxu0 0
      %1193 = vmatpush.bf16.xpose.msra.mxu0 0
      %1194 = vmatpush.bf16.xpose.msra.mxu0 0
      %1195 = vmatpush.bf16.xpose.msra.mxu0 0
      %1196 = vmatpush.bf16.xpose.msra.mxu0 0
      %1197 = vmatpush.bf16.xpose.msra.mxu0 0
      %1198 = vmatpush.bf16.xpose.msra.mxu0 0
      %1199 = vmatpush.bf16.xpose.msra.mxu0 %v1190
      %1200 = vmatmul.bf16.gmra.mxu0 %v1187
      %v1201 = vpop.f32.mrf.mxu0
      %v1202 = vadd.f32 0.0, %v1201
      %v1203 = vpop.f32.mrf.mxu0
      %1204 = vdwg.mxu0
      %vm1205 = vcmask 36864
      %v1206 = vsel %vm1205, %v1202, -inf
      %1207 = vmax.xlane.f32.xlu0 %v1206
      %v1208 = vpop.xlane.xlu0 %1207
      %v1209 = vsub.f32 %v1202, %v1208
      %v1210 = vmul.f32 %v1209, 1.442695
      %v1211 = vpow.pop %v1210
      %v1212 = vsel %vm1205, %v1211, 0.0
      %1213 = vadd.xlane.f32.xlu0 %v1212
      %v1214 = vpop.xlane.xlu0 %1213
      %v1215 = vrcp.pop %v1214
      %v1216 = vmul.f32 %v1211, %v1215
      %v1217 = vpack.c.bf16 %v1216, %v1216
      %vm1218 = vcmask 39936
      %v1220 = vsel %vm1218, %v1217, 0
      %vm1222 = vcmask 1042432
      %v1223 = vsel %vm912, 4294967295, 65535
      %v1224 = vsel %vm1222, %v1223, 0
      %v1226 = vand.u32 %v1184, %v1224
      %1228 = vmatpush.bf16.msra.mxu0 0
      %1229 = vmatpush.bf16.msra.mxu0 0
      %1230 = vmatpush.bf16.msra.mxu0 0
      %1231 = vmatpush.bf16.msra.mxu0 0
      %1232 = vmatpush.bf16.msra.mxu0 0
      %1233 = vmatpush.bf16.msra.mxu0 0
      %1234 = vmatpush.bf16.msra.mxu0 0
      %1235 = vmatpush.bf16.msra.mxu0 %v1226
      %1236 = vmatmul.bf16.gmra.mxu0 %v1220
      %v1237 = vpop.f32.mrf.mxu0
      %v1238 = vadd.f32 0.0, %v1237
      %v1239 = vpop.f32.mrf.mxu0
      %1240 = vdwg.mxu0
      %vm1241 = vcmask 258048
      %1242 = vst.msk [vmem:[#allocation2] sm:$0x1f] %vm1241, %v1238
      %1244 = vrot.lane.b32.xlu0 %v1182, 96
      %v1245 = vpop.permute.xlu0 %1244
      %1247 = vrot.lane.b32.xlu0 %v1183, 96
      %v1248 = vpop.permute.xlu0 %1247
      %v1250 = vsel %vm1185, %v1245, 0
      %v1253 = vsel %vm1185, %v1248, 0
      %1255 = vmatpush.bf16.xpose.msra.mxu0 0
      %1256 = vmatpush.bf16.xpose.msra.mxu0 0
      %1257 = vmatpush.bf16.xpose.msra.mxu0 0
      %1258 = vmatpush.bf16.xpose.msra.mxu0 0
      %1259 = vmatpush.bf16.xpose.msra.mxu0 0
      %1260 = vmatpush.bf16.xpose.msra.mxu0 0
      %1261 = vmatpush.bf16.xpose.msra.mxu0 0
      %1262 = vmatpush.bf16.xpose.msra.mxu0 %v1253
      %1263 = vmatmul.bf16.gmra.mxu0 %v1250
      %v1264 = vpop.f32.mrf.mxu0
      %v1265 = vadd.f32 0.0, %v1264
      %v1266 = vpop.f32.mrf.mxu0
      %1267 = vdwg.mxu0
      %v1268 = vsel %vm1205, %v1265, -inf
      %1269 = vmax.xlane.f32.xlu0 %v1268
      %v1270 = vpop.xlane.xlu0 %1269
      %v1271 = vsub.f32 %v1265, %v1270
      %v1272 = vmul.f32 %v1271, 1.442695
      %v1273 = vpow.pop %v1272
      %v1274 = vsel %vm1205, %v1273, 0.0
      %1275 = vadd.xlane.f32.xlu0 %v1274
      %v1276 = vpop.xlane.xlu0 %1275
      %v1277 = vrcp.pop %v1276
      %v1278 = vmul.f32 %v1273, %v1277
      %v1279 = vpack.c.bf16 %v1278, %v1278
      %1281 = vrot.lane.b32.xlu0 %v1184, 96
      %v1282 = vpop.permute.xlu0 %1281
      %v1284 = vsel %vm1218, %v1279, 0
      %v1287 = vand.u32 %v1282, %v1224
      %1289 = vmatpush.bf16.msra.mxu0 0
      %1290 = vmatpush.bf16.msra.mxu0 0
      %1291 = vmatpush.bf16.msra.mxu0 0
      %1292 = vmatpush.bf16.msra.mxu0 0
      %1293 = vmatpush.bf16.msra.mxu0 0
      %1294 = vmatpush.bf16.msra.mxu0 0
      %1295 = vmatpush.bf16.msra.mxu0 0
      %1296 = vmatpush.bf16.msra.mxu0 %v1287
      %1297 = vmatmul.bf16.gmra.mxu0 %v1284
      %v1298 = vpop.f32.mrf.mxu0
      %v1299 = vadd.f32 0.0, %v1298
      %v1300 = vpop.f32.mrf.mxu0
      %1301 = vdwg.mxu0
      %1303 = vrot.lane.b32.xlu0 %v1299, 32
      %v1304 = vpop.permute.xlu0 %1303
      %vm1306 = vcmask 520448
      %1307 = vst.msk [vmem:[#allocation2] sm:$0x1f] %vm1306, %v1304
      %1308 = vrot.lane.b32.xlu0 %v1182, 64
      %v1309 = vpop.permute.xlu0 %1308
      %1310 = vrot.lane.b32.xlu0 %v1183, 64
      %v1311 = vpop.permute.xlu0 %1310
      %v1313 = vsel %vm1185, %v1309, 0
      %v1316 = vsel %vm1185, %v1311, 0
      %1318 = vmatpush.bf16.xpose.msra.mxu0 0
      %1319 = vmatpush.bf16.xpose.msra.mxu0 0
      %1320 = vmatpush.bf16.xpose.msra.mxu0 0
      %1321 = vmatpush.bf16.xpose.msra.mxu0 0
      %1322 = vmatpush.bf16.xpose.msra.mxu0 0
      %1323 = vmatpush.bf16.xpose.msra.mxu0 0
      %1324 = vmatpush.bf16.xpose.msra.mxu0 0
      %1325 = vmatpush.bf16.xpose.msra.mxu0 %v1316
      %1326 = vmatmul.bf16.gmra.mxu0 %v1313
      %v1327 = vpop.f32.mrf.mxu0
      %v1328 = vadd.f32 0.0, %v1327
      %v1329 = vpop.f32.mrf.mxu0
      %1330 = vdwg.mxu0
      %v1331 = vsel %vm1205, %v1328, -inf
      %1332 = vmax.xlane.f32.xlu0 %v1331
      %v1333 = vpop.xlane.xlu0 %1332
      %v1334 = vsub.f32 %v1328, %v1333
      %v1335 = vmul.f32 %v1334, 1.442695
      %v1336 = vpow.pop %v1335
      %v1337 = vsel %vm1205, %v1336, 0.0
      %1338 = vadd.xlane.f32.xlu0 %v1337
      %v1339 = vpop.xlane.xlu0 %1338
      %v1340 = vrcp.pop %v1339
      %v1341 = vmul.f32 %v1336, %v1340
      %v1342 = vpack.c.bf16 %v1341, %v1341
      %1343 = vrot.lane.b32.xlu0 %v1184, 64
      %v1344 = vpop.permute.xlu0 %1343
      %v1346 = vsel %vm1218, %v1342, 0
      %v1349 = vand.u32 %v1344, %v1224
      %1351 = vmatpush.bf16.msra.mxu0 0
      %1352 = vmatpush.bf16.msra.mxu0 0
      %1353 = vmatpush.bf16.msra.mxu0 0
      %1354 = vmatpush.bf16.msra.mxu0 0
      %1355 = vmatpush.bf16.msra.mxu0 0
      %1356 = vmatpush.bf16.msra.mxu0 0
      %1357 = vmatpush.bf16.msra.mxu0 0
      %1358 = vmatpush.bf16.msra.mxu0 %v1349
      %1359 = vmatmul.bf16.gmra.mxu0 %v1346
      %v1360 = vpop.f32.mrf.mxu0
      %v1361 = vadd.f32 0.0, %v1360
      %v1362 = vpop.f32.mrf.mxu0
      %1363 = vdwg.mxu0
      %1365 = vrot.lane.b32.xlu0 %v1361, 64
      %v1366 = vpop.permute.xlu0 %1365
      %vm1368 = vcmask 782848
      %1369 = vst.msk [vmem:[#allocation2] sm:$0x1f] %vm1368, %v1366
      %1370 = vrot.lane.b32.xlu0 %v1182, 32
      %v1371 = vpop.permute.xlu0 %1370
      %1372 = vrot.lane.b32.xlu0 %v1183, 32
      %v1373 = vpop.permute.xlu0 %1372
      %v1375 = vsel %vm1185, %v1371, 0
      %v1378 = vsel %vm1185, %v1373, 0
      %1380 = vmatpush.bf16.xpose.msra.mxu0 0
      %1381 = vmatpush.bf16.xpose.msra.mxu0 0
      %1382 = vmatpush.bf16.xpose.msra.mxu0 0
      %1383 = vmatpush.bf16.xpose.msra.mxu0 0
      %1384 = vmatpush.bf16.xpose.msra.mxu0 0
      %1385 = vmatpush.bf16.xpose.msra.mxu0 0
      %1386 = vmatpush.bf16.xpose.msra.mxu0 0
      %1387 = vmatpush.bf16.xpose.msra.mxu0 %v1378
      %1388 = vmatmul.bf16.gmra.mxu0 %v1375
      %v1389 = vpop.f32.mrf.mxu0
      %v1390 = vadd.f32 0.0, %v1389
      %v1391 = vpop.f32.mrf.mxu0
      %1392 = vdwg.mxu0
      %v1393 = vsel %vm1205, %v1390, -inf
      %1394 = vmax.xlane.f32.xlu0 %v1393
      %v1395 = vpop.xlane.xlu0 %1394
      %v1396 = vsub.f32 %v1390, %v1395
      %v1397 = vmul.f32 %v1396, 1.442695
      %v1398 = vpow.pop %v1397
      %v1399 = vsel %vm1205, %v1398, 0.0
      %1400 = vadd.xlane.f32.xlu0 %v1399
      %v1401 = vpop.xlane.xlu0 %1400
      %v1402 = vrcp.pop %v1401
      %v1403 = vmul.f32 %v1398, %v1402
      %v1404 = vpack.c.bf16 %v1403, %v1403
      %1405 = vrot.lane.b32.xlu0 %v1184, 32
      %v1406 = vpop.permute.xlu0 %1405
      %v1408 = vsel %vm1218, %v1404, 0
      %v1411 = vand.u32 %v1406, %v1224
      %1413 = vmatpush.bf16.msra.mxu0 0
      %1414 = vmatpush.bf16.msra.mxu0 0
      %1415 = vmatpush.bf16.msra.mxu0 0
      %1416 = vmatpush.bf16.msra.mxu0 0
      %1417 = vmatpush.bf16.msra.mxu0 0
      %1418 = vmatpush.bf16.msra.mxu0 0
      %1419 = vmatpush.bf16.msra.mxu0 0
      %1420 = vmatpush.bf16.msra.mxu0 %v1411
      %1421 = vmatmul.bf16.gmra.mxu0 %v1408
      %v1422 = vpop.f32.mrf.mxu0
      %v1423 = vadd.f32 0.0, %v1422
      %v1424 = vpop.f32.mrf.mxu0
      %1425 = vdwg.mxu0
      %1427 = vrot.lane.b32.xlu0 %v1423, 96
      %v1428 = vpop.permute.xlu0 %1427
      %vm1430 = vcmask 1045248
      %1431 = vst.msk [vmem:[#allocation2] sm:$0x1f] %vm1430, %v1428
      %v1432 = vmul.f32 %v1151, 0.17677669
      %v1433 = vpack.c.bf16 %v1432, %v1181
      %v1434 = vpack.c.bf16 %v1165, %v1163
      %v1435 = vpack.c.bf16 %v1179, %v1177
      %v1437 = vshrl.u32 %v1433, 16
      %v1439 = vrot.slane %v1437, 2
      %v1440 = vshll.u32 %v1433, 16
      %v1442 = vrot.slane %v1440, 3
      %v1443 = vor.u32 %v1439, %v1442
      %v1445 = vshrl.u32 %v1434, 16
      %v1447 = vrot.slane %v1445, 2
      %v1448 = vshll.u32 %v1434, 16
      %v1450 = vrot.slane %v1448, 3
      %v1451 = vor.u32 %v1447, %v1450
      %v1453 = vsel %vm1185, %v1443, 0
      %v1456 = vsel %vm1185, %v1451, 0
      %1458 = vmatpush.bf16.xpose.msra.mxu0 0
      %1459 = vmatpush.bf16.xpose.msra.mxu0 0
      %1460 = vmatpush.bf16.xpose.msra.mxu0 0
      %1461 = vmatpush.bf16.xpose.msra.mxu0 0
      %1462 = vmatpush.bf16.xpose.msra.mxu0 0
      %1463 = vmatpush.bf16.xpose.msra.mxu0 0
      %1464 = vmatpush.bf16.xpose.msra.mxu0 0
      %1465 = vmatpush.bf16.xpose.msra.mxu0 %v1456
      %1466 = vmatmul.bf16.gmra.mxu0 %v1453
      %v1467 = vpop.f32.mrf.mxu0
      %v1468 = vadd.f32 0.0, %v1467
      %v1469 = vpop.f32.mrf.mxu0
      %1470 = vdwg.mxu0
      %v1471 = vsel %vm1205, %v1468, -inf
      %1472 = vmax.xlane.f32.xlu0 %v1471
      %v1473 = vpop.xlane.xlu0 %1472
      %v1474 = vsub.f32 %v1468, %v1473
      %v1475 = vmul.f32 %v1474, 1.442695
      %v1476 = vpow.pop %v1475
      %v1477 = vsel %vm1205, %v1476, 0.0
      %1478 = vadd.xlane.f32.xlu0 %v1477
      %v1479 = vpop.xlane.xlu0 %1478
      %v1480 = vrcp.pop %v1479
      %v1481 = vmul.f32 %v1476, %v1480
      %v1482 = vpack.c.bf16 %v1481, %v1481
      %v1484 = vshrl.u32 %v1435, 16
      %v1486 = vrot.slane %v1484, 2
      %v1487 = vshll.u32 %v1435, 16
      %v1489 = vrot.slane %v1487, 3
      %v1490 = vor.u32 %v1486, %v1489
      %v1492 = vsel %vm1218, %v1482, 0
      %v1495 = vand.u32 %v1490, %v1224
      %1497 = vmatpush.bf16.msra.mxu0 0
      %1498 = vmatpush.bf16.msra.mxu0 0
      %1499 = vmatpush.bf16.msra.mxu0 0
      %1500 = vmatpush.bf16.msra.mxu0 0
      %1501 = vmatpush.bf16.msra.mxu0 0
      %1502 = vmatpush.bf16.msra.mxu0 0
      %1503 = vmatpush.bf16.msra.mxu0 0
      %1504 = vmatpush.bf16.msra.mxu0 %v1495
      %1505 = vmatmul.bf16.gmra.mxu0 %v1492
      %v1506 = vpop.f32.mrf.mxu0
      %v1507 = vadd.f32 0.0, %v1506
      %v1508 = vpop.f32.mrf.mxu0
      %1509 = vdwg.mxu0
      %1510 = vst.msk [vmem:[#allocation2 + $0x5] sm:$0x1f] %vm1241, %v1507
      %1511 = vrot.lane.b32.xlu0 %v1443, 96
      %v1512 = vpop.permute.xlu0 %1511
      %1513 = vrot.lane.b32.xlu0 %v1451, 96
      %v1514 = vpop.permute.xlu0 %1513
      %v1516 = vsel %vm1185, %v1512, 0
      %v1519 = vsel %vm1185, %v1514, 0
      %1521 = vmatpush.bf16.xpose.msra.mxu0 0
      %1522 = vmatpush.bf16.xpose.msra.mxu0 0
      %1523 = vmatpush.bf16.xpose.msra.mxu0 0
      %1524 = vmatpush.bf16.xpose.msra.mxu0 0
      %1525 = vmatpush.bf16.xpose.msra.mxu0 0
      %1526 = vmatpush.bf16.xpose.msra.mxu0 0
      %1527 = vmatpush.bf16.xpose.msra.mxu0 0
      %1528 = vmatpush.bf16.xpose.msra.mxu0 %v1519
      %1529 = vmatmul.bf16.gmra.mxu0 %v1516
      %v1530 = vpop.f32.mrf.mxu0
      %v1531 = vadd.f32 0.0, %v1530
      %v1532 = vpop.f32.mrf.mxu0
      %1533 = vdwg.mxu0
      %v1534 = vsel %vm1205, %v1531, -inf
      %1535 = vmax.xlane.f32.xlu0 %v1534
      %v1536 = vpop.xlane.xlu0 %1535
      %v1537 = vsub.f32 %v1531, %v1536
      %v1538 = vmul.f32 %v1537, 1.442695
      %v1539 = vpow.pop %v1538
      %v1540 = vsel %vm1205, %v1539, 0.0
      %1541 = vadd.xlane.f32.xlu0 %v1540
      %v1542 = vpop.xlane.xlu0 %1541
      %v1543 = vrcp.pop %v1542
      %v1544 = vmul.f32 %v1539, %v1543
      %v1545 = vpack.c.bf16 %v1544, %v1544
      %1546 = vrot.lane.b32.xlu0 %v1490, 96
      %v1547 = vpop.permute.xlu0 %1546
      %v1549 = vsel %vm1218, %v1545, 0
      %v1552 = vand.u32 %v1547, %v1224
      %1554 = vmatpush.bf16.msra.mxu0 0
      %1555 = vmatpush.bf16.msra.mxu0 0
      %1556 = vmatpush.bf16.msra.mxu0 0
      %1557 = vmatpush.bf16.msra.mxu0 0
      %1558 = vmatpush.bf16.msra.mxu0 0
      %1559 = vmatpush.bf16.msra.mxu0 0
      %1560 = vmatpush.bf16.msra.mxu0 0
      %1561 = vmatpush.bf16.msra.mxu0 %v1552
      %1562 = vmatmul.bf16.gmra.mxu0 %v1549
      %v1563 = vpop.f32.mrf.mxu0
      %v1564 = vadd.f32 0.0, %v1563
      %v1565 = vpop.f32.mrf.mxu0
      %1566 = vdwg.mxu0
      %1568 = vrot.lane.b32.xlu0 %v1564, 32
      %v1569 = vpop.permute.xlu0 %1568
      %1571 = vst.msk [vmem:[#allocation2 + $0x5] sm:$0x1f] %vm1306, %v1569
      %1572 = vrot.lane.b32.xlu0 %v1443, 64
      %v1573 = vpop.permute.xlu0 %1572
      %1574 = vrot.lane.b32.xlu0 %v1451, 64
      %v1575 = vpop.permute.xlu0 %1574
      %v1577 = vsel %vm1185, %v1573, 0
      %v1580 = vsel %vm1185, %v1575, 0
      %1582 = vmatpush.bf16.xpose.msra.mxu0 0
      %1583 = vmatpush.bf16.xpose.msra.mxu0 0
      %1584 = vmatpush.bf16.xpose.msra.mxu0 0
      %1585 = vmatpush.bf16.xpose.msra.mxu0 0
      %1586 = vmatpush.bf16.xpose.msra.mxu0 0
      %1587 = vmatpush.bf16.xpose.msra.mxu0 0
      %1588 = vmatpush.bf16.xpose.msra.mxu0 0
      %1589 = vmatpush.bf16.xpose.msra.mxu0 %v1580
      %1590 = vmatmul.bf16.gmra.mxu0 %v1577
      %v1591 = vpop.f32.mrf.mxu0
      %v1592 = vadd.f32 0.0, %v1591
      %v1593 = vpop.f32.mrf.mxu0
      %1594 = vdwg.mxu0
      %v1595 = vsel %vm1205, %v1592, -inf
      %1596 = vmax.xlane.f32.xlu0 %v1595
      %v1597 = vpop.xlane.xlu0 %1596
      %v1598 = vsub.f32 %v1592, %v1597
      %v1599 = vmul.f32 %v1598, 1.442695
      %v1600 = vpow.pop %v1599
      %v1601 = vsel %vm1205, %v1600, 0.0
      %1602 = vadd.xlane.f32.xlu0 %v1601
      %v1603 = vpop.xlane.xlu0 %1602
      %v1604 = vrcp.pop %v1603
      %v1605 = vmul.f32 %v1600, %v1604
      %v1606 = vpack.c.bf16 %v1605, %v1605
      %1607 = vrot.lane.b32.xlu0 %v1490, 64
      %v1608 = vpop.permute.xlu0 %1607
      %v1610 = vsel %vm1218, %v1606, 0
      %v1613 = vand.u32 %v1608, %v1224
      %1615 = vmatpush.bf16.msra.mxu0 0
      %1616 = vmatpush.bf16.msra.mxu0 0
      %1617 = vmatpush.bf16.msra.mxu0 0
      %1618 = vmatpush.bf16.msra.mxu0 0
      %1619 = vmatpush.bf16.msra.mxu0 0
      %1620 = vmatpush.bf16.msra.mxu0 0
      %1621 = vmatpush.bf16.msra.mxu0 0
      %1622 = vmatpush.bf16.msra.mxu0 %v1613
      %1623 = vmatmul.bf16.gmra.mxu0 %v1610
      %v1624 = vpop.f32.mrf.mxu0
      %v1625 = vadd.f32 0.0, %v1624
      %v1626 = vpop.f32.mrf.mxu0
      %1627 = vdwg.mxu0
      %1629 = vrot.lane.b32.xlu0 %v1625, 64
      %v1630 = vpop.permute.xlu0 %1629
      %1632 = vst.msk [vmem:[#allocation2 + $0x5] sm:$0x1f] %vm1368, %v1630
      %1633 = vrot.lane.b32.xlu0 %v1443, 32
      %v1634 = vpop.permute.xlu0 %1633
      %1635 = vrot.lane.b32.xlu0 %v1451, 32
      %v1636 = vpop.permute.xlu0 %1635
      %v1638 = vsel %vm1185, %v1634, 0
      %v1641 = vsel %vm1185, %v1636, 0
      %1643 = vmatpush.bf16.xpose.msra.mxu0 0
      %1644 = vmatpush.bf16.xpose.msra.mxu0 0
      %1645 = vmatpush.bf16.xpose.msra.mxu0 0
      %1646 = vmatpush.bf16.xpose.msra.mxu0 0
      %1647 = vmatpush.bf16.xpose.msra.mxu0 0
      %1648 = vmatpush.bf16.xpose.msra.mxu0 0
      %1649 = vmatpush.bf16.xpose.msra.mxu0 0
      %1650 = vmatpush.bf16.xpose.msra.mxu0 %v1641
      %1651 = vmatmul.bf16.gmra.mxu0 %v1638
      %v1652 = vpop.f32.mrf.mxu0
      %v1653 = vadd.f32 0.0, %v1652
      %v1654 = vpop.f32.mrf.mxu0
      %1655 = vdwg.mxu0
      %v1656 = vsel %vm1205, %v1653, -inf
      %1657 = vmax.xlane.f32.xlu0 %v1656
      %v1658 = vpop.xlane.xlu0 %1657
      %v1659 = vsub.f32 %v1653, %v1658
      %v1660 = vmul.f32 %v1659, 1.442695
      %v1661 = vpow.pop %v1660
      %v1662 = vsel %vm1205, %v1661, 0.0
      %1663 = vadd.xlane.f32.xlu0 %v1662
      %v1664 = vpop.xlane.xlu0 %1663
      %v1665 = vrcp.pop %v1664
      %v1666 = vmul.f32 %v1661, %v1665
      %v1667 = vpack.c.bf16 %v1666, %v1666
      %1668 = vrot.lane.b32.xlu0 %v1490, 32
      %v1669 = vpop.permute.xlu0 %1668
      %v1671 = vsel %vm1218, %v1667, 0
      %v1674 = vand.u32 %v1669, %v1224
      %1676 = vmatpush.bf16.msra.mxu0 0
      %1677 = vmatpush.bf16.msra.mxu0 0
      %1678 = vmatpush.bf16.msra.mxu0 0
      %1679 = vmatpush.bf16.msra.mxu0 0
      %1680 = vmatpush.bf16.msra.mxu0 0
      %1681 = vmatpush.bf16.msra.mxu0 0
      %1682 = vmatpush.bf16.msra.mxu0 0
      %1683 = vmatpush.bf16.msra.mxu0 %v1674
      %1684 = vmatmul.bf16.gmra.mxu0 %v1671
      %v1685 = vpop.f32.mrf.mxu0
      %v1686 = vadd.f32 0.0, %v1685
      %v1687 = vpop.f32.mrf.mxu0
      %1688 = vdwg.mxu0
      %1690 = vrot.lane.b32.xlu0 %v1686, 96
      %v1691 = vpop.permute.xlu0 %1690
      %1693 = vst.msk [vmem:[#allocation2 + $0x5] sm:$0x1f] %vm1430, %v1691
      %v1694 = vld [vmem:[#allocation2] sm:$0xff]
      %v1695 = vld [vmem:[#allocation2 + $0x8] sm:$0x3]
      %v1696 = vpack.c.bf16 %v1695, %v1694
      %v1697 = vld [vmem:[%s727] sm:$0xf]
      %v1698 = vld [vmem:[%s727 + $0x4] sm:$0xf]
      %v1699 = vld [vmem:[%s727 + $0x8] sm:$0xf]
      %v1700 = vld [vmem:[%s727 + $0xc] sm:$0xf]
      %v1701 = vld [vmem:[%s727 + $0x10] sm:$0xf]
      %v1702 = vld [vmem:[%s727 + $0x14] sm:$0xf]
      %v1703 = vld [vmem:[%s727 + $0x18] sm:$0xf]
      %v1704 = vld [vmem:[%s727 + $0x1c] sm:$0xf]
      %v1705 = vld [vmem:[%s727 + $0x20] sm:$0xf]
      %v1706 = vld [vmem:[%s727 + $0x24] sm:$0xf]
      %v1707 = vld [vmem:[%s727 + $0x28] sm:$0xf]
      %v1708 = vld [vmem:[%s727 + $0x2c] sm:$0xf]
      %v1709 = vld [vmem:[%s727 + $0x30] sm:$0xf]
      %v1710 = vld [vmem:[%s727 + $0x34] sm:$0xf]
      %v1711 = vld [vmem:[%s727 + $0x38] sm:$0xf]
      %v1712 = vld [vmem:[%s727 + $0x3c] sm:$0xf]
      %v1729 = vunpack.c.l.b16 %v1697
      %v1730 = vunpack.c.l.b16 %v1698
      %v1731 = vunpack.c.l.b16 %v1699
      %v1732 = vunpack.c.l.b16 %v1700
      %v1733 = vunpack.c.l.b16 %v1701
      %v1734 = vunpack.c.l.b16 %v1702
      %v1735 = vunpack.c.l.b16 %v1703
      %v1736 = vunpack.c.l.b16 %v1704
      %v1737 = vunpack.c.l.b16 %v1705
      %v1738 = vunpack.c.l.b16 %v1706
      %v1739 = vunpack.c.l.b16 %v1707
      %v1740 = vunpack.c.l.b16 %v1708
      %v1741 = vunpack.c.l.b16 %v1709
      %v1742 = vunpack.c.l.b16 %v1710
      %v1743 = vunpack.c.l.b16 %v1711
      %v1744 = vunpack.c.l.b16 %v1712
      %v1745 = vpack.c.b16 %v1730, %v1729
      %v1746 = vpack.c.b16 %v1732, %v1731
      %v1747 = vpack.c.b16 %v1734, %v1733
      %v1748 = vpack.c.b16 %v1736, %v1735
      %v1749 = vpack.c.b16 %v1738, %v1737
      %v1750 = vpack.c.b16 %v1740, %v1739
      %v1751 = vpack.c.b16 %v1742, %v1741
      %v1752 = vpack.c.b16 %v1744, %v1743
      %1761 = vmatpush.bf16.msra.mxu0 %v1752
      %1762 = vmatpush.bf16.msra.mxu0 %v1751
      %1763 = vmatpush.bf16.msra.mxu0 %v1750
      %1764 = vmatpush.bf16.msra.mxu0 %v1749
      %1765 = vmatpush.bf16.msra.mxu0 %v1748
      %1766 = vmatpush.bf16.msra.mxu0 %v1747
      %1767 = vmatpush.bf16.msra.mxu0 %v1746
      %1768 = vmatpush.bf16.msra.mxu0 %v1745
      %1769 = vmatmul.bf16.gmra.mxu0 %v1696
      %v1770 = vpop.f32.mrf.mxu0
      %v1771 = vadd.f32 0.0, %v1770
      %v1772 = vpop.f32.mrf.mxu0
      %v1773 = vadd.f32 0.0, %v1772
      %1774 = vdwg.mxu0
      %v1775 = vadd.f32 %v906, %v1771
      %v1776 = vadd.f32 %v907, %v1773
      %v1777 = vld [vmem:[%s730] sm:$0x1]
      %v1779 = vperm.slane %v1777, 0
      %v1781 = vadd.f32 %v1775, %v1779
      %v1782 = vadd.f32 %v1776, %v1779
      %v1783 = vld [vmem:[%s733] sm:$0x1]
      %v1784 = vld [vmem:[%s736] sm:$0x1]
      %1785 = vadd.xlane.f32.xlu0 %v1781
      %v1786 = vpop.xlane.xlu0 %1785
      %v1787 = vsel %vm912, %v1782, 0.0
      %1788 = vadd.xlane.f32.xlu0 %v1787
      %v1789 = vpop.xlane.xlu0 %1788
      %v1790 = vmul.f32 %v1786, %v922
      %v1791 = vmul.f32 %v1789, %v922
      %v1792 = vsub.f32 %v1781, %v1790
      %v1793 = vsub.f32 %v1782, %v1791
      %v1794 = vmul.f32 %v1792, %v1792
      %v1795 = vmul.f32 %v1793, %v1793
      %1796 = vadd.xlane.f32.xlu0 %v1794
      %v1797 = vpop.xlane.xlu0 %1796
      %v1798 = vsel %vm912, %v1795, 0.0
      %1799 = vadd.xlane.f32.xlu0 %v1798
      %v1800 = vpop.xlane.xlu0 %1799
      %v1801 = vmul.f32 %v1797, %v922
      %v1802 = vmul.f32 %v1800, %v922
      %v1803 = vadd.f32 %v1801, 1e-12
      %v1804 = vadd.f32 %v1802, 1e-12
      %v1805 = vrsqrt.pop %v1803
      %v1806 = vmul.f32 %v1805, %v1803
      %v1807 = vmul.f32 %v1806, %v1805
      %v1808 = vmul.f32 0.5, %v1807
      %v1809 = vsub.f32 1.5, %v1808
      %v1810 = vmul.f32 %v1805, %v1809
      %vm1811 = vweird.f32 %v1803
      %vm1812 = vweird.f32 %v1805
      %vm1813 = vmor %vm1811, %vm1812
      %v1814 = vsel %vm1813, %v1805, %v1810
      %v1815 = vrsqrt.pop %v1804
      %v1816 = vmul.f32 %v1815, %v1804
      %v1817 = vmul.f32 %v1816, %v1815
      %v1818 = vmul.f32 0.5, %v1817
      %v1819 = vsub.f32 1.5, %v1818
      %v1820 = vmul.f32 %v1815, %v1819
      %vm1821 = vweird.f32 %v1804
      %vm1822 = vweird.f32 %v1815
      %vm1823 = vmor %vm1821, %vm1822
      %v1824 = vsel %vm1823, %v1815, %v1820
      %v1825 = vmul.f32 %v1792, %v1814
      %v1826 = vmul.f32 %v1793, %v1824
      %v1828 = vperm.slane %v1783, 0
      %v1830 = vmul.f32 %v1825, %v1828
      %v1831 = vmul.f32 %v1826, %v1828
      %v1833 = vperm.slane %v1784, 0
      %v1835 = vadd.f32 %v1830, %v1833
      %v1836 = vadd.f32 %v1831, %v1833
      %v1837 = vpack.c.bf16 %v1836, %v1835
      %v1838 = vld [vmem:[%s741] sm:$0xff]
      %v1839 = vld [vmem:[%s741 + $0x8] sm:$0xff]
      %v1840 = vld [vmem:[%s741 + $0x10] sm:$0xff]
      %v1841 = vld [vmem:[%s741 + $0x18] sm:$0xff]
      %v1842 = vld [vmem:[%s741 + $0x20] sm:$0xff]
      %v1843 = vld [vmem:[%s741 + $0x28] sm:$0xff]
      %v1844 = vld [vmem:[%s741 + $0x30] sm:$0xff]
      %v1845 = vld [vmem:[%s741 + $0x38] sm:$0xff]
      %v1846 = vld [vmem:[%s741 + $0x40] sm:$0xff]
      %v1847 = vld [vmem:[%s741 + $0x48] sm:$0xff]
      %v1848 = vld [vmem:[%s741 + $0x50] sm:$0xff]
      %v1849 = vld [vmem:[%s741 + $0x58] sm:$0xff]
      %v1850 = vld [vmem:[%s741 + $0x60] sm:$0xff]
      %v1851 = vld [vmem:[%s741 + $0x68] sm:$0xff]
      %v1852 = vld [vmem:[%s741 + $0x70] sm:$0xff]
      %v1853 = vld [vmem:[%s741 + $0x78] sm:$0xff]
      %v1854 = vld [vmem:[%s741 + $0x80] sm:$0xff]
      %v1855 = vld [vmem:[%s741 + $0x88] sm:$0xff]
      %v1856 = vld [vmem:[%s741 + $0x90] sm:$0xff]
      %v1857 = vld [vmem:[%s741 + $0x98] sm:$0xff]
      %v1858 = vld [vmem:[%s741 + $0xa0] sm:$0xff]
      %v1859 = vld [vmem:[%s741 + $0xa8] sm:$0xff]
      %v1860 = vld [vmem:[%s741 + $0xb0] sm:$0xff]
      %v1861 = vld [vmem:[%s741 + $0xb8] sm:$0xff]
      %v1862 = vld [vmem:[%s741 + $0xc0] sm:$0xff]
      %v1863 = vld [vmem:[%s741 + $0xc8] sm:$0xff]
      %v1864 = vld [vmem:[%s741 + $0xd0] sm:$0xff]
      %v1865 = vld [vmem:[%s741 + $0xd8] sm:$0xff]
      %v1866 = vld [vmem:[%s741 + $0xe0] sm:$0xff]
      %v1867 = vld [vmem:[%s741 + $0xe8] sm:$0xff]
      %v1868 = vld [vmem:[%s741 + $0xf0] sm:$0xff]
      %v1869 = vld [vmem:[%s741 + $0xf8] sm:$0xff]
      %v1870 = vld [vmem:[%s745] sm:$0xf]
      %v1872 = vperm.slane %v1870, 0
      %v1873 = vperm.slane %v1870, 1
      %v1874 = vperm.slane %v1870, 2
      %v1875 = vperm.slane %v1870, 3
      %v1912 = vunpack.c.l.b16 %v1838
      %v1913 = vunpack.c.h.b16 %v1838
      %v1914 = vunpack.c.l.b16 %v1839
      %v1915 = vunpack.c.h.b16 %v1839
      %v1916 = vunpack.c.l.b16 %v1840
      %v1917 = vunpack.c.h.b16 %v1840
      %v1918 = vunpack.c.l.b16 %v1841
      %v1919 = vunpack.c.h.b16 %v1841
      %v1920 = vunpack.c.l.b16 %v1842
      %v1921 = vunpack.c.h.b16 %v1842
      %v1922 = vunpack.c.l.b16 %v1843
      %v1923 = vunpack.c.h.b16 %v1843
      %v1924 = vunpack.c.l.b16 %v1844
      %v1925 = vunpack.c.h.b16 %v1844
      %v1926 = vunpack.c.l.b16 %v1845
      %v1927 = vunpack.c.h.b16 %v1845
      %v1928 = vunpack.c.l.b16 %v1846
      %v1929 = vunpack.c.h.b16 %v1846
      %v1930 = vunpack.c.l.b16 %v1847
      %v1931 = vunpack.c.h.b16 %v1847
      %v1932 = vunpack.c.l.b16 %v1848
      %v1933 = vunpack.c.h.b16 %v1848
      %v1934 = vunpack.c.l.b16 %v1849
      %v1935 = vunpack.c.h.b16 %v1849
      %v1936 = vunpack.c.l.b16 %v1850
      %v1937 = vunpack.c.h.b16 %v1850
      %v1938 = vunpack.c.l.b16 %v1851
      %v1939 = vunpack.c.h.b16 %v1851
      %v1940 = vunpack.c.l.b16 %v1852
      %v1941 = vunpack.c.h.b16 %v1852
      %v1942 = vunpack.c.l.b16 %v1853
      %v1943 = vunpack.c.h.b16 %v1853
      %v1944 = vunpack.c.l.b16 %v1854
      %v1945 = vunpack.c.h.b16 %v1854
      %v1946 = vunpack.c.l.b16 %v1855
      %v1947 = vunpack.c.h.b16 %v1855
      %v1948 = vunpack.c.l.b16 %v1856
      %v1949 = vunpack.c.h.b16 %v1856
      %v1950 = vunpack.c.l.b16 %v1857
      %v1951 = vunpack.c.h.b16 %v1857
      %v1952 = vunpack.c.l.b16 %v1858
      %v1953 = vunpack.c.h.b16 %v1858
      %v1954 = vunpack.c.l.b16 %v1859
      %v1955 = vunpack.c.h.b16 %v1859
      %v1956 = vunpack.c.l.b16 %v1860
      %v1957 = vunpack.c.h.b16 %v1860
      %v1958 = vunpack.c.l.b16 %v1861
      %v1959 = vunpack.c.h.b16 %v1861
      %v1960 = vunpack.c.l.b16 %v1862
      %v1961 = vunpack.c.h.b16 %v1862
      %v1962 = vunpack.c.l.b16 %v1863
      %v1963 = vunpack.c.h.b16 %v1863
      %v1964 = vunpack.c.l.b16 %v1864
      %v1965 = vunpack.c.h.b16 %v1864
      %v1966 = vunpack.c.l.b16 %v1865
      %v1967 = vunpack.c.h.b16 %v1865
      %v1968 = vunpack.c.l.b16 %v1866
      %v1969 = vunpack.c.h.b16 %v1866
      %v1970 = vunpack.c.l.b16 %v1867
      %v1971 = vunpack.c.h.b16 %v1867
      %v1972 = vunpack.c.l.b16 %v1868
      %v1973 = vunpack.c.h.b16 %v1868
      %v1974 = vunpack.c.l.b16 %v1869
      %v1975 = vunpack.c.h.b16 %v1869
      %v1976 = vpack.c.b16 %v1916, %v1912
      %v1977 = vpack.c.b16 %v1917, %v1913
      %v1978 = vpack.c.b16 %v1918, %v1914
      %v1979 = vpack.c.b16 %v1919, %v1915
      %v1980 = vpack.c.b16 %v1924, %v1920
      %v1981 = vpack.c.b16 %v1925, %v1921
      %v1982 = vpack.c.b16 %v1926, %v1922
      %v1983 = vpack.c.b16 %v1927, %v1923
      %v1984 = vpack.c.b16 %v1932, %v1928
      %v1985 = vpack.c.b16 %v1933, %v1929
      %v1986 = vpack.c.b16 %v1934, %v1930
      %v1987 = vpack.c.b16 %v1935, %v1931
      %v1988 = vpack.c.b16 %v1940, %v1936
      %v1989 = vpack.c.b16 %v1941, %v1937
      %v1990 = vpack.c.b16 %v1942, %v1938
      %v1991 = vpack.c.b16 %v1943, %v1939
      %v1992 = vpack.c.b16 %v1948, %v1944
      %v1993 = vpack.c.b16 %v1949, %v1945
      %v1994 = vpack.c.b16 %v1950, %v1946
      %v1995 = vpack.c.b16 %v1951, %v1947
      %v1996 = vpack.c.b16 %v1956, %v1952
      %v1997 = vpack.c.b16 %v1957, %v1953
      %v1998 = vpack.c.b16 %v1958, %v1954
      %v1999 = vpack.c.b16 %v1959, %v1955
      %v2000 = vpack.c.b16 %v1964, %v1960
      %v2001 = vpack.c.b16 %v1965, %v1961
      %v2002 = vpack.c.b16 %v1966, %v1962
      %v2003 = vpack.c.b16 %v1967, %v1963
      %v2004 = vpack.c.b16 %v1972, %v1968
      %v2005 = vpack.c.b16 %v1973, %v1969
      %v2006 = vpack.c.b16 %v1974, %v1970
      %v2007 = vpack.c.b16 %v1975, %v1971
      %2040 = vmatpush.bf16.msra.mxu0 %v2004
      %2041 = vmatpush.bf16.msra.mxu0 %v2000
      %2042 = vmatpush.bf16.msra.mxu0 %v1996
      %2043 = vmatpush.bf16.msra.mxu0 %v1992
      %2044 = vmatpush.bf16.msra.mxu0 %v1988
      %2045 = vmatpush.bf16.msra.mxu0 %v1984
      %2046 = vmatpush.bf16.msra.mxu0 %v1980
      %2047 = vmatpush.bf16.msra.mxu0 %v1976
      %2048 = vmatmul.bf16.gmra.mxu0 %v1837
      %v2049 = vpop.f32.mrf.mxu0
      %v2050 = vadd.f32 %v1872, %v2049
      %v2051 = vpop.f32.mrf.mxu0
      %v2052 = vadd.f32 %v1872, %v2051
      %2053 = vdwg.mxu0
      %2054 = vmatpush.bf16.msra.mxu0 %v2005
      %2055 = vmatpush.bf16.msra.mxu0 %v2001
      %2056 = vmatpush.bf16.msra.mxu0 %v1997
      %2057 = vmatpush.bf16.msra.mxu0 %v1993
      %2058 = vmatpush.bf16.msra.mxu0 %v1989
      %2059 = vmatpush.bf16.msra.mxu0 %v1985
      %2060 = vmatpush.bf16.msra.mxu0 %v1981
      %2061 = vmatpush.bf16.msra.mxu0 %v1977
      %2062 = vmatmul.bf16.gmra.mxu0 %v1837
      %v2063 = vpop.f32.mrf.mxu0
      %v2064 = vadd.f32 %v1873, %v2063
      %v2065 = vpop.f32.mrf.mxu0
      %v2066 = vadd.f32 %v1873, %v2065
      %2067 = vdwg.mxu0
      %2068 = vmatpush.bf16.msra.mxu0 %v2006
      %2069 = vmatpush.bf16.msra.mxu0 %v2002
      %2070 = vmatpush.bf16.msra.mxu0 %v1998
      %2071 = vmatpush.bf16.msra.mxu0 %v1994
      %2072 = vmatpush.bf16.msra.mxu0 %v1990
      %2073 = vmatpush.bf16.msra.mxu0 %v1986
      %2074 = vmatpush.bf16.msra.mxu0 %v1982
      %2075 = vmatpush.bf16.msra.mxu0 %v1978
      %2076 = vmatmul.bf16.gmra.mxu0 %v1837
      %v2077 = vpop.f32.mrf.mxu0
      %v2078 = vadd.f32 %v1874, %v2077
      %v2079 = vpop.f32.mrf.mxu0
      %v2080 = vadd.f32 %v1874, %v2079
      %2081 = vdwg.mxu0
      %2082 = vmatpush.bf16.msra.mxu0 %v2007
      %2083 = vmatpush.bf16.msra.mxu0 %v2003
      %2084 = vmatpush.bf16.msra.mxu0 %v1999
      %2085 = vmatpush.bf16.msra.mxu0 %v1995
      %2086 = vmatpush.bf16.msra.mxu0 %v1991
      %2087 = vmatpush.bf16.msra.mxu0 %v1987
      %2088 = vmatpush.bf16.msra.mxu0 %v1983
      %2089 = vmatpush.bf16.msra.mxu0 %v1979
      %2090 = vmatmul.bf16.gmra.mxu0 %v1837
      %v2091 = vpop.f32.mrf.mxu0
      %v2092 = vadd.f32 %v1875, %v2091
      %v2093 = vpop.f32.mrf.mxu0
      %v2094 = vadd.f32 %v1875, %v2093
      %2095 = vdwg.mxu0
      %v2096 = vmul.f32 %v2050, %v2050
      %v2097 = vmul.f32 %v2064, %v2064
      %v2098 = vmul.f32 %v2078, %v2078
      %v2099 = vmul.f32 %v2092, %v2092
      %v2100 = vmul.f32 %v2052, %v2052
      %v2101 = vmul.f32 %v2066, %v2066
      %v2102 = vmul.f32 %v2080, %v2080
      %v2103 = vmul.f32 %v2094, %v2094
      %v2104 = vmul.f32 %v2050, %v2096
      %v2105 = vmul.f32 %v2064, %v2097
      %v2106 = vmul.f32 %v2078, %v2098
      %v2107 = vmul.f32 %v2092, %v2099
      %v2108 = vmul.f32 %v2052, %v2100
      %v2109 = vmul.f32 %v2066, %v2101
      %v2110 = vmul.f32 %v2080, %v2102
      %v2111 = vmul.f32 %v2094, %v2103
      %v2112 = vmul.f32 %v2104, 0.044715
      %v2113 = vmul.f32 %v2105, 0.044715
      %v2114 = vmul.f32 %v2106, 0.044715
      %v2115 = vmul.f32 %v2107, 0.044715
      %v2116 = vmul.f32 %v2108, 0.044715
      %v2117 = vmul.f32 %v2109, 0.044715
      %v2118 = vmul.f32 %v2110, 0.044715
      %v2119 = vmul.f32 %v2111, 0.044715
      %v2120 = vadd.f32 %v2050, %v2112
      %v2121 = vadd.f32 %v2064, %v2113
      %v2122 = vadd.f32 %v2078, %v2114
      %v2123 = vadd.f32 %v2092, %v2115
      %v2124 = vadd.f32 %v2052, %v2116
      %v2125 = vadd.f32 %v2066, %v2117
      %v2126 = vadd.f32 %v2080, %v2118
      %v2127 = vadd.f32 %v2094, %v2119
      %v2128 = vmul.f32 %v2120, 0.7978846
      %v2129 = vmul.f32 %v2121, 0.7978846
      %v2130 = vmul.f32 %v2122, 0.7978846
      %v2131 = vmul.f32 %v2123, 0.7978846
      %v2132 = vmul.f32 %v2124, 0.7978846
      %v2133 = vmul.f32 %v2125, 0.7978846
      %v2134 = vmul.f32 %v2126, 0.7978846
      %v2135 = vmul.f32 %v2127, 0.7978846
      %v2136 = vtanh.pop %v2128
      %v2137 = vtanh.pop %v2129
      %v2138 = vtanh.pop %v2130
      %v2139 = vtanh.pop %v2131
      %v2140 = vtanh.pop %v2132
      %v2141 = vtanh.pop %v2133
      %v2142 = vtanh.pop %v2134
      %v2143 = vtanh.pop %v2135
      %v2144 = vadd.f32 %v2136, 1.0
      %v2145 = vadd.f32 %v2137, 1.0
      %v2146 = vadd.f32 %v2138, 1.0
      %v2147 = vadd.f32 %v2139, 1.0
      %v2148 = vadd.f32 %v2140, 1.0
      %v2149 = vadd.f32 %v2141, 1.0
      %v2150 = vadd.f32 %v2142, 1.0
      %v2151 = vadd.f32 %v2143, 1.0
      %v2152 = vmul.f32 %v2144, 0.5
      %v2153 = vmul.f32 %v2145, 0.5
      %v2154 = vmul.f32 %v2146, 0.5
      %v2155 = vmul.f32 %v2147, 0.5
      %v2156 = vmul.f32 %v2148, 0.5
      %v2157 = vmul.f32 %v2149, 0.5
      %v2158 = vmul.f32 %v2150, 0.5
      %v2159 = vmul.f32 %v2151, 0.5
      %v2160 = vmul.f32 %v2050, %v2152
      %v2161 = vmul.f32 %v2064, %v2153
      %v2162 = vmul.f32 %v2078, %v2154
      %v2163 = vmul.f32 %v2092, %v2155
      %v2164 = vmul.f32 %v2052, %v2156
      %v2165 = vmul.f32 %v2066, %v2157
      %v2166 = vmul.f32 %v2080, %v2158
      %v2167 = vmul.f32 %v2094, %v2159
      %v2168 = vpack.c.bf16 %v2164, %v2160
      %v2169 = vpack.c.bf16 %v2165, %v2161
      %v2170 = vpack.c.bf16 %v2166, %v2162
      %v2171 = vpack.c.bf16 %v2167, %v2163
      %v2172 = vld [vmem:[%s750] sm:$0xf]
      %v2173 = vld [vmem:[%s750 + $0x4] sm:$0xf]
      %v2174 = vld [vmem:[%s750 + $0x8] sm:$0xf]
      %v2175 = vld [vmem:[%s750 + $0xc] sm:$0xf]
      %v2176 = vld [vmem:[%s750 + $0x10] sm:$0xf]
      %v2177 = vld [vmem:[%s750 + $0x14] sm:$0xf]
      %v2178 = vld [vmem:[%s750 + $0x18] sm:$0xf]
      %v2179 = vld [vmem:[%s750 + $0x1c] sm:$0xf]
      %v2180 = vld [vmem:[%s750 + $0x20] sm:$0xf]
      %v2181 = vld [vmem:[%s750 + $0x24] sm:$0xf]
      %v2182 = vld [vmem:[%s750 + $0x28] sm:$0xf]
      %v2183 = vld [vmem:[%s750 + $0x2c] sm:$0xf]
      %v2184 = vld [vmem:[%s750 + $0x30] sm:$0xf]
      %v2185 = vld [vmem:[%s750 + $0x34] sm:$0xf]
      %v2186 = vld [vmem:[%s750 + $0x38] sm:$0xf]
      %v2187 = vld [vmem:[%s750 + $0x3c] sm:$0xf]
      %v2188 = vld [vmem:[%s750 + $0x40] sm:$0xf]
      %v2189 = vld [vmem:[%s750 + $0x44] sm:$0xf]
      %v2190 = vld [vmem:[%s750 + $0x48] sm:$0xf]
      %v2191 = vld [vmem:[%s750 + $0x4c] sm:$0xf]
      %v2192 = vld [vmem:[%s750 + $0x50] sm:$0xf]
      %v2193 = vld [vmem:[%s750 + $0x54] sm:$0xf]
      %v2194 = vld [vmem:[%s750 + $0x58] sm:$0xf]
      %v2195 = vld [vmem:[%s750 + $0x5c] sm:$0xf]
      %v2196 = vld [vmem:[%s750 + $0x60] sm:$0xf]
      %v2197 = vld [vmem:[%s750 + $0x64] sm:$0xf]
      %v2198 = vld [vmem:[%s750 + $0x68] sm:$0xf]
      %v2199 = vld [vmem:[%s750 + $0x6c] sm:$0xf]
      %v2200 = vld [vmem:[%s750 + $0x70] sm:$0xf]
      %v2201 = vld [vmem:[%s750 + $0x74] sm:$0xf]
      %v2202 = vld [vmem:[%s750 + $0x78] sm:$0xf]
      %v2203 = vld [vmem:[%s750 + $0x7c] sm:$0xf]
      %v2204 = vld [vmem:[%s750 + $0x80] sm:$0xf]
      %v2205 = vld [vmem:[%s750 + $0x84] sm:$0xf]
      %v2206 = vld [vmem:[%s750 + $0x88] sm:$0xf]
      %v2207 = vld [vmem:[%s750 + $0x8c] sm:$0xf]
      %v2208 = vld [vmem:[%s750 + $0x90] sm:$0xf]
      %v2209 = vld [vmem:[%s750 + $0x94] sm:$0xf]
      %v2210 = vld [vmem:[%s750 + $0x98] sm:$0xf]
      %v2211 = vld [vmem:[%s750 + $0x9c] sm:$0xf]
      %v2212 = vld [vmem:[%s750 + $0xa0] sm:$0xf]
      %v2213 = vld [vmem:[%s750 + $0xa4] sm:$0xf]
      %v2214 = vld [vmem:[%s750 + $0xa8] sm:$0xf]
      %v2215 = vld [vmem:[%s750 + $0xac] sm:$0xf]
      %v2216 = vld [vmem:[%s750 + $0xb0] sm:$0xf]
      %v2217 = vld [vmem:[%s750 + $0xb4] sm:$0xf]
      %v2218 = vld [vmem:[%s750 + $0xb8] sm:$0xf]
      %v2219 = vld [vmem:[%s750 + $0xbc] sm:$0xf]
      %v2220 = vld [vmem:[%s750 + $0xc0] sm:$0xf]
      %v2221 = vld [vmem:[%s750 + $0xc4] sm:$0xf]
      %v2222 = vld [vmem:[%s750 + $0xc8] sm:$0xf]
      %v2223 = vld [vmem:[%s750 + $0xcc] sm:$0xf]
      %v2224 = vld [vmem:[%s750 + $0xd0] sm:$0xf]
      %v2225 = vld [vmem:[%s750 + $0xd4] sm:$0xf]
      %v2226 = vld [vmem:[%s750 + $0xd8] sm:$0xf]
      %v2227 = vld [vmem:[%s750 + $0xdc] sm:$0xf]
      %v2228 = vld [vmem:[%s750 + $0xe0] sm:$0xf]
      %v2229 = vld [vmem:[%s750 + $0xe4] sm:$0xf]
      %v2230 = vld [vmem:[%s750 + $0xe8] sm:$0xf]
      %v2231 = vld [vmem:[%s750 + $0xec] sm:$0xf]
      %v2232 = vld [vmem:[%s750 + $0xf0] sm:$0xf]
      %v2233 = vld [vmem:[%s750 + $0xf4] sm:$0xf]
      %v2234 = vld [vmem:[%s750 + $0xf8] sm:$0xf]
      %v2235 = vld [vmem:[%s750 + $0xfc] sm:$0xf]
      %v2236 = vld [vmem:[%s753] sm:$0x1]
      %v2238 = vperm.slane %v2236, 0
      %v2304 = vunpack.c.l.b16 %v2172
      %v2305 = vunpack.c.l.b16 %v2173
      %v2306 = vunpack.c.l.b16 %v2174
      %v2307 = vunpack.c.l.b16 %v2175
      %v2308 = vunpack.c.l.b16 %v2176
      %v2309 = vunpack.c.l.b16 %v2177
      %v2310 = vunpack.c.l.b16 %v2178
      %v2311 = vunpack.c.l.b16 %v2179
      %v2312 = vunpack.c.l.b16 %v2180
      %v2313 = vunpack.c.l.b16 %v2181
      %v2314 = vunpack.c.l.b16 %v2182
      %v2315 = vunpack.c.l.b16 %v2183
      %v2316 = vunpack.c.l.b16 %v2184
      %v2317 = vunpack.c.l.b16 %v2185
      %v2318 = vunpack.c.l.b16 %v2186
      %v2319 = vunpack.c.l.b16 %v2187
      %v2320 = vunpack.c.l.b16 %v2188
      %v2321 = vunpack.c.l.b16 %v2189
      %v2322 = vunpack.c.l.b16 %v2190
      %v2323 = vunpack.c.l.b16 %v2191
      %v2324 = vunpack.c.l.b16 %v2192
      %v2325 = vunpack.c.l.b16 %v2193
      %v2326 = vunpack.c.l.b16 %v2194
      %v2327 = vunpack.c.l.b16 %v2195
      %v2328 = vunpack.c.l.b16 %v2196
      %v2329 = vunpack.c.l.b16 %v2197
      %v2330 = vunpack.c.l.b16 %v2198
      %v2331 = vunpack.c.l.b16 %v2199
      %v2332 = vunpack.c.l.b16 %v2200
      %v2333 = vunpack.c.l.b16 %v2201
      %v2334 = vunpack.c.l.b16 %v2202
      %v2335 = vunpack.c.l.b16 %v2203
      %v2336 = vunpack.c.l.b16 %v2204
      %v2337 = vunpack.c.l.b16 %v2205
      %v2338 = vunpack.c.l.b16 %v2206
      %v2339 = vunpack.c.l.b16 %v2207
      %v2340 = vunpack.c.l.b16 %v2208
      %v2341 = vunpack.c.l.b16 %v2209
      %v2342 = vunpack.c.l.b16 %v2210
      %v2343 = vunpack.c.l.b16 %v2211
      %v2344 = vunpack.c.l.b16 %v2212
      %v2345 = vunpack.c.l.b16 %v2213
      %v2346 = vunpack.c.l.b16 %v2214
      %v2347 = vunpack.c.l.b16 %v2215
      %v2348 = vunpack.c.l.b16 %v2216
      %v2349 = vunpack.c.l.b16 %v2217
      %v2350 = vunpack.c.l.b16 %v2218
      %v2351 = vunpack.c.l.b16 %v2219
      %v2352 = vunpack.c.l.b16 %v2220
      %v2353 = vunpack.c.l.b16 %v2221
      %v2354 = vunpack.c.l.b16 %v2222
      %v2355 = vunpack.c.l.b16 %v2223
      %v2356 = vunpack.c.l.b16 %v2224
      %v2357 = vunpack.c.l.b16 %v2225
      %v2358 = vunpack.c.l.b16 %v2226
      %v2359 = vunpack.c.l.b16 %v2227
      %v2360 = vunpack.c.l.b16 %v2228
      %v2361 = vunpack.c.l.b16 %v2229
      %v2362 = vunpack.c.l.b16 %v2230
      %v2363 = vunpack.c.l.b16 %v2231
      %v2364 = vunpack.c.l.b16 %v2232
      %v2365 = vunpack.c.l.b16 %v2233
      %v2366 = vunpack.c.l.b16 %v2234
      %v2367 = vunpack.c.l.b16 %v2235
      %v2368 = vpack.c.b16 %v2305, %v2304
      %v2369 = vpack.c.b16 %v2307, %v2306
      %v2370 = vpack.c.b16 %v2309, %v2308
      %v2371 = vpack.c.b16 %v2311, %v2310
      %v2372 = vpack.c.b16 %v2313, %v2312
      %v2373 = vpack.c.b16 %v2315, %v2314
      %v2374 = vpack.c.b16 %v2317, %v2316
      %v2375 = vpack.c.b16 %v2319, %v2318
      %v2376 = vpack.c.b16 %v2321, %v2320
      %v2377 = vpack.c.b16 %v2323, %v2322
      %v2378 = vpack.c.b16 %v2325, %v2324
      %v2379 = vpack.c.b16 %v2327, %v2326
      %v2380 = vpack.c.b16 %v2329, %v2328
      %v2381 = vpack.c.b16 %v2331, %v2330
      %v2382 = vpack.c.b16 %v2333, %v2332
      %v2383 = vpack.c.b16 %v2335, %v2334
      %v2384 = vpack.c.b16 %v2337, %v2336
      %v2385 = vpack.c.b16 %v2339, %v2338
      %v2386 = vpack.c.b16 %v2341, %v2340
      %v2387 = vpack.c.b16 %v2343, %v2342
      %v2388 = vpack.c.b16 %v2345, %v2344
      %v2389 = vpack.c.b16 %v2347, %v2346
      %v2390 = vpack.c.b16 %v2349, %v2348
      %v2391 = vpack.c.b16 %v2351, %v2350
      %v2392 = vpack.c.b16 %v2353, %v2352
      %v2393 = vpack.c.b16 %v2355, %v2354
      %v2394 = vpack.c.b16 %v2357, %v2356
      %v2395 = vpack.c.b16 %v2359, %v2358
      %v2396 = vpack.c.b16 %v2361, %v2360
      %v2397 = vpack.c.b16 %v2363, %v2362
      %v2398 = vpack.c.b16 %v2365, %v2364
      %v2399 = vpack.c.b16 %v2367, %v2366
      %2432 = vmatpush.bf16.msra.mxu0 %v2375
      %2433 = vmatpush.bf16.msra.mxu0 %v2374
      %2434 = vmatpush.bf16.msra.mxu0 %v2373
      %2435 = vmatpush.bf16.msra.mxu0 %v2372
      %2436 = vmatpush.bf16.msra.mxu0 %v2371
      %2437 = vmatpush.bf16.msra.mxu0 %v2370
      %2438 = vmatpush.bf16.msra.mxu0 %v2369
      %2439 = vmatpush.bf16.msra.mxu0 %v2368
      %2440 = vmatmul.bf16.gmra.mxu0 %v2168
      %v2441 = vpop.f32.mrf.mxu0
      %v2442 = vadd.f32 %v2238, %v2441
      %v2443 = vpop.f32.mrf.mxu0
      %v2444 = vadd.f32 %v2238, %v2443
      %2445 = vdwg.mxu0
      %2446 = vmatpush.bf16.msra.mxu0 %v2383
      %2447 = vmatpush.bf16.msra.mxu0 %v2382
      %2448 = vmatpush.bf16.msra.mxu0 %v2381
      %2449 = vmatpush.bf16.msra.mxu0 %v2380
      %2450 = vmatpush.bf16.msra.mxu0 %v2379
      %2451 = vmatpush.bf16.msra.mxu0 %v2378
      %2452 = vmatpush.bf16.msra.mxu0 %v2377
      %2453 = vmatpush.bf16.msra.mxu0 %v2376
      %2454 = vmatmul.bf16.gmra.mxu0 %v2169
      %v2455 = vpop.f32.mrf.mxu0
      %v2456 = vadd.f32 %v2442, %v2455
      %v2457 = vpop.f32.mrf.mxu0
      %v2458 = vadd.f32 %v2444, %v2457
      %2459 = vdwg.mxu0
      %2460 = vmatpush.bf16.msra.mxu0 %v2391
      %2461 = vmatpush.bf16.msra.mxu0 %v2390
      %2462 = vmatpush.bf16.msra.mxu0 %v2389
      %2463 = vmatpush.bf16.msra.mxu0 %v2388
      %2464 = vmatpush.bf16.msra.mxu0 %v2387
      %2465 = vmatpush.bf16.msra.mxu0 %v2386
      %2466 = vmatpush.bf16.msra.mxu0 %v2385
      %2467 = vmatpush.bf16.msra.mxu0 %v2384
      %2468 = vmatmul.bf16.gmra.mxu0 %v2170
      %v2469 = vpop.f32.mrf.mxu0
      %v2470 = vadd.f32 %v2456, %v2469
      %v2471 = vpop.f32.mrf.mxu0
      %v2472 = vadd.f32 %v2458, %v2471
      %2473 = vdwg.mxu0
      %2474 = vmatpush.bf16.msra.mxu0 %v2399
      %2475 = vmatpush.bf16.msra.mxu0 %v2398
      %2476 = vmatpush.bf16.msra.mxu0 %v2397
      %2477 = vmatpush.bf16.msra.mxu0 %v2396
      %2478 = vmatpush.bf16.msra.mxu0 %v2395
      %2479 = vmatpush.bf16.msra.mxu0 %v2394
      %2480 = vmatpush.bf16.msra.mxu0 %v2393
      %2481 = vmatpush.bf16.msra.mxu0 %v2392
      %2482 = vmatmul.bf16.gmra.mxu0 %v2171
      %v2483 = vpop.f32.mrf.mxu0
      %v2484 = vadd.f32 %v2470, %v2483
      %v2485 = vpop.f32.mrf.mxu0
      %v2486 = vadd.f32 %v2472, %v2485
      %2487 = vdwg.mxu0
      %v2488 = vadd.f32 %v1781, %v2484
      %v2489 = vadd.f32 %v1782, %v2486
      %2490 = vst [vmem:[%s758] sm:$0xff] %v2488
      %2491 = vst [vmem:[%s758 + $0x8] sm:$0x3] %v2489
      %p2492 = scmp.lt.s32.totalorder %s32, 1
      %s2493 = scalar_select %p2492, %s32, 1
      %s2494 = smul.addr %s2493, 2
      %s2495 = smul.addr %s2494, 8
      %s2496 = scalar_lea.vmem %s17, %s2495
      // Predicated region
      $region93: #{vit_mmd_feature_loss.2} parent=87 // pred_check
        %p2497 = pneg %p480
      $region94: #{vit_mmd_feature_loss.2} parent=87 // pred_check_branch
        %2499 = sbr.rel (%p2497) target = $region96
      $region95: #{vit_mmd_feature_loss.2} parent=87 // pred_region
        _
      $region96: #{vit_mmd_feature_loss.2} parent=87 // pred_fallthru
        _
    $region88: #{vit_mmd_feature_loss.2} parent=5 // pred_fallthru
      _
    %p2500 = scmp.le.s32.totalorder 2, %s23
    // Predicated region
    $region97: #{vit_mmd_feature_loss.2} parent=5 // pred_check
      %p2501 = pneg %p2500
    $region98: #{vit_mmd_feature_loss.2} parent=5 // pred_check_branch
      %2503 = sbr.rel (%p2501) target = $region100
    $region99: #{vit_mmd_feature_loss.2} parent=5 // pred_region
      %s2504 = ssub.s32 %s23, 2
      // Predicated region
      $region101: #{vit_mmd_feature_loss.2} parent=99 // pred_check
        %p2505 = pneg %p486
      $region102: #{vit_mmd_feature_loss.2} parent=99 // pred_check_branch
        %2507 = sbr.rel (%p2505) target = $region104
      $region103: #{vit_mmd_feature_loss.2} parent=99 // pred_region
        %p2508 = scmp.lt.s32.totalorder %s34, 1
        %s2509 = scalar_select %p2508, %s34, 1
        %s2510 = smul.addr %s2509, 2
        %s2511 = smul.addr %s2510, 8
        %s2512 = scalar_lea.vmem %s17, %s2511
      $region104: #{vit_mmd_feature_loss.2} parent=99 // pred_fallthru
        _
    $region100: #{vit_mmd_feature_loss.2} parent=5 // pred_fallthru
      _
  $region6: #{vit_mmd_feature_loss.2} parent=0 // loop_footer
    %s27 = sadd.s32 1, %s23
  $region7: #{vit_mmd_feature_loss.2} parent=0 // loop_footer_branch
    %22 = sbr.rel target = $region3
  $region8: #{vit_mmd_feature_loss.2} parent=0 // loop_exit
    _

</llo_original>
